<compile_context>
chip_gen: v7x
topology: tpu7x:2x2x1
jax: 0.10.0
libtpu: 0.0.40
codegen_flags: <defaults>
</compile_context>

<pallas_src>
import functools
import math

import jax
import jax.numpy as jnp
from jax.experimental import pallas as pl
from jax.experimental.pallas import tpu as pltpu


def _lcm(a, b):
    return a * b // math.gcd(a, b)


def _round_up(x, m):
    return ((x + m - 1) // m) * m


def _conv_bn_relu_kernel(*refs, ksize, dilation, th, w_out, halo):
    """One grid step = one (image, TH-output-row, C_out-tile) block."""
    if halo > 0:
        x_ref, halo_ref, w_ref, shift_ref, o_ref, acc_ref = refs
    else:
        x_ref, w_ref, shift_ref, o_ref, acc_ref = refs
        halo_ref = None

    xs = x_ref[0]                                    # (th, wp, c_in_pad)
    hs = halo_ref[0] if halo > 0 else None           # (halo, wp, c_in_pad)
    c_in = xs.shape[-1]
    c_out = o_ref.shape[-1]                          # C_out tile (128/256)

    for i in range(ksize):
        di = i * dilation
        for j in range(ksize):
            dj = j * dilation
            w_ij = w_ref[i, j]                       # (c_in_pad, c_out_tile)

            # Rows [di, th) of the main slab feed output rows [0, th - di).
            rows_a = th - di
            tap_a = xs[di:th, dj:dj + w_out, :]      # (rows_a, w_out, c_in)
            ya = jnp.dot(tap_a.reshape(rows_a * w_out, c_in), w_ij,
                         preferred_element_type=jnp.float32)
            ya = ya.reshape(rows_a, w_out, c_out)
            if i == 0 and j == 0:                    # di == 0: covers the tile
                acc_ref[...] = ya
            else:
                acc_ref[0:rows_a] += ya

            # The first `di` halo rows feed output rows [th - di, th).
            if di > 0:
                tap_b = hs[0:di, dj:dj + w_out, :]   # (di, w_out, c_in)
                yb = jnp.dot(tap_b.reshape(di * w_out, c_in), w_ij,
                             preferred_element_type=jnp.float32)
                acc_ref[rows_a:th] += yb.reshape(di, w_out, c_out)

    # Folded-BN epilogue: scale already lives in the weights; just +shift, ReLU.
    y = acc_ref[...] + shift_ref[...]
    o_ref[0] = jnp.maximum(y, 0.0).astype(o_ref.dtype)


def conv_bn_relu(x_nchw, weight_oihw, gamma, beta, running_mean, running_var,
                 *, kernel_size=3, dilation=1, eps=1e-5, block_h=32,
                 compute_dtype=None):
    """Pallas TPU equivalent of the PyTorch `conv` module forward (eval BN)."""
    n, c_in, h, w = x_nchw.shape
    c_out = weight_oihw.shape[0]
    k = kernel_size
    pad = k // 2
    halo = dilation * (k - 1)                 # extra input rows/cols per tile
    h_out = h + 2 * pad - halo
    w_out = w + 2 * pad - halo

    out_dtype = x_nchw.dtype
    cdt = jnp.dtype(compute_dtype) if compute_dtype is not None else jnp.dtype(out_dtype)

    # ---- channel padding (lane density / MXU K & N dims) ---------------------
    c_in_pad = _round_up(c_in, 128)
    c_out_pad = _round_up(c_out, 128)
    # 256-wide C_out tiles fill a v6e/v7x MXU pass; a v5e deployment would
    # prefer 128 (its MXUs are 128x128).
    tile_n = 256 if c_out_pad % 256 == 0 else 128
    n_co = c_out_pad // tile_n

    # ---- spatial padding: sublane-aligned output width -----------------------
    w_out_pad = _round_up(w_out, 8)
    wp = w_out_pad + halo                     # padded input width

    # ---- generation-aware VMEM budget -> tile height --------------------------
    try:
        vmem_cap = int(pltpu.get_tpu_info().vmem_capacity_bytes)
    except Exception:
        vmem_cap = 64 * 2**20                 # conservative (v7x) fallback
    in_item = jnp.dtype(cdt).itemsize
    out_item = jnp.dtype(out_dtype).itemsize

    def _tile_bytes(th_):
        x_blk = (th_ + max(halo, 1)) * wp * c_in_pad * in_item
        o_blk = th_ * w_out_pad * tile_n * out_item
        acc = th_ * w_out_pad * tile_n * 4
        w_blk = k * k * c_in_pad * tile_n * in_item
        tmp = th_ * w_out_pad * c_in_pad * in_item      # per-tap slice temps
        return 2 * (x_blk + o_blk + w_blk) + acc + 2 * tmp + 4 * tile_n

    unit = _lcm(8, max(halo, 1))              # sublane- and halo-block friendly
    th = max(unit, min(_round_up(block_h, unit), _round_up(h_out, unit)))
    budget = int(0.7 * vmem_cap)
    while th > unit and _tile_bytes(th) > budget:
        th -= unit
    n_h = -(-h_out // th)
    h_out_pad = n_h * th
    vmem_limit = int(min(int(0.9 * vmem_cap),
                         max(16 * 2**20, 2 * _tile_bytes(th))))

    # ---- layout glue: ONE fused transpose+pad pass over the input ------------
    # TODO(synk): NCHW interface forces this extra HBM pass; an NHWC pipeline
    # with pre-padded channels would eliminate it and the final slice/transpose.
    x_nhwc = jnp.transpose(x_nchw, (0, 2, 3, 1))
    x_pad = jnp.pad(
        x_nhwc,
        ((0, 0),
         (pad, pad + (h_out_pad - h_out)),
         (pad, pad + (w_out_pad - w_out)),
         (0, c_in_pad - c_in))).astype(cdt)

    # Eval-mode BN folded: y = conv(x, w * scale) + shift, scale = gamma/std.
    inv_std = 1.0 / jnp.sqrt(running_var.astype(jnp.float32) + eps)
    scale = gamma.astype(jnp.float32) * inv_std                       # (c_out,)
    shift = beta.astype(jnp.float32) - running_mean.astype(jnp.float32) * scale

    w_hwio = jnp.transpose(weight_oihw, (2, 3, 1, 0)).astype(jnp.float32)
    w_hwio = w_hwio * scale[None, None, None, :]                      # fold BN scale
    w_hwio = jnp.pad(w_hwio, ((0, 0), (0, 0),
                              (0, c_in_pad - c_in),
                              (0, c_out_pad - c_out))).astype(cdt)
    shift = jnp.pad(shift, (0, c_out_pad - c_out)).reshape(1, 1, c_out_pad)

    # ---- specs / grid ----------------------------------------------------------
    in_specs = [pl.BlockSpec((1, th, wp, c_in_pad),
                             lambda b, hh, co: (b, hh, 0, 0))]
    operands = [x_pad]
    if halo > 0:
        blocks_per_halo = th // halo          # th is a multiple of halo
        in_specs.append(
            pl.BlockSpec((1, halo, wp, c_in_pad),
                         lambda b, hh, co: (b, (hh + 1) * blocks_per_halo, 0, 0)))
        operands.append(x_pad)                # halo rows come from the same array
    in_specs += [
        pl.BlockSpec((k, k, c_in_pad, tile_n), lambda b, hh, co: (0, 0, 0, co)),
        pl.BlockSpec((1, 1, tile_n), lambda b, hh, co: (0, 0, co)),
    ]
    operands += [w_hwio, shift]

    kern = functools.partial(
        _conv_bn_relu_kernel,
        ksize=k, dilation=dilation, th=th, w_out=w_out_pad, halo=halo)

    out_nhwc = pl.pallas_call(
        kern,
        out_shape=jax.ShapeDtypeStruct((n, h_out_pad, w_out_pad, c_out_pad),
                                       out_dtype),
        grid_spec=pltpu.PrefetchScalarGridSpec(
            num_scalar_prefetch=0,
            # C_out axis is fastest so the x slab block index is unchanged
            # across it (no re-DMA of activations between C_out tiles).
            grid=(n, n_h, n_co),
            in_specs=in_specs,
            out_specs=pl.BlockSpec((1, th, w_out_pad, tile_n),
                                   lambda b, hh, co: (b, hh, 0, co)),
            scratch_shapes=[pltpu.VMEM((th, w_out_pad, tile_n), jnp.float32)],
        ),
        compiler_params=pltpu.CompilerParams(
            dimension_semantics=("parallel", "parallel", "parallel"),
            vmem_limit_bytes=vmem_limit),
    )(*operands)

    out_nhwc = out_nhwc[:, :h_out, :w_out, :c_out]
    return jnp.transpose(out_nhwc, (0, 3, 1, 2))                      # back to NCHW


def _reference(x, weight, gamma, beta, running_mean, running_var,
               *, kernel_size=3, dilation=1, eps=1e-5):
    pad = kernel_size // 2
    y = jax.lax.conv_general_dilated(
        x, weight, window_strides=(1, 1),
        padding=((pad, pad), (pad, pad)),
        rhs_dilation=(dilation, dilation),
        dimension_numbers=("NCHW", "OIHW", "NCHW"))
    inv_std = 1.0 / jnp.sqrt(running_var + eps)
    s = (gamma * inv_std)[None, :, None, None]
    b = (beta - running_mean * gamma * inv_std)[None, :, None, None]
    return jnp.maximum(y * s + b, 0.0)


if __name__ == "__main__":
    key = jax.random.PRNGKey(0)
    k_x, k_w, k_g, k_b, k_m, k_v = jax.random.split(key, 6)

    N, C_IN, H, W = 2, 4, 16, 16
    C_OUT, K = 8, 3

    x = jax.random.normal(k_x, (N, C_IN, H, W), jnp.float32)
    weight = 0.1 * jax.random.normal(k_w, (C_OUT, C_IN, K, K), jnp.float32)
    gamma = 1.0 + 0.1 * jax.random.normal(k_g, (C_OUT,), jnp.float32)
    beta = 0.1 * jax.random.normal(k_b, (C_OUT,), jnp.float32)
    running_mean = 0.1 * jax.random.normal(k_m, (C_OUT,), jnp.float32)
    running_var = 0.5 + jnp.abs(jax.random.normal(k_v, (C_OUT,), jnp.float32))

    # block_h=8 forces two H tiles at H=16 so the halo / tiling path is
    # exercised; dilation=2 additionally exercises the H/W re-padding.
    for dil in (1, 2):
        out = conv_bn_relu(x, weight, gamma, beta, running_mean, running_var,
                           kernel_size=K, dilation=dil, block_h=8)
        out = jax.block_until_ready(out)
        ref = _reference(x, weight, gamma, beta, running_mean, running_var,
                         kernel_size=K, dilation=dil)
        assert out.shape == ref.shape, (out.shape, ref.shape)
        err = float(jnp.max(jnp.abs(out - ref)))
        assert jnp.allclose(out, ref, rtol=1e-4, atol=1e-4), err

    # bf16 MXU feed (f32 accumulation): looser tolerance vs the f32 reference.
    out_bf16 = conv_bn_relu(x, weight, gamma, beta, running_mean, running_var,
                            kernel_size=K, dilation=1, block_h=8,
                            compute_dtype=jnp.bfloat16)
    out_bf16 = jax.block_until_ready(out_bf16)
    ref = _reference(x, weight, gamma, beta, running_mean, running_var,
                     kernel_size=K, dilation=1)
    err_bf16 = float(jnp.max(jnp.abs(out_bf16 - ref)))
    assert jnp.allclose(out_bf16, ref, rtol=1e-1, atol=1e-1), err_bf16

    print("KERNEL_OK")
</pallas_src>

<mosaic_0001>
module attributes {stable_mosaic.version = 11 : i64} {
  func.func @_conv_bn_relu_kernel(%arg0: i32, %arg1: i32, %arg2: i32, %arg3: memref<1x8x18x128xf32, #tpu.memory_space<vmem>>, %arg4: memref<1x2x18x128xf32, #tpu.memory_space<vmem>>, %arg5: memref<3x3x128x128xf32, #tpu.memory_space<vmem>>, %arg6: memref<1x1x128xf32, #tpu.memory_space<vmem>>, %arg7: memref<1x8x16x128xf32, #tpu.memory_space<vmem>>, %arg8: memref<8x16x128xf32, #tpu.memory_space<vmem>>) attributes {dimension_semantics = [#tpu.dimension_semantics<parallel>, #tpu.dimension_semantics<parallel>, #tpu.dimension_semantics<parallel>], iteration_bounds = array<i64: 2, 2, 1>, scalar_prefetch = 0 : i64, scratch_operands = 1 : i64, tpu.core_type = #tpu.core_type<tc>, window_params = [{transform_indices = @transform_0, window_bounds = array<i64: 1, 8, 18, 128>}, {transform_indices = @transform_1, window_bounds = array<i64: 1, 2, 18, 128>}, {transform_indices = @transform_2, window_bounds = array<i64: 3, 3, 128, 128>}, {transform_indices = @transform_3, window_bounds = array<i64: 1, 1, 128>}, {transform_indices = @transform_4, window_bounds = array<i64: 1, 8, 16, 128>}]} {
    %c0 = arith.constant 0 : index
    %c0_0 = arith.constant 0 : index
    %c0_1 = arith.constant 0 : index
    %c0_2 = arith.constant 0 : index
    %0 = vector.load %arg3[%c0, %c0_0, %c0_1, %c0_2] : memref<1x8x18x128xf32, #tpu.memory_space<vmem>>, vector<1x8x18x128xf32>
    %1 = vector.shape_cast %0 : vector<1x8x18x128xf32> to vector<8x18x128xf32>
    %c0_3 = arith.constant 0 : index
    %c0_4 = arith.constant 0 : index
    %c0_5 = arith.constant 0 : index
    %c0_6 = arith.constant 0 : index
    %2 = vector.load %arg4[%c0_3, %c0_4, %c0_5, %c0_6] : memref<1x2x18x128xf32, #tpu.memory_space<vmem>>, vector<1x2x18x128xf32>
    %3 = vector.shape_cast %2 : vector<1x2x18x128xf32> to vector<2x18x128xf32>
    %c0_7 = arith.constant 0 : index
    %c0_8 = arith.constant 0 : index
    %c0_9 = arith.constant 0 : index
    %c0_10 = arith.constant 0 : index
    %4 = vector.load %arg5[%c0_7, %c0_8, %c0_9, %c0_10] : memref<3x3x128x128xf32, #tpu.memory_space<vmem>>, vector<1x1x128x128xf32>
    %5 = vector.shape_cast %4 : vector<1x1x128x128xf32> to vector<128x128xf32>
    %6 = vector.extract_strided_slice %1 {offsets = [0, 0, 0], sizes = [8, 16, 128], strides = [1, 1, 1]} : vector<8x18x128xf32> to vector<8x16x128xf32>
    %7 = vector.shape_cast %6 : vector<8x16x128xf32> to vector<128x128xf32>
    %cst = arith.constant dense<0.000000e+00> : vector<128x128xf32>
    %8 = tpu.matmul %7, %5, %cst {dimension_numbers = #tpu.dot_dimension_numbers<[1], [0], [0], [1], [0, 0, 1, 1], [], []>} : vector<128x128xf32>, vector<128x128xf32>, vector<128x128xf32> -> vector<128x128xf32>
    %9 = vector.shape_cast %8 : vector<128x128xf32> to vector<8x16x128xf32>
    %c0_11 = arith.constant 0 : index
    %c0_12 = arith.constant 0 : index
    %c0_13 = arith.constant 0 : index
    %10 = vector.load %arg8[%c0_11, %c0_12, %c0_13] : memref<8x16x128xf32, #tpu.memory_space<vmem>>, vector<8x16x128xf32>
    tpu.vector_store %arg8[%c0_11, %c0_12, %c0_13], %9 {strides = array<i32>} : memref<8x16x128xf32, #tpu.memory_space<vmem>>, vector<8x16x128xf32>,
    %c0_14 = arith.constant 0 : index
    %c1 = arith.constant 1 : index
    %c0_15 = arith.constant 0 : index
    %c0_16 = arith.constant 0 : index
    %11 = vector.load %arg5[%c0_14, %c1, %c0_15, %c0_16] : memref<3x3x128x128xf32, #tpu.memory_space<vmem>>, vector<1x1x128x128xf32>
    %12 = vector.shape_cast %11 : vector<1x1x128x128xf32> to vector<128x128xf32>
    %13 = vector.extract_strided_slice %1 {offsets = [0, 1, 0], sizes = [8, 16, 128], strides = [1, 1, 1]} : vector<8x18x128xf32> to vector<8x16x128xf32>
    %14 = vector.shape_cast %13 : vector<8x16x128xf32> to vector<128x128xf32>
    %cst_17 = arith.constant dense<0.000000e+00> : vector<128x128xf32>
    %15 = tpu.matmul %14, %12, %cst_17 {dimension_numbers = #tpu.dot_dimension_numbers<[1], [0], [0], [1], [0, 0, 1, 1], [], []>} : vector<128x128xf32>, vector<128x128xf32>, vector<128x128xf32> -> vector<128x128xf32>
    %16 = vector.shape_cast %15 : vector<128x128xf32> to vector<8x16x128xf32>
    %c0_18 = arith.constant 0 : index
    %c0_19 = arith.constant 0 : index
    %c0_20 = arith.constant 0 : index
    %17 = vector.load %arg8[%c0_18, %c0_19, %c0_20] : memref<8x16x128xf32, #tpu.memory_space<vmem>>, vector<8x16x128xf32>
    %18 = arith.addf %17, %16 : vector<8x16x128xf32>
    %c0_21 = arith.constant 0 : index
    %c0_22 = arith.constant 0 : index
    %c0_23 = arith.constant 0 : index
    %19 = vector.load %arg8[%c0_21, %c0_22, %c0_23] : memref<8x16x128xf32, #tpu.memory_space<vmem>>, vector<8x16x128xf32>
    tpu.vector_store %arg8[%c0_21, %c0_22, %c0_23], %18 {strides = array<i32>} : memref<8x16x128xf32, #tpu.memory_space<vmem>>, vector<8x16x128xf32>,
    %c0_24 = arith.constant 0 : index
    %c2 = arith.constant 2 : index
    %c0_25 = arith.constant 0 : index
    %c0_26 = arith.constant 0 : index
    %20 = vector.load %arg5[%c0_24, %c2, %c0_25, %c0_26] : memref<3x3x128x128xf32, #tpu.memory_space<vmem>>, vector<1x1x128x128xf32>
    %21 = vector.shape_cast %20 : vector<1x1x128x128xf32> to vector<128x128xf32>
    %22 = vector.extract_strided_slice %1 {offsets = [0, 2, 0], sizes = [8, 16, 128], strides = [1, 1, 1]} : vector<8x18x128xf32> to vector<8x16x128xf32>
    %23 = vector.shape_cast %22 : vector<8x16x128xf32> to vector<128x128xf32>
    %cst_27 = arith.constant dense<0.000000e+00> : vector<128x128xf32>
    %24 = tpu.matmul %23, %21, %cst_27 {dimension_numbers = #tpu.dot_dimension_numbers<[1], [0], [0], [1], [0, 0, 1, 1], [], []>} : vector<128x128xf32>, vector<128x128xf32>, vector<128x128xf32> -> vector<128x128xf32>
    %25 = vector.shape_cast %24 : vector<128x128xf32> to vector<8x16x128xf32>
    %c0_28 = arith.constant 0 : index
    %c0_29 = arith.constant 0 : index
    %c0_30 = arith.constant 0 : index
    %26 = vector.load %arg8[%c0_28, %c0_29, %c0_30] : memref<8x16x128xf32, #tpu.memory_space<vmem>>, vector<8x16x128xf32>
    %27 = arith.addf %26, %25 : vector<8x16x128xf32>
    %c0_31 = arith.constant 0 : index
    %c0_32 = arith.constant 0 : index
    %c0_33 = arith.constant 0 : index
    %28 = vector.load %arg8[%c0_31, %c0_32, %c0_33] : memref<8x16x128xf32, #tpu.memory_space<vmem>>, vector<8x16x128xf32>
    tpu.vector_store %arg8[%c0_31, %c0_32, %c0_33], %27 {strides = array<i32>} : memref<8x16x128xf32, #tpu.memory_space<vmem>>, vector<8x16x128xf32>,
    %c1_34 = arith.constant 1 : index
    %c0_35 = arith.constant 0 : index
    %c0_36 = arith.constant 0 : index
    %c0_37 = arith.constant 0 : index
    %29 = vector.load %arg5[%c1_34, %c0_35, %c0_36, %c0_37] : memref<3x3x128x128xf32, #tpu.memory_space<vmem>>, vector<1x1x128x128xf32>
    %30 = vector.shape_cast %29 : vector<1x1x128x128xf32> to vector<128x128xf32>
    %31 = vector.extract_strided_slice %1 {offsets = [1, 0, 0], sizes = [7, 16, 128], strides = [1, 1, 1]} : vector<8x18x128xf32> to vector<7x16x128xf32>
    %32 = vector.shape_cast %31 : vector<7x16x128xf32> to vector<112x128xf32>
    %cst_38 = arith.constant dense<0.000000e+00> : vector<112x128xf32>
    %33 = tpu.matmul %32, %30, %cst_38 {dimension_numbers = #tpu.dot_dimension_numbers<[1], [0], [0], [1], [0, 0, 1, 1], [], []>} : vector<112x128xf32>, vector<128x128xf32>, vector<112x128xf32> -> vector<112x128xf32>
    %34 = vector.shape_cast %33 : vector<112x128xf32> to vector<7x16x128xf32>
    %c0_39 = arith.constant 0 : index
    %c0_40 = arith.constant 0 : index
    %c0_41 = arith.constant 0 : index
    %35 = vector.load %arg8[%c0_39, %c0_40, %c0_41] : memref<8x16x128xf32, #tpu.memory_space<vmem>>, vector<7x16x128xf32>
    %36 = arith.addf %35, %34 : vector<7x16x128xf32>
    %c0_42 = arith.constant 0 : index
    %c0_43 = arith.constant 0 : index
    %c0_44 = arith.constant 0 : index
    %37 = vector.load %arg8[%c0_42, %c0_43, %c0_44] : memref<8x16x128xf32, #tpu.memory_space<vmem>>, vector<7x16x128xf32>
    tpu.vector_store %arg8[%c0_42, %c0_43, %c0_44], %36 {strides = array<i32>} : memref<8x16x128xf32, #tpu.memory_space<vmem>>, vector<7x16x128xf32>,
    %38 = vector.extract_strided_slice %3 {offsets = [0, 0, 0], sizes = [1, 16, 128], strides = [1, 1, 1]} : vector<2x18x128xf32> to vector<1x16x128xf32>
    %39 = vector.shape_cast %38 : vector<1x16x128xf32> to vector<16x128xf32>
    %cst_45 = arith.constant dense<0.000000e+00> : vector<16x128xf32>
    %40 = tpu.matmul %39, %30, %cst_45 {dimension_numbers = #tpu.dot_dimension_numbers<[1], [0], [0], [1], [0, 0, 1, 1], [], []>} : vector<16x128xf32>, vector<128x128xf32>, vector<16x128xf32> -> vector<16x128xf32>
    %c7 = arith.constant 7 : index
    %c0_46 = arith.constant 0 : index
    %c0_47 = arith.constant 0 : index
    %41 = vector.load %arg8[%c7, %c0_46, %c0_47] : memref<8x16x128xf32, #tpu.memory_space<vmem>>, vector<1x16x128xf32>
    %42 = vector.shape_cast %40 : vector<16x128xf32> to vector<1x16x128xf32>
    %43 = arith.addf %41, %42 : vector<1x16x128xf32>
    %c7_48 = arith.constant 7 : index
    %c0_49 = arith.constant 0 : index
    %c0_50 = arith.constant 0 : index
    %44 = vector.load %arg8[%c7_48, %c0_49, %c0_50] : memref<8x16x128xf32, #tpu.memory_space<vmem>>, vector<1x16x128xf32>
    tpu.vector_store %arg8[%c7_48, %c0_49, %c0_50], %43 {strides = array<i32>} : memref<8x16x128xf32, #tpu.memory_space<vmem>>, vector<1x16x128xf32>,
    %c1_51 = arith.constant 1 : index
    %c1_52 = arith.constant 1 : index
    %c0_53 = arith.constant 0 : index
    %c0_54 = arith.constant 0 : index
    %45 = vector.load %arg5[%c1_51, %c1_52, %c0_53, %c0_54] : memref<3x3x128x128xf32, #tpu.memory_space<vmem>>, vector<1x1x128x128xf32>
    %46 = vector.shape_cast %45 : vector<1x1x128x128xf32> to vector<128x128xf32>
    %47 = vector.extract_strided_slice %1 {offsets = [1, 1, 0], sizes = [7, 16, 128], strides = [1, 1, 1]} : vector<8x18x128xf32> to vector<7x16x128xf32>
    %48 = vector.shape_cast %47 : vector<7x16x128xf32> to vector<112x128xf32>
    %cst_55 = arith.constant dense<0.000000e+00> : vector<112x128xf32>
    %49 = tpu.matmul %48, %46, %cst_55 {dimension_numbers = #tpu.dot_dimension_numbers<[1], [0], [0], [1], [0, 0, 1, 1], [], []>} : vector<112x128xf32>, vector<128x128xf32>, vector<112x128xf32> -> vector<112x128xf32>
    %50 = vector.shape_cast %49 : vector<112x128xf32> to vector<7x16x128xf32>
    %c0_56 = arith.constant 0 : index
    %c0_57 = arith.constant 0 : index
    %c0_58 = arith.constant 0 : index
    %51 = vector.load %arg8[%c0_56, %c0_57, %c0_58] : memref<8x16x128xf32, #tpu.memory_space<vmem>>, vector<7x16x128xf32>
    %52 = arith.addf %51, %50 : vector<7x16x128xf32>
    %c0_59 = arith.constant 0 : index
    %c0_60 = arith.constant 0 : index
    %c0_61 = arith.constant 0 : index
    %53 = vector.load %arg8[%c0_59, %c0_60, %c0_61] : memref<8x16x128xf32, #tpu.memory_space<vmem>>, vector<7x16x128xf32>
    tpu.vector_store %arg8[%c0_59, %c0_60, %c0_61], %52 {strides = array<i32>} : memref<8x16x128xf32, #tpu.memory_space<vmem>>, vector<7x16x128xf32>,
    %54 = vector.extract_strided_slice %3 {offsets = [0, 1, 0], sizes = [1, 16, 128], strides = [1, 1, 1]} : vector<2x18x128xf32> to vector<1x16x128xf32>
    %55 = vector.shape_cast %54 : vector<1x16x128xf32> to vector<16x128xf32>
    %cst_62 = arith.constant dense<0.000000e+00> : vector<16x128xf32>
    %56 = tpu.matmul %55, %46, %cst_62 {dimension_numbers = #tpu.dot_dimension_numbers<[1], [0], [0], [1], [0, 0, 1, 1], [], []>} : vector<16x128xf32>, vector<128x128xf32>, vector<16x128xf32> -> vector<16x128xf32>
    %c7_63 = arith.constant 7 : index
    %c0_64 = arith.constant 0 : index
    %c0_65 = arith.constant 0 : index
    %57 = vector.load %arg8[%c7_63, %c0_64, %c0_65] : memref<8x16x128xf32, #tpu.memory_space<vmem>>, vector<1x16x128xf32>
    %58 = vector.shape_cast %56 : vector<16x128xf32> to vector<1x16x128xf32>
    %59 = arith.addf %57, %58 : vector<1x16x128xf32>
    %c7_66 = arith.constant 7 : index
    %c0_67 = arith.constant 0 : index
    %c0_68 = arith.constant 0 : index
    %60 = vector.load %arg8[%c7_66, %c0_67, %c0_68] : memref<8x16x128xf32, #tpu.memory_space<vmem>>, vector<1x16x128xf32>
    tpu.vector_store %arg8[%c7_66, %c0_67, %c0_68], %59 {strides = array<i32>} : memref<8x16x128xf32, #tpu.memory_space<vmem>>, vector<1x16x128xf32>,
    %c1_69 = arith.constant 1 : index
    %c2_70 = arith.constant 2 : index
    %c0_71 = arith.constant 0 : index
    %c0_72 = arith.constant 0 : index
    %61 = vector.load %arg5[%c1_69, %c2_70, %c0_71, %c0_72] : memref<3x3x128x128xf32, #tpu.memory_space<vmem>>, vector<1x1x128x128xf32>
    %62 = vector.shape_cast %61 : vector<1x1x128x128xf32> to vector<128x128xf32>
    %63 = vector.extract_strided_slice %1 {offsets = [1, 2, 0], sizes = [7, 16, 128], strides = [1, 1, 1]} : vector<8x18x128xf32> to vector<7x16x128xf32>
    %64 = vector.shape_cast %63 : vector<7x16x128xf32> to vector<112x128xf32>
    %cst_73 = arith.constant dense<0.000000e+00> : vector<112x128xf32>
    %65 = tpu.matmul %64, %62, %cst_73 {dimension_numbers = #tpu.dot_dimension_numbers<[1], [0], [0], [1], [0, 0, 1, 1], [], []>} : vector<112x128xf32>, vector<128x128xf32>, vector<112x128xf32> -> vector<112x128xf32>
    %66 = vector.shape_cast %65 : vector<112x128xf32> to vector<7x16x128xf32>
    %c0_74 = arith.constant 0 : index
    %c0_75 = arith.constant 0 : index
    %c0_76 = arith.constant 0 : index
    %67 = vector.load %arg8[%c0_74, %c0_75, %c0_76] : memref<8x16x128xf32, #tpu.memory_space<vmem>>, vector<7x16x128xf32>
    %68 = arith.addf %67, %66 : vector<7x16x128xf32>
    %c0_77 = arith.constant 0 : index
    %c0_78 = arith.constant 0 : index
    %c0_79 = arith.constant 0 : index
    %69 = vector.load %arg8[%c0_77, %c0_78, %c0_79] : memref<8x16x128xf32, #tpu.memory_space<vmem>>, vector<7x16x128xf32>
    tpu.vector_store %arg8[%c0_77, %c0_78, %c0_79], %68 {strides = array<i32>} : memref<8x16x128xf32, #tpu.memory_space<vmem>>, vector<7x16x128xf32>,
    %70 = vector.extract_strided_slice %3 {offsets = [0, 2, 0], sizes = [1, 16, 128], strides = [1, 1, 1]} : vector<2x18x128xf32> to vector<1x16x128xf32>
    %71 = vector.shape_cast %70 : vector<1x16x128xf32> to vector<16x128xf32>
    %cst_80 = arith.constant dense<0.000000e+00> : vector<16x128xf32>
    %72 = tpu.matmul %71, %62, %cst_80 {dimension_numbers = #tpu.dot_dimension_numbers<[1], [0], [0], [1], [0, 0, 1, 1], [], []>} : vector<16x128xf32>, vector<128x128xf32>, vector<16x128xf32> -> vector<16x128xf32>
    %c7_81 = arith.constant 7 : index
    %c0_82 = arith.constant 0 : index
    %c0_83 = arith.constant 0 : index
    %73 = vector.load %arg8[%c7_81, %c0_82, %c0_83] : memref<8x16x128xf32, #tpu.memory_space<vmem>>, vector<1x16x128xf32>
    %74 = vector.shape_cast %72 : vector<16x128xf32> to vector<1x16x128xf32>
    %75 = arith.addf %73, %74 : vector<1x16x128xf32>
    %c7_84 = arith.constant 7 : index
    %c0_85 = arith.constant 0 : index
    %c0_86 = arith.constant 0 : index
    %76 = vector.load %arg8[%c7_84, %c0_85, %c0_86] : memref<8x16x128xf32, #tpu.memory_space<vmem>>, vector<1x16x128xf32>
    tpu.vector_store %arg8[%c7_84, %c0_85, %c0_86], %75 {strides = array<i32>} : memref<8x16x128xf32, #tpu.memory_space<vmem>>, vector<1x16x128xf32>,
    %c2_87 = arith.constant 2 : index
    %c0_88 = arith.constant 0 : index
    %c0_89 = arith.constant 0 : index
    %c0_90 = arith.constant 0 : index
    %77 = vector.load %arg5[%c2_87, %c0_88, %c0_89, %c0_90] : memref<3x3x128x128xf32, #tpu.memory_space<vmem>>, vector<1x1x128x128xf32>
    %78 = vector.shape_cast %77 : vector<1x1x128x128xf32> to vector<128x128xf32>
    %79 = vector.extract_strided_slice %1 {offsets = [2, 0, 0], sizes = [6, 16, 128], strides = [1, 1, 1]} : vector<8x18x128xf32> to vector<6x16x128xf32>
    %80 = vector.shape_cast %79 : vector<6x16x128xf32> to vector<96x128xf32>
    %cst_91 = arith.constant dense<0.000000e+00> : vector<96x128xf32>
    %81 = tpu.matmul %80, %78, %cst_91 {dimension_numbers = #tpu.dot_dimension_numbers<[1], [0], [0], [1], [0, 0, 1, 1], [], []>} : vector<96x128xf32>, vector<128x128xf32>, vector<96x128xf32> -> vector<96x128xf32>
    %82 = vector.shape_cast %81 : vector<96x128xf32> to vector<6x16x128xf32>
    %c0_92 = arith.constant 0 : index
    %c0_93 = arith.constant 0 : index
    %c0_94 = arith.constant 0 : index
    %83 = vector.load %arg8[%c0_92, %c0_93, %c0_94] : memref<8x16x128xf32, #tpu.memory_space<vmem>>, vector<6x16x128xf32>
    %84 = arith.addf %83, %82 : vector<6x16x128xf32>
    %c0_95 = arith.constant 0 : index
    %c0_96 = arith.constant 0 : index
    %c0_97 = arith.constant 0 : index
    %85 = vector.load %arg8[%c0_95, %c0_96, %c0_97] : memref<8x16x128xf32, #tpu.memory_space<vmem>>, vector<6x16x128xf32>
    tpu.vector_store %arg8[%c0_95, %c0_96, %c0_97], %84 {strides = array<i32>} : memref<8x16x128xf32, #tpu.memory_space<vmem>>, vector<6x16x128xf32>,
    %86 = vector.extract_strided_slice %3 {offsets = [0, 0, 0], sizes = [2, 16, 128], strides = [1, 1, 1]} : vector<2x18x128xf32> to vector<2x16x128xf32>
    %87 = vector.shape_cast %86 : vector<2x16x128xf32> to vector<32x128xf32>
    %cst_98 = arith.constant dense<0.000000e+00> : vector<32x128xf32>
    %88 = tpu.matmul %87, %78, %cst_98 {dimension_numbers = #tpu.dot_dimension_numbers<[1], [0], [0], [1], [0, 0, 1, 1], [], []>} : vector<32x128xf32>, vector<128x128xf32>, vector<32x128xf32> -> vector<32x128xf32>
    %c6 = arith.constant 6 : index
    %c0_99 = arith.constant 0 : index
    %c0_100 = arith.constant 0 : index
    %89 = vector.load %arg8[%c6, %c0_99, %c0_100] : memref<8x16x128xf32, #tpu.memory_space<vmem>>, vector<2x16x128xf32>
    %90 = vector.shape_cast %88 : vector<32x128xf32> to vector<2x16x128xf32>
    %91 = arith.addf %89, %90 : vector<2x16x128xf32>
    %c6_101 = arith.constant 6 : index
    %c0_102 = arith.constant 0 : index
    %c0_103 = arith.constant 0 : index
    %92 = vector.load %arg8[%c6_101, %c0_102, %c0_103] : memref<8x16x128xf32, #tpu.memory_space<vmem>>, vector<2x16x128xf32>
    tpu.vector_store %arg8[%c6_101, %c0_102, %c0_103], %91 {strides = array<i32>} : memref<8x16x128xf32, #tpu.memory_space<vmem>>, vector<2x16x128xf32>,
    %c2_104 = arith.constant 2 : index
    %c1_105 = arith.constant 1 : index
    %c0_106 = arith.constant 0 : index
    %c0_107 = arith.constant 0 : index
    %93 = vector.load %arg5[%c2_104, %c1_105, %c0_106, %c0_107] : memref<3x3x128x128xf32, #tpu.memory_space<vmem>>, vector<1x1x128x128xf32>
    %94 = vector.shape_cast %93 : vector<1x1x128x128xf32> to vector<128x128xf32>
    %95 = vector.extract_strided_slice %1 {offsets = [2, 1, 0], sizes = [6, 16, 128], strides = [1, 1, 1]} : vector<8x18x128xf32> to vector<6x16x128xf32>
    %96 = vector.shape_cast %95 : vector<6x16x128xf32> to vector<96x128xf32>
    %cst_108 = arith.constant dense<0.000000e+00> : vector<96x128xf32>
    %97 = tpu.matmul %96, %94, %cst_108 {dimension_numbers = #tpu.dot_dimension_numbers<[1], [0], [0], [1], [0, 0, 1, 1], [], []>} : vector<96x128xf32>, vector<128x128xf32>, vector<96x128xf32> -> vector<96x128xf32>
    %98 = vector.shape_cast %97 : vector<96x128xf32> to vector<6x16x128xf32>
    %c0_109 = arith.constant 0 : index
    %c0_110 = arith.constant 0 : index
    %c0_111 = arith.constant 0 : index
    %99 = vector.load %arg8[%c0_109, %c0_110, %c0_111] : memref<8x16x128xf32, #tpu.memory_space<vmem>>, vector<6x16x128xf32>
    %100 = arith.addf %99, %98 : vector<6x16x128xf32>
    %c0_112 = arith.constant 0 : index
    %c0_113 = arith.constant 0 : index
    %c0_114 = arith.constant 0 : index
    %101 = vector.load %arg8[%c0_112, %c0_113, %c0_114] : memref<8x16x128xf32, #tpu.memory_space<vmem>>, vector<6x16x128xf32>
    tpu.vector_store %arg8[%c0_112, %c0_113, %c0_114], %100 {strides = array<i32>} : memref<8x16x128xf32, #tpu.memory_space<vmem>>, vector<6x16x128xf32>,
    %102 = vector.extract_strided_slice %3 {offsets = [0, 1, 0], sizes = [2, 16, 128], strides = [1, 1, 1]} : vector<2x18x128xf32> to vector<2x16x128xf32>
    %103 = vector.shape_cast %102 : vector<2x16x128xf32> to vector<32x128xf32>
    %cst_115 = arith.constant dense<0.000000e+00> : vector<32x128xf32>
    %104 = tpu.matmul %103, %94, %cst_115 {dimension_numbers = #tpu.dot_dimension_numbers<[1], [0], [0], [1], [0, 0, 1, 1], [], []>} : vector<32x128xf32>, vector<128x128xf32>, vector<32x128xf32> -> vector<32x128xf32>
    %c6_116 = arith.constant 6 : index
    %c0_117 = arith.constant 0 : index
    %c0_118 = arith.constant 0 : index
    %105 = vector.load %arg8[%c6_116, %c0_117, %c0_118] : memref<8x16x128xf32, #tpu.memory_space<vmem>>, vector<2x16x128xf32>
    %106 = vector.shape_cast %104 : vector<32x128xf32> to vector<2x16x128xf32>
    %107 = arith.addf %105, %106 : vector<2x16x128xf32>
    %c6_119 = arith.constant 6 : index
    %c0_120 = arith.constant 0 : index
    %c0_121 = arith.constant 0 : index
    %108 = vector.load %arg8[%c6_119, %c0_120, %c0_121] : memref<8x16x128xf32, #tpu.memory_space<vmem>>, vector<2x16x128xf32>
    tpu.vector_store %arg8[%c6_119, %c0_120, %c0_121], %107 {strides = array<i32>} : memref<8x16x128xf32, #tpu.memory_space<vmem>>, vector<2x16x128xf32>,
    %c2_122 = arith.constant 2 : index
    %c2_123 = arith.constant 2 : index
    %c0_124 = arith.constant 0 : index
    %c0_125 = arith.constant 0 : index
    %109 = vector.load %arg5[%c2_122, %c2_123, %c0_124, %c0_125] : memref<3x3x128x128xf32, #tpu.memory_space<vmem>>, vector<1x1x128x128xf32>
    %110 = vector.shape_cast %109 : vector<1x1x128x128xf32> to vector<128x128xf32>
    %111 = vector.extract_strided_slice %1 {offsets = [2, 2, 0], sizes = [6, 16, 128], strides = [1, 1, 1]} : vector<8x18x128xf32> to vector<6x16x128xf32>
    %112 = vector.shape_cast %111 : vector<6x16x128xf32> to vector<96x128xf32>
    %cst_126 = arith.constant dense<0.000000e+00> : vector<96x128xf32>
    %113 = tpu.matmul %112, %110, %cst_126 {dimension_numbers = #tpu.dot_dimension_numbers<[1], [0], [0], [1], [0, 0, 1, 1], [], []>} : vector<96x128xf32>, vector<128x128xf32>, vector<96x128xf32> -> vector<96x128xf32>
    %114 = vector.shape_cast %113 : vector<96x128xf32> to vector<6x16x128xf32>
    %c0_127 = arith.constant 0 : index
    %c0_128 = arith.constant 0 : index
    %c0_129 = arith.constant 0 : index
    %115 = vector.load %arg8[%c0_127, %c0_128, %c0_129] : memref<8x16x128xf32, #tpu.memory_space<vmem>>, vector<6x16x128xf32>
    %116 = arith.addf %115, %114 : vector<6x16x128xf32>
    %c0_130 = arith.constant 0 : index
    %c0_131 = arith.constant 0 : index
    %c0_132 = arith.constant 0 : index
    %117 = vector.load %arg8[%c0_130, %c0_131, %c0_132] : memref<8x16x128xf32, #tpu.memory_space<vmem>>, vector<6x16x128xf32>
    tpu.vector_store %arg8[%c0_130, %c0_131, %c0_132], %116 {strides = array<i32>} : memref<8x16x128xf32, #tpu.memory_space<vmem>>, vector<6x16x128xf32>,
    %118 = vector.extract_strided_slice %3 {offsets = [0, 2, 0], sizes = [2, 16, 128], strides = [1, 1, 1]} : vector<2x18x128xf32> to vector<2x16x128xf32>
    %119 = vector.shape_cast %118 : vector<2x16x128xf32> to vector<32x128xf32>
    %cst_133 = arith.constant dense<0.000000e+00> : vector<32x128xf32>
    %120 = tpu.matmul %119, %110, %cst_133 {dimension_numbers = #tpu.dot_dimension_numbers<[1], [0], [0], [1], [0, 0, 1, 1], [], []>} : vector<32x128xf32>, vector<128x128xf32>, vector<32x128xf32> -> vector<32x128xf32>
    %c6_134 = arith.constant 6 : index
    %c0_135 = arith.constant 0 : index
    %c0_136 = arith.constant 0 : index
    %121 = vector.load %arg8[%c6_134, %c0_135, %c0_136] : memref<8x16x128xf32, #tpu.memory_space<vmem>>, vector<2x16x128xf32>
    %122 = vector.shape_cast %120 : vector<32x128xf32> to vector<2x16x128xf32>
    %123 = arith.addf %121, %122 : vector<2x16x128xf32>
    %c6_137 = arith.constant 6 : index
    %c0_138 = arith.constant 0 : index
    %c0_139 = arith.constant 0 : index
    %124 = vector.load %arg8[%c6_137, %c0_138, %c0_139] : memref<8x16x128xf32, #tpu.memory_space<vmem>>, vector<2x16x128xf32>
    tpu.vector_store %arg8[%c6_137, %c0_138, %c0_139], %123 {strides = array<i32>} : memref<8x16x128xf32, #tpu.memory_space<vmem>>, vector<2x16x128xf32>,
    %c0_140 = arith.constant 0 : index
    %c0_141 = arith.constant 0 : index
    %c0_142 = arith.constant 0 : index
    %125 = vector.load %arg8[%c0_140, %c0_141, %c0_142] : memref<8x16x128xf32, #tpu.memory_space<vmem>>, vector<8x16x128xf32>
    %c0_143 = arith.constant 0 : index
    %c0_144 = arith.constant 0 : index
    %c0_145 = arith.constant 0 : index
    %126 = vector.load %arg6[%c0_143, %c0_144, %c0_145] : memref<1x1x128xf32, #tpu.memory_space<vmem>>, vector<1x1x128xf32>
    %127 = vector.broadcast %126 : vector<1x1x128xf32> to vector<8x16x128xf32>
    %128 = arith.addf %125, %127 : vector<8x16x128xf32>
    %cst_146 = arith.constant 0.000000e+00 : f32
    %129 = vector.broadcast %cst_146 : f32 to vector<8x16x128xf32>
    %130 = arith.maximumf %128, %129 : vector<8x16x128xf32>
    %c0_147 = arith.constant 0 : index
    %c0_148 = arith.constant 0 : index
    %c0_149 = arith.constant 0 : index
    %c0_150 = arith.constant 0 : index
    %131 = vector.load %arg7[%c0_147, %c0_148, %c0_149, %c0_150] : memref<1x8x16x128xf32, #tpu.memory_space<vmem>>, vector<1x8x16x128xf32>
    %132 = vector.shape_cast %131 : vector<1x8x16x128xf32> to vector<8x16x128xf32>
    %133 = vector.shape_cast %130 : vector<8x16x128xf32> to vector<1x8x16x128xf32>
    tpu.vector_store %arg7[%c0_147, %c0_148, %c0_149, %c0_150], %133 {strides = array<i32>} : memref<1x8x16x128xf32, #tpu.memory_space<vmem>>, vector<1x8x16x128xf32>,
    return
  }
  func.func @transform_0(%arg0: i32, %arg1: i32, %arg2: i32) -> (i32, i32, i32, i32) {
    %c0_i32 = arith.constant 0 : i32
    %c0_i32_0 = arith.constant 0 : i32
    %c0_i32_1 = arith.constant 0 : i32
    return %arg0, %arg1, %c0_i32, %c0_i32_0 : i32, i32, i32, i32
  }
  func.func @transform_1(%arg0: i32, %arg1: i32, %arg2: i32) -> (i32, i32, i32, i32) {
    %c1_i32 = arith.constant 1 : i32
    %0 = arith.addi %arg1, %c1_i32 : i32
    %c4_i32 = arith.constant 4 : i32
    %1 = arith.muli %0, %c4_i32 : i32
    %c0_i32 = arith.constant 0 : i32
    %c0_i32_0 = arith.constant 0 : i32
    %c0_i32_1 = arith.constant 0 : i32
    return %arg0, %1, %c0_i32, %c0_i32_0 : i32, i32, i32, i32
  }
  func.func @transform_2(%arg0: i32, %arg1: i32, %arg2: i32) -> (i32, i32, i32, i32) {
    %c0_i32 = arith.constant 0 : i32
    %c0_i32_0 = arith.constant 0 : i32
    %c0_i32_1 = arith.constant 0 : i32
    %c0_i32_2 = arith.constant 0 : i32
    return %c0_i32, %c0_i32_0, %c0_i32_1, %arg2 : i32, i32, i32, i32
  }
  func.func @transform_3(%arg0: i32, %arg1: i32, %arg2: i32) -> (i32, i32, i32) {
    %c0_i32 = arith.constant 0 : i32
    %c0_i32_0 = arith.constant 0 : i32
    %c0_i32_1 = arith.constant 0 : i32
    return %c0_i32, %c0_i32_0, %arg2 : i32, i32, i32
  }
  func.func @transform_4(%arg0: i32, %arg1: i32, %arg2: i32) -> (i32, i32, i32, i32) {
    %c0_i32 = arith.constant 0 : i32
    %c0_i32_0 = arith.constant 0 : i32
    return %arg0, %arg1, %c0_i32, %arg2 : i32, i32, i32, i32
  }
}

</mosaic_0001>

<llo_original>
// kernel: tpu_custom_call.1
$region0: #{tpu_custom_call.1}
  #allocation0 [shape = 'u32[]', space=smem, size = 0x4, offset = 0x4, fixed_abs, tag = 'smem constant byte address 0x4 - core index']
  #allocation1 [shape = 'u32[144,128]{1,0:T(1,128)}', space=vmem, size = 0x12000, scoped, tag = 'internal scratch']
  #allocation2 [shape = 'f32[8,16,128]{2,1,0:T(8,128)}', space=vmem, size = 0x10000, scoped, tag = 'scratch operand']
  %s0 = inlined_call_operand.vmem [shape: f32[2,18,18,128], index: 0, kind: input, shape index: {}]
  %s1 = inlined_call_operand.vmem [shape: f32[2,18,18,128], index: 1, kind: input, shape index: {}]
  %s2 = inlined_call_operand.vmem [shape: f32[3,3,128,128], index: 2, kind: input, shape index: {}]
  %s3 = inlined_call_operand.vmem [shape: f32[1,1,128], index: 3, kind: input, shape index: {}]
  %s4 = inlined_call_operand.hbm [shape: f32[2,16,16,128], index: 4, kind: output, shape index: {}]
  %s5 = sld [smem:[#allocation0]]
  $region49: #{tpu_custom_call.1} parent=0
    _
  %s7 = ssub.s32 1, %s5
  %s8 = scalar_select 0, %s7, %s5
  $region1: #{tpu_custom_call.1} parent=0
    #allocation3 [shape = 'u8[131072]{0}', space=vmem, size = 0x20000, scoped, tag = 'output window, operand 0']
    #allocation4 [shape = 's32[2]{0}', space=sflag, size = 0x8, scoped, tag = 'scoped memory for tpu_custom_call.1']
    %9 = vsyncpa [#allocation4], 0
    %s10 = scalar_lea.sflag [#allocation4], 1
    %11 = vsyncpa %s10, 0
    loop: start=0, step=1, limit=6
    $region2: #{tpu_custom_call.1} parent=1 // loop_pre_header
      _
    $region3: #{tpu_custom_call.1} parent=1 // loop_header
      %s13 = sphi 0, %s17
      %p14 = scmp.ge.s32.totalorder %s13, 6
      %s20 = sphi 0, %s39
      %s21 = sphi 0, %s35
      %s22 = sphi 0, %s31
      %s23 = sphi 0, %s20
      %s24 = sphi 0, %s21
      %s25 = sphi 0, %s22
      %s26 = sphi 0, %s23
      %s27 = sphi 0, %s24
      %s28 = sphi 0, %s25
      %s44 = sphi 0, %s46
      %s47 = sphi 0, %s44
      %s48 = sphi 0, %s47
      %s64 = sphi 0, %s48
      %s76 = sphi 0, %s78
      %s79 = sphi 0, %s76
      %s80 = sphi 0, %s79
      %s96 = sphi 0, %s80
      %s102 = sphi 0, %s104
      %s105 = sphi 0, %s102
      %s106 = sphi 0, %s105
      %s122 = sphi 0, %s106
      %s128 = sphi 0, %s130
      %s131 = sphi 0, %s128
      %s132 = sphi 0, %s131
      %s148 = sphi 0, %s132
      %s158 = sphi 0, %s160
      %s161 = sphi 0, %s158
      %s162 = sphi 0, %s161
      %s178 = sphi 0, %s162
    $region4: #{tpu_custom_call.1} parent=1 // loop_header_branch
      %16 = sbr.rel (%p14) target = $region8
    $region5: #{tpu_custom_call.1} parent=1 // loop_body
      %s18 = ssub.s32 %s13, 1
      %s19 = ssub.s32 %s13, 2
      %s29 = sadd.s32 1, %s22
      %p30 = scmp.ge.s32.totalorder %s29, 1
      %s31 = scalar_select %p30, 0, %s29
      %s32 = sadd.s32 1, %s21
      %s33 = scalar_select %p30, %s32, %s21
      %p34 = scmp.ge.s32.totalorder %s33, 2
      %s35 = scalar_select %p34, 0, %s33
      %s36 = sadd.s32 1, %s20
      %s37 = scalar_select %p34, %s36, %s20
      %p38 = scmp.ge.s32.totalorder %s37, 2
      %s39 = scalar_select %p38, 0, %s37
      %s40 = ssub.s32 %s20, %s39
      %s41 = ssub.s32 %s21, %s35
      %s42 = sor.u32 %s40, %s41
      %p43 = scmp.eq.s32.totalorder %s42, 0
      %s45 = sadd.s32 %s44, 1
      %s46 = scalar_select %p43, %s44, %s45
      %p49 = pneg %p43
      %p50 = scmp.eq.s32.totalorder %s13, 3
      %p51 = por %p49, %p50
      %p52 = scmp.ne.s32.totalorder %s44, %s47
      %p53 = scmp.eq.s32.totalorder %s13, 0
      %p54 = por %p52, %p53
      %p55 = scmp.ne.s32.totalorder %s44, %s47
      %p56 = scmp.eq.s32.totalorder %s18, 3
      %p57 = por %p55, %p56
      %p58 = scmp.ne.s32.totalorder %s47, %s48
      %p59 = scmp.eq.s32.totalorder %s18, 0
      %p60 = por %p58, %p59
      %p61 = scmp.ne.s32.totalorder %s47, %s48
      %p62 = scmp.eq.s32.totalorder %s19, 3
      %p63 = por %p61, %p62
      %p65 = scmp.ne.s32.totalorder %s48, %s64
      %p66 = scmp.eq.s32.totalorder %s19, 0
      %p67 = por %p65, %p66
      %s68 = sadd.s32 %s21, 1
      %s69 = smul.u32 %s68, 4
      %s70 = sadd.s32 %s35, 1
      %s71 = smul.u32 %s70, 4
      %s72 = ssub.s32 %s20, %s39
      %s73 = ssub.s32 %s69, %s71
      %s74 = sor.u32 %s72, %s73
      %p75 = scmp.eq.s32.totalorder %s74, 0
      %s77 = sadd.s32 %s76, 1
      %s78 = scalar_select %p75, %s76, %s77
      %p81 = pneg %p75
      %p82 = scmp.eq.s32.totalorder %s13, 3
      %p83 = por %p81, %p82
      %p84 = scmp.ne.s32.totalorder %s76, %s79
      %p85 = scmp.eq.s32.totalorder %s13, 0
      %p86 = por %p84, %p85
      %p87 = scmp.ne.s32.totalorder %s76, %s79
      %p88 = scmp.eq.s32.totalorder %s18, 3
      %p89 = por %p87, %p88
      %p90 = scmp.ne.s32.totalorder %s79, %s80
      %p91 = scmp.eq.s32.totalorder %s18, 0
      %p92 = por %p90, %p91
      %p93 = scmp.ne.s32.totalorder %s79, %s80
      %p94 = scmp.eq.s32.totalorder %s19, 3
      %p95 = por %p93, %p94
      %p97 = scmp.ne.s32.totalorder %s80, %s96
      %p98 = scmp.eq.s32.totalorder %s19, 0
      %p99 = por %p97, %p98
      %s100 = ssub.s32 %s22, %s31
      %p101 = scmp.eq.s32.totalorder %s100, 0
      %s103 = sadd.s32 %s102, 1
      %s104 = scalar_select %p101, %s102, %s103
      %p107 = pneg %p101
      %p108 = scmp.eq.s32.totalorder %s13, 3
      %p109 = por %p107, %p108
      %p110 = scmp.ne.s32.totalorder %s102, %s105
      %p111 = scmp.eq.s32.totalorder %s13, 0
      %p112 = por %p110, %p111
      %p113 = scmp.ne.s32.totalorder %s102, %s105
      %p114 = scmp.eq.s32.totalorder %s18, 3
      %p115 = por %p113, %p114
      %p116 = scmp.ne.s32.totalorder %s105, %s106
      %p117 = scmp.eq.s32.totalorder %s18, 0
      %p118 = por %p116, %p117
      %p119 = scmp.ne.s32.totalorder %s105, %s106
      %p120 = scmp.eq.s32.totalorder %s19, 3
      %p121 = por %p119, %p120
      %p123 = scmp.ne.s32.totalorder %s106, %s122
      %p124 = scmp.eq.s32.totalorder %s19, 0
      %p125 = por %p123, %p124
      %s126 = ssub.s32 %s22, %s31
      %p127 = scmp.eq.s32.totalorder %s126, 0
      %s129 = sadd.s32 %s128, 1
      %s130 = scalar_select %p127, %s128, %s129
      %p133 = pneg %p127
      %p134 = scmp.eq.s32.totalorder %s13, 3
      %p135 = por %p133, %p134
      %p136 = scmp.ne.s32.totalorder %s128, %s131
      %p137 = scmp.eq.s32.totalorder %s13, 0
      %p138 = por %p136, %p137
      %p139 = scmp.ne.s32.totalorder %s128, %s131
      %p140 = scmp.eq.s32.totalorder %s18, 3
      %p141 = por %p139, %p140
      %p142 = scmp.ne.s32.totalorder %s131, %s132
      %p143 = scmp.eq.s32.totalorder %s18, 0
      %p144 = por %p142, %p143
      %p145 = scmp.ne.s32.totalorder %s131, %s132
      %p146 = scmp.eq.s32.totalorder %s19, 3
      %p147 = por %p145, %p146
      %p149 = scmp.ne.s32.totalorder %s132, %s148
      %p150 = scmp.eq.s32.totalorder %s19, 0
      %p151 = por %p149, %p150
      %s152 = ssub.s32 %s20, %s39
      %s153 = ssub.s32 %s21, %s35
      %s154 = sor.u32 %s152, %s153
      %s155 = ssub.s32 %s22, %s31
      %s156 = sor.u32 %s154, %s155
      %p157 = scmp.eq.s32.totalorder %s156, 0
      %s159 = sadd.s32 %s158, 1
      %s160 = scalar_select %p157, %s158, %s159
      %p163 = pneg %p157
      %p164 = scmp.eq.s32.totalorder %s13, 3
      %p165 = por %p163, %p164
      %p166 = scmp.ne.s32.totalorder %s158, %s161
      %p167 = scmp.eq.s32.totalorder %s13, 0
      %p168 = por %p166, %p167
      %p169 = scmp.ne.s32.totalorder %s158, %s161
      %p170 = scmp.eq.s32.totalorder %s18, 3
      %p171 = por %p169, %p170
      %p172 = scmp.ne.s32.totalorder %s161, %s162
      %p173 = scmp.eq.s32.totalorder %s18, 0
      %p174 = por %p172, %p173
      %p175 = scmp.ne.s32.totalorder %s161, %s162
      %p176 = scmp.eq.s32.totalorder %s19, 3
      %p177 = por %p175, %p176
      %p179 = scmp.ne.s32.totalorder %s162, %s178
      %p180 = scmp.eq.s32.totalorder %s19, 0
      %p181 = por %p179, %p180
      %p182 = scmp.le.s32.totalorder 1, %s13
      %p183 = scmp.lt.s32.totalorder %s13, 5
      %p184 = pnand %p182, %p183
      %p185 = pneg %p184
      // Predicated region
      $region9: #{tpu_custom_call.1} parent=5 // pred_check
        _
      $region10: #{tpu_custom_call.1} parent=5 // pred_check_branch
        %187 = sbr.rel (%p184) target = $region12
      $region11: #{tpu_custom_call.1} parent=5 // pred_region
        %s188 = ssub.s32 %s13, 1
        // Predicated region
        $region13: #{tpu_custom_call.1} parent=11 // pred_check
          %p189 = pneg %p118
        $region14: #{tpu_custom_call.1} parent=11 // pred_check_branch
          %191 = sbr.rel (%p189) target = $region16
        $region15: #{tpu_custom_call.1} parent=11 // pred_region
          %p192 = scmp.lt.s32.totalorder %s25, 0
          %s193 = scalar_select %p192, %s25, 0
          %s194 = smul.addr %s193, 8
          %s195 = scalar_lea.vmem %s2, %s194
        $region16: #{tpu_custom_call.1} parent=11 // pred_fallthru
          _
        // Predicated region
        $region17: #{tpu_custom_call.1} parent=11 // pred_check
          %p196 = pneg %p144
        $region18: #{tpu_custom_call.1} parent=11 // pred_check_branch
          %198 = sbr.rel (%p196) target = $region20
        $region19: #{tpu_custom_call.1} parent=11 // pred_region
          %p199 = scmp.lt.s32.totalorder %s25, 0
          %s200 = scalar_select %p199, %s25, 0
          %s201 = scalar_lea.vmem %s3, %s200
        $region20: #{tpu_custom_call.1} parent=11 // pred_fallthru
          _
      $region12: #{tpu_custom_call.1} parent=5 // pred_fallthru
        _
      %p202 = scmp.lt.s32.totalorder %s13, 4
      // Predicated region
      $region21: #{tpu_custom_call.1} parent=5 // pred_check
        %p203 = pneg %p202
      $region22: #{tpu_custom_call.1} parent=5 // pred_check_branch
        %205 = sbr.rel (%p203) target = $region24
      $region23: #{tpu_custom_call.1} parent=5 // pred_region
        // Predicated region
        $region25: #{tpu_custom_call.1} parent=23 // pred_check
          %p206 = pneg %p54
        $region26: #{tpu_custom_call.1} parent=23 // pred_check_branch
          %208 = sbr.rel (%p206) target = $region28
        $region27: #{tpu_custom_call.1} parent=23 // pred_region
          %s209 = smul.u32 8, %s21
          %s210 = ssub.s32 18, %s209
          %p211 = scmp.lt.s32.totalorder %s210, 8
          %s212 = scalar_select %p211, %s210, 8
          %s213 = smul.u32 128, %s212
          %s214 = smul.u32 %s213, 3
          %p215 = scmp.lt.s32.totalorder %s20, 1
          %s216 = scalar_select %p215, %s20, 1
          %p217 = scmp.lt.s32.totalorder %s209, 17
          %s218 = scalar_select %p217, %s209, 17
          %s219 = smul.addr %s218, 3
          %s220 = smul.addr %s216, 54
          %s221 = sadd.s32 %s219, %s220
          %s222 = smul.addr %s221, 8
          %s223 = scalar_lea.vmem %s0, %s222
          %s224 = smul.u32 8, %s21
          %s225 = ssub.s32 18, %s224
          %p226 = scmp.lt.s32.totalorder %s225, 8
          %s227 = scalar_select %p226, %s225, 8
          %s228 = smul.u32 128, %s227
          %s229 = smul.u32 %s228, 3
        $region28: #{tpu_custom_call.1} parent=23 // pred_fallthru
          _
        // Predicated region
        $region29: #{tpu_custom_call.1} parent=23 // pred_check
          %p230 = pneg %p86
        $region30: #{tpu_custom_call.1} parent=23 // pred_check_branch
          %232 = sbr.rel (%p230) target = $region32
        $region31: #{tpu_custom_call.1} parent=23 // pred_region
          %s233 = sadd.s32 %s21, 1
          %s234 = smul.u32 %s233, 4
          %s235 = smul.u32 2, %s234
          %p236 = scmp.lt.s32.totalorder %s20, 1
          %s237 = scalar_select %p236, %s20, 1
          %p238 = scmp.lt.s32.totalorder %s235, 17
          %s239 = scalar_select %p238, %s235, 17
          %s240 = smul.addr %s239, 3
          %s241 = smul.addr %s237, 54
          %s242 = sadd.s32 %s240, %s241
          %s243 = smul.addr %s242, 8
          %s244 = scalar_lea.vmem %s1, %s243
          %s245 = sadd.s32 %s21, 1
          %s246 = smul.u32 %s245, 4
          %s247 = smul.u32 2, %s246
        $region32: #{tpu_custom_call.1} parent=23 // pred_fallthru
          _
      $region24: #{tpu_custom_call.1} parent=5 // pred_fallthru
        _
      %p248 = scmp.le.s32.totalorder 1, %s13
      %p249 = scmp.lt.s32.totalorder %s13, 5
      %p250 = pnand %p248, %p249
      %p251 = pneg %p250
      // Predicated region
      $region33: #{tpu_custom_call.1} parent=5 // pred_check
        _
      $region34: #{tpu_custom_call.1} parent=5 // pred_check_branch
        %253 = sbr.rel (%p250) target = $region36
      $region35: #{tpu_custom_call.1} parent=5 // pred_region
        %s254 = ssub.s32 %s13, 1
        %s255 = smul.u32 8, %s24
        %s256 = ssub.s32 18, %s255
        %p257 = scmp.lt.s32.totalorder %s256, 8
        %s258 = scalar_select %p257, %s256, 8
        %s259 = smul.u32 128, %s258
        %s260 = smul.u32 %s259, 3
        %p261 = scmp.lt.s32.totalorder %s23, 1
        %s262 = scalar_select %p261, %s23, 1
        %p263 = scmp.lt.s32.totalorder %s255, 17
        %s264 = scalar_select %p263, %s255, 17
        %s265 = smul.addr %s264, 3
        %s266 = smul.addr %s262, 54
        %s267 = sadd.s32 %s265, %s266
        %s268 = smul.addr %s267, 8
        %s269 = scalar_lea.vmem %s0, %s268
        %p270 = pneg %p60
        %p271 = pneg %p57
        %s272 = sadd.s32 %s24, 1
        %s273 = smul.u32 %s272, 4
        %s274 = smul.u32 2, %s273
        %p275 = scmp.lt.s32.totalorder %s23, 1
        %s276 = scalar_select %p275, %s23, 1
        %p277 = scmp.lt.s32.totalorder %s274, 17
        %s278 = scalar_select %p277, %s274, 17
        %s279 = smul.addr %s278, 3
        %s280 = smul.addr %s276, 54
        %s281 = sadd.s32 %s279, %s280
        %s282 = smul.addr %s281, 8
        %s283 = scalar_lea.vmem %s1, %s282
        %p284 = pneg %p92
        %p285 = pneg %p89
        %p286 = scmp.lt.s32.totalorder %s25, 0
        %s287 = scalar_select %p286, %s25, 0
        %s288 = smul.addr %s287, 8
        %s289 = scalar_lea.vmem %s2, %s288
        %p290 = pneg %p118
        %p291 = pneg %p115
        %p292 = scmp.lt.s32.totalorder %s25, 0
        %s293 = scalar_select %p292, %s25, 0
        %s294 = scalar_lea.vmem %s3, %s293
        %p295 = pneg %p144
        %p296 = pneg %p141
        %p297 = pneg %p174
        %p298 = pneg %p171
        %s299 = sand.u32 %s161, 1
        %s300 = scalar_lea.sflag [#allocation4], %s299
        %s301 = sand.u32 %s161, 1
        %s302 = smul.addr %s301, 128
        %s303 = scalar_lea.vmem [#allocation3], %s302
        %s304 = smul.u32 8, %s24
        %s305 = ssub.s32 18, %s304
        %p306 = scmp.lt.s32.totalorder %s305, 8
        %s307 = scalar_select %p306, %s305, 8
        %s308 = smul.u32 128, %s307
        %s309 = smul.u32 %s308, 3
        %p310 = scmp.lt.s32.totalorder %s23, 1
        %s311 = scalar_select %p310, %s23, 1
        %p312 = scmp.lt.s32.totalorder %s304, 17
        %s313 = scalar_select %p312, %s304, 17
        %s314 = smul.addr %s313, 3
        %s315 = smul.addr %s311, 54
        %s316 = sadd.s32 %s314, %s315
        %s317 = smul.addr %s316, 8
        %s318 = scalar_lea.vmem %s0, %s317
        %s319 = smul.u32 8, %s24
        %s320 = ssub.s32 18, %s319
        %p321 = scmp.lt.s32.totalorder %s320, 8
        %s322 = scalar_select %p321, %s320, 8
        %s323 = smul.u32 128, %s322
        %s324 = smul.u32 %s323, 3
        %s325 = sadd.s32 %s24, 1
        %s326 = smul.u32 %s325, 4
        %s327 = smul.u32 2, %s326
        %p328 = scmp.lt.s32.totalorder %s23, 1
        %s329 = scalar_select %p328, %s23, 1
        %p330 = scmp.lt.s32.totalorder %s327, 17
        %s331 = scalar_select %p330, %s327, 17
        %s332 = smul.addr %s331, 3
        %s333 = smul.addr %s329, 54
        %s334 = sadd.s32 %s332, %s333
        %s335 = smul.addr %s334, 8
        %s336 = scalar_lea.vmem %s1, %s335
        %s337 = sadd.s32 %s24, 1
        %s338 = smul.u32 %s337, 4
        %s339 = smul.u32 2, %s338
        %p340 = scmp.lt.s32.totalorder %s25, 0
        %s341 = scalar_select %p340, %s25, 0
        %s342 = smul.addr %s341, 8
        %s343 = scalar_lea.vmem %s2, %s342
        %p344 = scmp.lt.s32.totalorder %s25, 0
        %s345 = scalar_select %p344, %s25, 0
        %s346 = scalar_lea.vmem %s3, %s345
        %s347 = smul.u32 8, %s24
        %v348 = vld [vmem:[%s318] sm:$0xff]
        %v349 = vld [vmem:[%s318 + $0x8] sm:$0xff]
        %v350 = vld [vmem:[%s318 + $0x10] sm:$0x3]
        %v351 = vld [vmem:[%s318 + $0x18] sm:$0xff]
        %v352 = vld [vmem:[%s318 + $0x20] sm:$0xff]
        %v353 = vld [vmem:[%s318 + $0x28] sm:$0x3]
        %v354 = vld [vmem:[%s318 + $0x30] sm:$0xff]
        %v355 = vld [vmem:[%s318 + $0x38] sm:$0xff]
        %v356 = vld [vmem:[%s318 + $0x40] sm:$0x3]
        %v357 = vld [vmem:[%s318 + $0x48] sm:$0xff]
        %v358 = vld [vmem:[%s318 + $0x50] sm:$0xff]
        %v359 = vld [vmem:[%s318 + $0x58] sm:$0x3]
        %v360 = vld [vmem:[%s318 + $0x60] sm:$0xff]
        %v361 = vld [vmem:[%s318 + $0x68] sm:$0xff]
        %v362 = vld [vmem:[%s318 + $0x70] sm:$0x3]
        %v363 = vld [vmem:[%s318 + $0x78] sm:$0xff]
        %v364 = vld [vmem:[%s318 + $0x80] sm:$0xff]
        %v365 = vld [vmem:[%s318 + $0x88] sm:$0x3]
        %v366 = vld [vmem:[%s318 + $0x90] sm:$0xff]
        %v367 = vld [vmem:[%s318 + $0x98] sm:$0xff]
        %v368 = vld [vmem:[%s318 + $0xa0] sm:$0x3]
        %v369 = vld [vmem:[%s318 + $0xa8] sm:$0xff]
        %v370 = vld [vmem:[%s318 + $0xb0] sm:$0xff]
        %v371 = vld [vmem:[%s318 + $0xb8] sm:$0x3]
        %v372 = vld [vmem:[%s336] sm:$0xff]
        %v373 = vld [vmem:[%s336 + $0x8] sm:$0xff]
        %v374 = vld [vmem:[%s336 + $0x10] sm:$0x3]
        %v375 = vld [vmem:[%s336 + $0x18] sm:$0xff]
        %v376 = vld [vmem:[%s336 + $0x20] sm:$0xff]
        %v377 = vld [vmem:[%s336 + $0x28] sm:$0x3]
        %v378 = vld [vmem:[%s343] sm:$0xff]
        %v379 = vld [vmem:[%s343 + $0x8] sm:$0xff]
        %v380 = vld [vmem:[%s343 + $0x10] sm:$0xff]
        %v381 = vld [vmem:[%s343 + $0x18] sm:$0xff]
        %v382 = vld [vmem:[%s343 + $0x20] sm:$0xff]
        %v383 = vld [vmem:[%s343 + $0x28] sm:$0xff]
        %v384 = vld [vmem:[%s343 + $0x30] sm:$0xff]
        %v385 = vld [vmem:[%s343 + $0x38] sm:$0xff]
        %v386 = vld [vmem:[%s343 + $0x40] sm:$0xff]
        %v387 = vld [vmem:[%s343 + $0x48] sm:$0xff]
        %v388 = vld [vmem:[%s343 + $0x50] sm:$0xff]
        %v389 = vld [vmem:[%s343 + $0x58] sm:$0xff]
        %v390 = vld [vmem:[%s343 + $0x60] sm:$0xff]
        %v391 = vld [vmem:[%s343 + $0x68] sm:$0xff]
        %v392 = vld [vmem:[%s343 + $0x70] sm:$0xff]
        %v393 = vld [vmem:[%s343 + $0x78] sm:$0xff]
        %394 = vmatprep.subr.mxu0 0.0
        %395 = vmatpush1.msra.mxu0 %v378
        %396 = vmatprep.subr.mxu0 0.0
        %397 = vmatpush1.msra.mxu0 %v379
        %398 = vmatprep.subr.mxu0 0.0
        %399 = vmatpush1.msra.mxu0 %v380
        %400 = vmatprep.subr.mxu0 0.0
        %401 = vmatpush1.msra.mxu0 %v381
        %402 = vmatprep.subr.mxu0 0.0
        %403 = vmatpush1.msra.mxu0 %v382
        %404 = vmatprep.subr.mxu0 0.0
        %405 = vmatpush1.msra.mxu0 %v383
        %406 = vmatprep.subr.mxu0 0.0
        %407 = vmatpush1.msra.mxu0 %v384
        %408 = vmatprep.subr.mxu0 0.0
        %409 = vmatpush1.msra.mxu0 %v385
        %410 = vmatprep.subr.mxu0 0.0
        %411 = vmatpush1.msra.mxu0 %v386
        %412 = vmatprep.subr.mxu0 0.0
        %413 = vmatpush1.msra.mxu0 %v387
        %414 = vmatprep.subr.mxu0 0.0
        %415 = vmatpush1.msra.mxu0 %v388
        %416 = vmatprep.subr.mxu0 0.0
        %417 = vmatpush1.msra.mxu0 %v389
        %418 = vmatprep.subr.mxu0 0.0
        %419 = vmatpush1.msra.mxu0 %v390
        %420 = vmatprep.subr.mxu0 0.0
        %421 = vmatpush1.msra.mxu0 %v391
        %422 = vmatprep.subr.mxu0 0.0
        %423 = vmatpush1.msra.mxu0 %v392
        %424 = vmatprep.subr.mxu0 0.0
        %425 = vmatpush1.msra.mxu0 %v393
        %426 = vmatprep.subr.mxu0 0.0
        %427 = vmatpush1.msra.mxu0 0.0
        %428 = vmatprep.subr.mxu0 0.0
        %429 = vmatpush1.msra.mxu0 0.0
        %430 = vmatprep.subr.mxu0 0.0
        %431 = vmatpush1.msra.mxu0 0.0
        %432 = vmatprep.subr.mxu0 0.0
        %433 = vmatpush1.msra.mxu0 0.0
        %434 = vmatprep.subr.mxu0 0.0
        %435 = vmatpush1.msra.mxu0 0.0
        %436 = vmatprep.subr.mxu0 0.0
        %437 = vmatpush1.msra.mxu0 0.0
        %438 = vmatprep.subr.mxu0 0.0
        %439 = vmatpush1.msra.mxu0 0.0
        %440 = vmatprep.subr.mxu0 0.0
        %441 = vmatpush1.msra.mxu0 0.0
        %442 = vmatprep.subr.mxu0 0.0
        %443 = vmatpush1.msra.mxu0 0.0
        %444 = vmatprep.subr.mxu0 0.0
        %445 = vmatpush1.msra.mxu0 0.0
        %446 = vmatprep.subr.mxu0 0.0
        %447 = vmatpush1.msra.mxu0 0.0
        %448 = vmatprep.subr.mxu0 0.0
        %449 = vmatpush1.msra.mxu0 0.0
        %450 = vmatprep.subr.mxu0 0.0
        %451 = vmatpush1.msra.mxu0 0.0
        %452 = vmatprep.subr.mxu0 0.0
        %453 = vmatpush1.msra.mxu0 0.0
        %454 = vmatprep.subr.mxu0 0.0
        %455 = vmatpush1.msra.mxu0 0.0
        %456 = vmatprep.subr.mxu0 0.0
        %457 = vmatpush1.msra.mxu0 0.0
        %458 = vmatprep.mubr.f32.mxu0 0.0
        %459 = vmatmul.mubr.f32.gmra.mrb[0].mxu0 %v348
        %v460 = vpop.f32.mrb[0].mxu0
        %v461 = vadd.f32 0.0, %v460
        %v462 = vpop.f32.mrb[0].mxu0
        %463 = vmatprep.mubr.f32.mxu0 0.0
        %464 = vmatmul.mubr.f32.gmra.mrb[0].mxu0 %v349
        %v465 = vpop.f32.mrb[0].mxu0
        %v466 = vadd.f32 0.0, %v465
        %v467 = vpop.f32.mrb[0].mxu0
        %468 = vmatprep.mubr.f32.mxu0 0.0
        %469 = vmatmul.mubr.f32.gmra.mrb[0].mxu0 %v351
        %v470 = vpop.f32.mrb[0].mxu0
        %v471 = vadd.f32 0.0, %v470
        %v472 = vpop.f32.mrb[0].mxu0
        %473 = vmatprep.mubr.f32.mxu0 0.0
        %474 = vmatmul.mubr.f32.gmra.mrb[0].mxu0 %v352
        %v475 = vpop.f32.mrb[0].mxu0
        %v476 = vadd.f32 0.0, %v475
        %v477 = vpop.f32.mrb[0].mxu0
        %478 = vmatprep.mubr.f32.mxu0 0.0
        %479 = vmatmul.mubr.f32.gmra.mrb[0].mxu0 %v354
        %v480 = vpop.f32.mrb[0].mxu0
        %v481 = vadd.f32 0.0, %v480
        %v482 = vpop.f32.mrb[0].mxu0
        %483 = vmatprep.mubr.f32.mxu0 0.0
        %484 = vmatmul.mubr.f32.gmra.mrb[0].mxu0 %v355
        %v485 = vpop.f32.mrb[0].mxu0
        %v486 = vadd.f32 0.0, %v485
        %v487 = vpop.f32.mrb[0].mxu0
        %488 = vmatprep.mubr.f32.mxu0 0.0
        %489 = vmatmul.mubr.f32.gmra.mrb[0].mxu0 %v357
        %v490 = vpop.f32.mrb[0].mxu0
        %v491 = vadd.f32 0.0, %v490
        %v492 = vpop.f32.mrb[0].mxu0
        %493 = vmatprep.mubr.f32.mxu0 0.0
        %494 = vmatmul.mubr.f32.gmra.mrb[0].mxu0 %v358
        %v495 = vpop.f32.mrb[0].mxu0
        %v496 = vadd.f32 0.0, %v495
        %v497 = vpop.f32.mrb[0].mxu0
        %498 = vmatprep.mubr.f32.mxu0 0.0
        %499 = vmatmul.mubr.f32.gmra.mrb[0].mxu0 %v360
        %v500 = vpop.f32.mrb[0].mxu0
        %v501 = vadd.f32 0.0, %v500
        %v502 = vpop.f32.mrb[0].mxu0
        %503 = vmatprep.mubr.f32.mxu0 0.0
        %504 = vmatmul.mubr.f32.gmra.mrb[0].mxu0 %v361
        %v505 = vpop.f32.mrb[0].mxu0
        %v506 = vadd.f32 0.0, %v505
        %v507 = vpop.f32.mrb[0].mxu0
        %508 = vmatprep.mubr.f32.mxu0 0.0
        %509 = vmatmul.mubr.f32.gmra.mrb[0].mxu0 %v363
        %v510 = vpop.f32.mrb[0].mxu0
        %v511 = vadd.f32 0.0, %v510
        %v512 = vpop.f32.mrb[0].mxu0
        %513 = vmatprep.mubr.f32.mxu0 0.0
        %514 = vmatmul.mubr.f32.gmra.mrb[0].mxu0 %v364
        %v515 = vpop.f32.mrb[0].mxu0
        %v516 = vadd.f32 0.0, %v515
        %v517 = vpop.f32.mrb[0].mxu0
        %518 = vmatprep.mubr.f32.mxu0 0.0
        %519 = vmatmul.mubr.f32.gmra.mrb[0].mxu0 %v366
        %v520 = vpop.f32.mrb[0].mxu0
        %v521 = vadd.f32 0.0, %v520
        %v522 = vpop.f32.mrb[0].mxu0
        %523 = vmatprep.mubr.f32.mxu0 0.0
        %524 = vmatmul.mubr.f32.gmra.mrb[0].mxu0 %v367
        %v525 = vpop.f32.mrb[0].mxu0
        %v526 = vadd.f32 0.0, %v525
        %v527 = vpop.f32.mrb[0].mxu0
        %528 = vmatprep.mubr.f32.mxu0 0.0
        %529 = vmatmul.mubr.f32.gmra.mrb[0].mxu0 %v369
        %v530 = vpop.f32.mrb[0].mxu0
        %v531 = vadd.f32 0.0, %v530
        %v532 = vpop.f32.mrb[0].mxu0
        %533 = vmatprep.mubr.f32.mxu0 0.0
        %534 = vmatmul.mubr.f32.gmra.mrb[0].mxu0 %v370
        %v535 = vpop.f32.mrb[0].mxu0
        %v536 = vadd.f32 0.0, %v535
        %v537 = vpop.f32.mrb[0].mxu0
        %538 = vdwg.mxu0
        %539 = vst [vmem:[#allocation2] sm:$0xff] %v461
        %540 = vst [vmem:[#allocation2 + $0x8] sm:$0xff] %v466
        %541 = vst [vmem:[#allocation2 + $0x10] sm:$0xff] %v471
        %542 = vst [vmem:[#allocation2 + $0x18] sm:$0xff] %v476
        %543 = vst [vmem:[#allocation2 + $0x20] sm:$0xff] %v481
        %544 = vst [vmem:[#allocation2 + $0x28] sm:$0xff] %v486
        %545 = vst [vmem:[#allocation2 + $0x30] sm:$0xff] %v491
        %546 = vst [vmem:[#allocation2 + $0x38] sm:$0xff] %v496
        %547 = vst [vmem:[#allocation2 + $0x40] sm:$0xff] %v501
        %548 = vst [vmem:[#allocation2 + $0x48] sm:$0xff] %v506
        %549 = vst [vmem:[#allocation2 + $0x50] sm:$0xff] %v511
        %550 = vst [vmem:[#allocation2 + $0x58] sm:$0xff] %v516
        %551 = vst [vmem:[#allocation2 + $0x60] sm:$0xff] %v521
        %552 = vst [vmem:[#allocation2 + $0x68] sm:$0xff] %v526
        %553 = vst [vmem:[#allocation2 + $0x70] sm:$0xff] %v531
        %554 = vst [vmem:[#allocation2 + $0x78] sm:$0xff] %v536
        %s555 = scalar_lea.vmem %s343, 128
        %v556 = vld [vmem:[%s555] sm:$0xff]
        %v557 = vld [vmem:[%s555 + $0x8] sm:$0xff]
        %v558 = vld [vmem:[%s555 + $0x10] sm:$0xff]
        %v559 = vld [vmem:[%s555 + $0x18] sm:$0xff]
        %v560 = vld [vmem:[%s555 + $0x20] sm:$0xff]
        %v561 = vld [vmem:[%s555 + $0x28] sm:$0xff]
        %v562 = vld [vmem:[%s555 + $0x30] sm:$0xff]
        %v563 = vld [vmem:[%s555 + $0x38] sm:$0xff]
        %v564 = vld [vmem:[%s555 + $0x40] sm:$0xff]
        %v565 = vld [vmem:[%s555 + $0x48] sm:$0xff]
        %v566 = vld [vmem:[%s555 + $0x50] sm:$0xff]
        %v567 = vld [vmem:[%s555 + $0x58] sm:$0xff]
        %v568 = vld [vmem:[%s555 + $0x60] sm:$0xff]
        %v569 = vld [vmem:[%s555 + $0x68] sm:$0xff]
        %v570 = vld [vmem:[%s555 + $0x70] sm:$0xff]
        %v571 = vld [vmem:[%s555 + $0x78] sm:$0xff]
        %vm596 = vcmask 1046528
        %v597 = vrot.slane %v348, 1
        %v598 = vrot.slane %v349, 1
        %v599 = vsel %vm596, %v597, %v598
        %v600 = vrot.slane %v350, 1
        %v601 = vsel %vm596, %v598, %v600
        %v602 = vrot.slane %v351, 1
        %v603 = vrot.slane %v352, 1
        %v604 = vsel %vm596, %v602, %v603
        %v605 = vrot.slane %v353, 1
        %v606 = vsel %vm596, %v603, %v605
        %v607 = vrot.slane %v354, 1
        %v608 = vrot.slane %v355, 1
        %v609 = vsel %vm596, %v607, %v608
        %v610 = vrot.slane %v356, 1
        %v611 = vsel %vm596, %v608, %v610
        %v612 = vrot.slane %v357, 1
        %v613 = vrot.slane %v358, 1
        %v614 = vsel %vm596, %v612, %v613
        %v615 = vrot.slane %v359, 1
        %v616 = vsel %vm596, %v613, %v615
        %v617 = vrot.slane %v360, 1
        %v618 = vrot.slane %v361, 1
        %v619 = vsel %vm596, %v617, %v618
        %v620 = vrot.slane %v362, 1
        %v621 = vsel %vm596, %v618, %v620
        %v622 = vrot.slane %v363, 1
        %v623 = vrot.slane %v364, 1
        %v624 = vsel %vm596, %v622, %v623
        %v625 = vrot.slane %v365, 1
        %v626 = vsel %vm596, %v623, %v625
        %v627 = vrot.slane %v366, 1
        %v628 = vrot.slane %v367, 1
        %v629 = vsel %vm596, %v627, %v628
        %v630 = vrot.slane %v368, 1
        %v631 = vsel %vm596, %v628, %v630
        %v632 = vrot.slane %v369, 1
        %v633 = vrot.slane %v370, 1
        %v634 = vsel %vm596, %v632, %v633
        %v635 = vrot.slane %v371, 1
        %v636 = vsel %vm596, %v633, %v635
        %653 = vmatprep.subr.mxu0 0.0
        %654 = vmatpush1.msra.mxu0 %v556
        %655 = vmatprep.subr.mxu0 0.0
        %656 = vmatpush1.msra.mxu0 %v557
        %657 = vmatprep.subr.mxu0 0.0
        %658 = vmatpush1.msra.mxu0 %v558
        %659 = vmatprep.subr.mxu0 0.0
        %660 = vmatpush1.msra.mxu0 %v559
        %661 = vmatprep.subr.mxu0 0.0
        %662 = vmatpush1.msra.mxu0 %v560
        %663 = vmatprep.subr.mxu0 0.0
        %664 = vmatpush1.msra.mxu0 %v561
        %665 = vmatprep.subr.mxu0 0.0
        %666 = vmatpush1.msra.mxu0 %v562
        %667 = vmatprep.subr.mxu0 0.0
        %668 = vmatpush1.msra.mxu0 %v563
        %669 = vmatprep.subr.mxu0 0.0
        %670 = vmatpush1.msra.mxu0 %v564
        %671 = vmatprep.subr.mxu0 0.0
        %672 = vmatpush1.msra.mxu0 %v565
        %673 = vmatprep.subr.mxu0 0.0
        %674 = vmatpush1.msra.mxu0 %v566
        %675 = vmatprep.subr.mxu0 0.0
        %676 = vmatpush1.msra.mxu0 %v567
        %677 = vmatprep.subr.mxu0 0.0
        %678 = vmatpush1.msra.mxu0 %v568
        %679 = vmatprep.subr.mxu0 0.0
        %680 = vmatpush1.msra.mxu0 %v569
        %681 = vmatprep.subr.mxu0 0.0
        %682 = vmatpush1.msra.mxu0 %v570
        %683 = vmatprep.subr.mxu0 0.0
        %684 = vmatpush1.msra.mxu0 %v571
        %685 = vmatprep.subr.mxu0 0.0
        %686 = vmatpush1.msra.mxu0 0.0
        %687 = vmatprep.subr.mxu0 0.0
        %688 = vmatpush1.msra.mxu0 0.0
        %689 = vmatprep.subr.mxu0 0.0
        %690 = vmatpush1.msra.mxu0 0.0
        %691 = vmatprep.subr.mxu0 0.0
        %692 = vmatpush1.msra.mxu0 0.0
        %693 = vmatprep.subr.mxu0 0.0
        %694 = vmatpush1.msra.mxu0 0.0
        %695 = vmatprep.subr.mxu0 0.0
        %696 = vmatpush1.msra.mxu0 0.0
        %697 = vmatprep.subr.mxu0 0.0
        %698 = vmatpush1.msra.mxu0 0.0
        %699 = vmatprep.subr.mxu0 0.0
        %700 = vmatpush1.msra.mxu0 0.0
        %701 = vmatprep.subr.mxu0 0.0
        %702 = vmatpush1.msra.mxu0 0.0
        %703 = vmatprep.subr.mxu0 0.0
        %704 = vmatpush1.msra.mxu0 0.0
        %705 = vmatprep.subr.mxu0 0.0
        %706 = vmatpush1.msra.mxu0 0.0
        %707 = vmatprep.subr.mxu0 0.0
        %708 = vmatpush1.msra.mxu0 0.0
        %709 = vmatprep.subr.mxu0 0.0
        %710 = vmatpush1.msra.mxu0 0.0
        %711 = vmatprep.subr.mxu0 0.0
        %712 = vmatpush1.msra.mxu0 0.0
        %713 = vmatprep.subr.mxu0 0.0
        %714 = vmatpush1.msra.mxu0 0.0
        %715 = vmatprep.subr.mxu0 0.0
        %716 = vmatpush1.msra.mxu0 0.0
        %717 = vmatprep.mubr.f32.mxu0 0.0
        %718 = vmatmul.mubr.f32.gmra.mrb[0].mxu0 %v599
        %v719 = vpop.f32.mrb[0].mxu0
        %v720 = vadd.f32 0.0, %v719
        %v721 = vpop.f32.mrb[0].mxu0
        %722 = vmatprep.mubr.f32.mxu0 0.0
        %723 = vmatmul.mubr.f32.gmra.mrb[0].mxu0 %v601
        %v724 = vpop.f32.mrb[0].mxu0
        %v725 = vadd.f32 0.0, %v724
        %v726 = vpop.f32.mrb[0].mxu0
        %727 = vmatprep.mubr.f32.mxu0 0.0
        %728 = vmatmul.mubr.f32.gmra.mrb[0].mxu0 %v604
        %v729 = vpop.f32.mrb[0].mxu0
        %v730 = vadd.f32 0.0, %v729
        %v731 = vpop.f32.mrb[0].mxu0
        %732 = vmatprep.mubr.f32.mxu0 0.0
        %733 = vmatmul.mubr.f32.gmra.mrb[0].mxu0 %v606
        %v734 = vpop.f32.mrb[0].mxu0
        %v735 = vadd.f32 0.0, %v734
        %v736 = vpop.f32.mrb[0].mxu0
        %737 = vmatprep.mubr.f32.mxu0 0.0
        %738 = vmatmul.mubr.f32.gmra.mrb[0].mxu0 %v609
        %v739 = vpop.f32.mrb[0].mxu0
        %v740 = vadd.f32 0.0, %v739
        %v741 = vpop.f32.mrb[0].mxu0
        %742 = vmatprep.mubr.f32.mxu0 0.0
        %743 = vmatmul.mubr.f32.gmra.mrb[0].mxu0 %v611
        %v744 = vpop.f32.mrb[0].mxu0
        %v745 = vadd.f32 0.0, %v744
        %v746 = vpop.f32.mrb[0].mxu0
        %747 = vmatprep.mubr.f32.mxu0 0.0
        %748 = vmatmul.mubr.f32.gmra.mrb[0].mxu0 %v614
        %v749 = vpop.f32.mrb[0].mxu0
        %v750 = vadd.f32 0.0, %v749
        %v751 = vpop.f32.mrb[0].mxu0
        %752 = vmatprep.mubr.f32.mxu0 0.0
        %753 = vmatmul.mubr.f32.gmra.mrb[0].mxu0 %v616
        %v754 = vpop.f32.mrb[0].mxu0
        %v755 = vadd.f32 0.0, %v754
        %v756 = vpop.f32.mrb[0].mxu0
        %757 = vmatprep.mubr.f32.mxu0 0.0
        %758 = vmatmul.mubr.f32.gmra.mrb[0].mxu0 %v619
        %v759 = vpop.f32.mrb[0].mxu0
        %v760 = vadd.f32 0.0, %v759
        %v761 = vpop.f32.mrb[0].mxu0
        %762 = vmatprep.mubr.f32.mxu0 0.0
        %763 = vmatmul.mubr.f32.gmra.mrb[0].mxu0 %v621
        %v764 = vpop.f32.mrb[0].mxu0
        %v765 = vadd.f32 0.0, %v764
        %v766 = vpop.f32.mrb[0].mxu0
        %767 = vmatprep.mubr.f32.mxu0 0.0
        %768 = vmatmul.mubr.f32.gmra.mrb[0].mxu0 %v624
        %v769 = vpop.f32.mrb[0].mxu0
        %v770 = vadd.f32 0.0, %v769
        %v771 = vpop.f32.mrb[0].mxu0
        %772 = vmatprep.mubr.f32.mxu0 0.0
        %773 = vmatmul.mubr.f32.gmra.mrb[0].mxu0 %v626
        %v774 = vpop.f32.mrb[0].mxu0
        %v775 = vadd.f32 0.0, %v774
        %v776 = vpop.f32.mrb[0].mxu0
        %777 = vmatprep.mubr.f32.mxu0 0.0
        %778 = vmatmul.mubr.f32.gmra.mrb[0].mxu0 %v629
        %v779 = vpop.f32.mrb[0].mxu0
        %v780 = vadd.f32 0.0, %v779
        %v781 = vpop.f32.mrb[0].mxu0
        %782 = vmatprep.mubr.f32.mxu0 0.0
        %783 = vmatmul.mubr.f32.gmra.mrb[0].mxu0 %v631
        %v784 = vpop.f32.mrb[0].mxu0
        %v785 = vadd.f32 0.0, %v784
        %v786 = vpop.f32.mrb[0].mxu0
        %787 = vmatprep.mubr.f32.mxu0 0.0
        %788 = vmatmul.mubr.f32.gmra.mrb[0].mxu0 %v634
        %v789 = vpop.f32.mrb[0].mxu0
        %v790 = vadd.f32 0.0, %v789
        %v791 = vpop.f32.mrb[0].mxu0
        %792 = vmatprep.mubr.f32.mxu0 0.0
        %793 = vmatmul.mubr.f32.gmra.mrb[0].mxu0 %v636
        %v794 = vpop.f32.mrb[0].mxu0
        %v795 = vadd.f32 0.0, %v794
        %v796 = vpop.f32.mrb[0].mxu0
        %797 = vdwg.mxu0
        %v798 = vld [vmem:[#allocation2] sm:$0xff]
        %v799 = vld [vmem:[#allocation2 + $0x8] sm:$0xff]
        %v800 = vld [vmem:[#allocation2 + $0x10] sm:$0xff]
        %v801 = vld [vmem:[#allocation2 + $0x18] sm:$0xff]
        %v802 = vld [vmem:[#allocation2 + $0x20] sm:$0xff]
        %v803 = vld [vmem:[#allocation2 + $0x28] sm:$0xff]
        %v804 = vld [vmem:[#allocation2 + $0x30] sm:$0xff]
        %v805 = vld [vmem:[#allocation2 + $0x38] sm:$0xff]
        %v806 = vld [vmem:[#allocation2 + $0x40] sm:$0xff]
        %v807 = vld [vmem:[#allocation2 + $0x48] sm:$0xff]
        %v808 = vld [vmem:[#allocation2 + $0x50] sm:$0xff]
        %v809 = vld [vmem:[#allocation2 + $0x58] sm:$0xff]
        %v810 = vld [vmem:[#allocation2 + $0x60] sm:$0xff]
        %v811 = vld [vmem:[#allocation2 + $0x68] sm:$0xff]
        %v812 = vld [vmem:[#allocation2 + $0x70] sm:$0xff]
        %v813 = vld [vmem:[#allocation2 + $0x78] sm:$0xff]
        %v814 = vadd.f32 %v798, %v720
        %v815 = vadd.f32 %v799, %v725
        %v816 = vadd.f32 %v800, %v730
        %v817 = vadd.f32 %v801, %v735
        %v818 = vadd.f32 %v802, %v740
        %v819 = vadd.f32 %v803, %v745
        %v820 = vadd.f32 %v804, %v750
        %v821 = vadd.f32 %v805, %v755
        %v822 = vadd.f32 %v806, %v760
        %v823 = vadd.f32 %v807, %v765
        %v824 = vadd.f32 %v808, %v770
        %v825 = vadd.f32 %v809, %v775
        %v826 = vadd.f32 %v810, %v780
        %v827 = vadd.f32 %v811, %v785
        %v828 = vadd.f32 %v812, %v790
        %v829 = vadd.f32 %v813, %v795
        %830 = vst [vmem:[#allocation2] sm:$0xff] %v814
        %831 = vst [vmem:[#allocation2 + $0x8] sm:$0xff] %v815
        %832 = vst [vmem:[#allocation2 + $0x10] sm:$0xff] %v816
        %833 = vst [vmem:[#allocation2 + $0x18] sm:$0xff] %v817
        %834 = vst [vmem:[#allocation2 + $0x20] sm:$0xff] %v818
        %835 = vst [vmem:[#allocation2 + $0x28] sm:$0xff] %v819
        %836 = vst [vmem:[#allocation2 + $0x30] sm:$0xff] %v820
        %837 = vst [vmem:[#allocation2 + $0x38] sm:$0xff] %v821
        %838 = vst [vmem:[#allocation2 + $0x40] sm:$0xff] %v822
        %839 = vst [vmem:[#allocation2 + $0x48] sm:$0xff] %v823
        %840 = vst [vmem:[#allocation2 + $0x50] sm:$0xff] %v824
        %841 = vst [vmem:[#allocation2 + $0x58] sm:$0xff] %v825
        %842 = vst [vmem:[#allocation2 + $0x60] sm:$0xff] %v826
        %843 = vst [vmem:[#allocation2 + $0x68] sm:$0xff] %v827
        %844 = vst [vmem:[#allocation2 + $0x70] sm:$0xff] %v828
        %845 = vst [vmem:[#allocation2 + $0x78] sm:$0xff] %v829
        %s846 = scalar_lea.vmem %s343, 256
        %v847 = vld [vmem:[%s846] sm:$0xff]
        %v848 = vld [vmem:[%s846 + $0x8] sm:$0xff]
        %v849 = vld [vmem:[%s846 + $0x10] sm:$0xff]
        %v850 = vld [vmem:[%s846 + $0x18] sm:$0xff]
        %v851 = vld [vmem:[%s846 + $0x20] sm:$0xff]
        %v852 = vld [vmem:[%s846 + $0x28] sm:$0xff]
        %v853 = vld [vmem:[%s846 + $0x30] sm:$0xff]
        %v854 = vld [vmem:[%s846 + $0x38] sm:$0xff]
        %v855 = vld [vmem:[%s846 + $0x40] sm:$0xff]
        %v856 = vld [vmem:[%s846 + $0x48] sm:$0xff]
        %v857 = vld [vmem:[%s846 + $0x50] sm:$0xff]
        %v858 = vld [vmem:[%s846 + $0x58] sm:$0xff]
        %v859 = vld [vmem:[%s846 + $0x60] sm:$0xff]
        %v860 = vld [vmem:[%s846 + $0x68] sm:$0xff]
        %v861 = vld [vmem:[%s846 + $0x70] sm:$0xff]
        %v862 = vld [vmem:[%s846 + $0x78] sm:$0xff]
        %vm863 = vcmask 1045504
        %v864 = vrot.slane %v348, 2
        %v865 = vrot.slane %v349, 2
        %v866 = vsel %vm863, %v864, %v865
        %v867 = vrot.slane %v350, 2
        %v868 = vsel %vm863, %v865, %v867
        %v869 = vrot.slane %v351, 2
        %v870 = vrot.slane %v352, 2
        %v871 = vsel %vm863, %v869, %v870
        %v872 = vrot.slane %v353, 2
        %v873 = vsel %vm863, %v870, %v872
        %v874 = vrot.slane %v354, 2
        %v875 = vrot.slane %v355, 2
        %v876 = vsel %vm863, %v874, %v875
        %v877 = vrot.slane %v356, 2
        %v878 = vsel %vm863, %v875, %v877
        %v879 = vrot.slane %v357, 2
        %v880 = vrot.slane %v358, 2
        %v881 = vsel %vm863, %v879, %v880
        %v882 = vrot.slane %v359, 2
        %v883 = vsel %vm863, %v880, %v882
        %v884 = vrot.slane %v360, 2
        %v885 = vrot.slane %v361, 2
        %v886 = vsel %vm863, %v884, %v885
        %v887 = vrot.slane %v362, 2
        %v888 = vsel %vm863, %v885, %v887
        %v889 = vrot.slane %v363, 2
        %v890 = vrot.slane %v364, 2
        %v891 = vsel %vm863, %v889, %v890
        %v892 = vrot.slane %v365, 2
        %v893 = vsel %vm863, %v890, %v892
        %v894 = vrot.slane %v366, 2
        %v895 = vrot.slane %v367, 2
        %v896 = vsel %vm863, %v894, %v895
        %v897 = vrot.slane %v368, 2
        %v898 = vsel %vm863, %v895, %v897
        %v899 = vrot.slane %v369, 2
        %v900 = vrot.slane %v370, 2
        %v901 = vsel %vm863, %v899, %v900
        %v902 = vrot.slane %v371, 2
        %v903 = vsel %vm863, %v900, %v902
        %920 = vmatprep.subr.mxu0 0.0
        %921 = vmatpush1.msra.mxu0 %v847
        %922 = vmatprep.subr.mxu0 0.0
        %923 = vmatpush1.msra.mxu0 %v848
        %924 = vmatprep.subr.mxu0 0.0
        %925 = vmatpush1.msra.mxu0 %v849
        %926 = vmatprep.subr.mxu0 0.0
        %927 = vmatpush1.msra.mxu0 %v850
        %928 = vmatprep.subr.mxu0 0.0
        %929 = vmatpush1.msra.mxu0 %v851
        %930 = vmatprep.subr.mxu0 0.0
        %931 = vmatpush1.msra.mxu0 %v852
        %932 = vmatprep.subr.mxu0 0.0
        %933 = vmatpush1.msra.mxu0 %v853
        %934 = vmatprep.subr.mxu0 0.0
        %935 = vmatpush1.msra.mxu0 %v854
        %936 = vmatprep.subr.mxu0 0.0
        %937 = vmatpush1.msra.mxu0 %v855
        %938 = vmatprep.subr.mxu0 0.0
        %939 = vmatpush1.msra.mxu0 %v856
        %940 = vmatprep.subr.mxu0 0.0
        %941 = vmatpush1.msra.mxu0 %v857
        %942 = vmatprep.subr.mxu0 0.0
        %943 = vmatpush1.msra.mxu0 %v858
        %944 = vmatprep.subr.mxu0 0.0
        %945 = vmatpush1.msra.mxu0 %v859
        %946 = vmatprep.subr.mxu0 0.0
        %947 = vmatpush1.msra.mxu0 %v860
        %948 = vmatprep.subr.mxu0 0.0
        %949 = vmatpush1.msra.mxu0 %v861
        %950 = vmatprep.subr.mxu0 0.0
        %951 = vmatpush1.msra.mxu0 %v862
        %952 = vmatprep.subr.mxu0 0.0
        %953 = vmatpush1.msra.mxu0 0.0
        %954 = vmatprep.subr.mxu0 0.0
        %955 = vmatpush1.msra.mxu0 0.0
        %956 = vmatprep.subr.mxu0 0.0
        %957 = vmatpush1.msra.mxu0 0.0
        %958 = vmatprep.subr.mxu0 0.0
        %959 = vmatpush1.msra.mxu0 0.0
        %960 = vmatprep.subr.mxu0 0.0
        %961 = vmatpush1.msra.mxu0 0.0
        %962 = vmatprep.subr.mxu0 0.0
        %963 = vmatpush1.msra.mxu0 0.0
        %964 = vmatprep.subr.mxu0 0.0
        %965 = vmatpush1.msra.mxu0 0.0
        %966 = vmatprep.subr.mxu0 0.0
        %967 = vmatpush1.msra.mxu0 0.0
        %968 = vmatprep.subr.mxu0 0.0
        %969 = vmatpush1.msra.mxu0 0.0
        %970 = vmatprep.subr.mxu0 0.0
        %971 = vmatpush1.msra.mxu0 0.0
        %972 = vmatprep.subr.mxu0 0.0
        %973 = vmatpush1.msra.mxu0 0.0
        %974 = vmatprep.subr.mxu0 0.0
        %975 = vmatpush1.msra.mxu0 0.0
        %976 = vmatprep.subr.mxu0 0.0
        %977 = vmatpush1.msra.mxu0 0.0
        %978 = vmatprep.subr.mxu0 0.0
        %979 = vmatpush1.msra.mxu0 0.0
        %980 = vmatprep.subr.mxu0 0.0
        %981 = vmatpush1.msra.mxu0 0.0
        %982 = vmatprep.subr.mxu0 0.0
        %983 = vmatpush1.msra.mxu0 0.0
        %984 = vmatprep.mubr.f32.mxu0 0.0
        %985 = vmatmul.mubr.f32.gmra.mrb[0].mxu0 %v866
        %v986 = vpop.f32.mrb[0].mxu0
        %v987 = vadd.f32 0.0, %v986
        %v988 = vpop.f32.mrb[0].mxu0
        %989 = vmatprep.mubr.f32.mxu0 0.0
        %990 = vmatmul.mubr.f32.gmra.mrb[0].mxu0 %v868
        %v991 = vpop.f32.mrb[0].mxu0
        %v992 = vadd.f32 0.0, %v991
        %v993 = vpop.f32.mrb[0].mxu0
        %994 = vmatprep.mubr.f32.mxu0 0.0
        %995 = vmatmul.mubr.f32.gmra.mrb[0].mxu0 %v871
        %v996 = vpop.f32.mrb[0].mxu0
        %v997 = vadd.f32 0.0, %v996
        %v998 = vpop.f32.mrb[0].mxu0
        %999 = vmatprep.mubr.f32.mxu0 0.0
        %1000 = vmatmul.mubr.f32.gmra.mrb[0].mxu0 %v873
        %v1001 = vpop.f32.mrb[0].mxu0
        %v1002 = vadd.f32 0.0, %v1001
        %v1003 = vpop.f32.mrb[0].mxu0
        %1004 = vmatprep.mubr.f32.mxu0 0.0
        %1005 = vmatmul.mubr.f32.gmra.mrb[0].mxu0 %v876
        %v1006 = vpop.f32.mrb[0].mxu0
        %v1007 = vadd.f32 0.0, %v1006
        %v1008 = vpop.f32.mrb[0].mxu0
        %1009 = vmatprep.mubr.f32.mxu0 0.0
        %1010 = vmatmul.mubr.f32.gmra.mrb[0].mxu0 %v878
        %v1011 = vpop.f32.mrb[0].mxu0
        %v1012 = vadd.f32 0.0, %v1011
        %v1013 = vpop.f32.mrb[0].mxu0
        %1014 = vmatprep.mubr.f32.mxu0 0.0
        %1015 = vmatmul.mubr.f32.gmra.mrb[0].mxu0 %v881
        %v1016 = vpop.f32.mrb[0].mxu0
        %v1017 = vadd.f32 0.0, %v1016
        %v1018 = vpop.f32.mrb[0].mxu0
        %1019 = vmatprep.mubr.f32.mxu0 0.0
        %1020 = vmatmul.mubr.f32.gmra.mrb[0].mxu0 %v883
        %v1021 = vpop.f32.mrb[0].mxu0
        %v1022 = vadd.f32 0.0, %v1021
        %v1023 = vpop.f32.mrb[0].mxu0
        %1024 = vmatprep.mubr.f32.mxu0 0.0
        %1025 = vmatmul.mubr.f32.gmra.mrb[0].mxu0 %v886
        %v1026 = vpop.f32.mrb[0].mxu0
        %v1027 = vadd.f32 0.0, %v1026
        %v1028 = vpop.f32.mrb[0].mxu0
        %1029 = vmatprep.mubr.f32.mxu0 0.0
        %1030 = vmatmul.mubr.f32.gmra.mrb[0].mxu0 %v888
        %v1031 = vpop.f32.mrb[0].mxu0
        %v1032 = vadd.f32 0.0, %v1031
        %v1033 = vpop.f32.mrb[0].mxu0
        %1034 = vmatprep.mubr.f32.mxu0 0.0
        %1035 = vmatmul.mubr.f32.gmra.mrb[0].mxu0 %v891
        %v1036 = vpop.f32.mrb[0].mxu0
        %v1037 = vadd.f32 0.0, %v1036
        %v1038 = vpop.f32.mrb[0].mxu0
        %1039 = vmatprep.mubr.f32.mxu0 0.0
        %1040 = vmatmul.mubr.f32.gmra.mrb[0].mxu0 %v893
        %v1041 = vpop.f32.mrb[0].mxu0
        %v1042 = vadd.f32 0.0, %v1041
        %v1043 = vpop.f32.mrb[0].mxu0
        %1044 = vmatprep.mubr.f32.mxu0 0.0
        %1045 = vmatmul.mubr.f32.gmra.mrb[0].mxu0 %v896
        %v1046 = vpop.f32.mrb[0].mxu0
        %v1047 = vadd.f32 0.0, %v1046
        %v1048 = vpop.f32.mrb[0].mxu0
        %1049 = vmatprep.mubr.f32.mxu0 0.0
        %1050 = vmatmul.mubr.f32.gmra.mrb[0].mxu0 %v898
        %v1051 = vpop.f32.mrb[0].mxu0
        %v1052 = vadd.f32 0.0, %v1051
        %v1053 = vpop.f32.mrb[0].mxu0
        %1054 = vmatprep.mubr.f32.mxu0 0.0
        %1055 = vmatmul.mubr.f32.gmra.mrb[0].mxu0 %v901
        %v1056 = vpop.f32.mrb[0].mxu0
        %v1057 = vadd.f32 0.0, %v1056
        %v1058 = vpop.f32.mrb[0].mxu0
        %1059 = vmatprep.mubr.f32.mxu0 0.0
        %1060 = vmatmul.mubr.f32.gmra.mrb[0].mxu0 %v903
        %v1061 = vpop.f32.mrb[0].mxu0
        %v1062 = vadd.f32 0.0, %v1061
        %v1063 = vpop.f32.mrb[0].mxu0
        %1064 = vdwg.mxu0
        %v1065 = vld [vmem:[#allocation2] sm:$0xff]
        %v1066 = vld [vmem:[#allocation2 + $0x8] sm:$0xff]
        %v1067 = vld [vmem:[#allocation2 + $0x10] sm:$0xff]
        %v1068 = vld [vmem:[#allocation2 + $0x18] sm:$0xff]
        %v1069 = vld [vmem:[#allocation2 + $0x20] sm:$0xff]
        %v1070 = vld [vmem:[#allocation2 + $0x28] sm:$0xff]
        %v1071 = vld [vmem:[#allocation2 + $0x30] sm:$0xff]
        %v1072 = vld [vmem:[#allocation2 + $0x38] sm:$0xff]
        %v1073 = vld [vmem:[#allocation2 + $0x40] sm:$0xff]
        %v1074 = vld [vmem:[#allocation2 + $0x48] sm:$0xff]
        %v1075 = vld [vmem:[#allocation2 + $0x50] sm:$0xff]
        %v1076 = vld [vmem:[#allocation2 + $0x58] sm:$0xff]
        %v1077 = vld [vmem:[#allocation2 + $0x60] sm:$0xff]
        %v1078 = vld [vmem:[#allocation2 + $0x68] sm:$0xff]
        %v1079 = vld [vmem:[#allocation2 + $0x70] sm:$0xff]
        %v1080 = vld [vmem:[#allocation2 + $0x78] sm:$0xff]
        %v1081 = vadd.f32 %v1065, %v987
        %v1082 = vadd.f32 %v1066, %v992
        %v1083 = vadd.f32 %v1067, %v997
        %v1084 = vadd.f32 %v1068, %v1002
        %v1085 = vadd.f32 %v1069, %v1007
        %v1086 = vadd.f32 %v1070, %v1012
        %v1087 = vadd.f32 %v1071, %v1017
        %v1088 = vadd.f32 %v1072, %v1022
        %v1089 = vadd.f32 %v1073, %v1027
        %v1090 = vadd.f32 %v1074, %v1032
        %v1091 = vadd.f32 %v1075, %v1037
        %v1092 = vadd.f32 %v1076, %v1042
        %v1093 = vadd.f32 %v1077, %v1047
        %v1094 = vadd.f32 %v1078, %v1052
        %v1095 = vadd.f32 %v1079, %v1057
        %v1096 = vadd.f32 %v1080, %v1062
        %1097 = vst [vmem:[#allocation2] sm:$0xff] %v1081
        %1098 = vst [vmem:[#allocation2 + $0x8] sm:$0xff] %v1082
        %1099 = vst [vmem:[#allocation2 + $0x10] sm:$0xff] %v1083
        %1100 = vst [vmem:[#allocation2 + $0x18] sm:$0xff] %v1084
        %1101 = vst [vmem:[#allocation2 + $0x20] sm:$0xff] %v1085
        %1102 = vst [vmem:[#allocation2 + $0x28] sm:$0xff] %v1086
        %1103 = vst [vmem:[#allocation2 + $0x30] sm:$0xff] %v1087
        %1104 = vst [vmem:[#allocation2 + $0x38] sm:$0xff] %v1088
        %1105 = vst [vmem:[#allocation2 + $0x40] sm:$0xff] %v1089
        %1106 = vst [vmem:[#allocation2 + $0x48] sm:$0xff] %v1090
        %1107 = vst [vmem:[#allocation2 + $0x50] sm:$0xff] %v1091
        %1108 = vst [vmem:[#allocation2 + $0x58] sm:$0xff] %v1092
        %1109 = vst [vmem:[#allocation2 + $0x60] sm:$0xff] %v1093
        %1110 = vst [vmem:[#allocation2 + $0x68] sm:$0xff] %v1094
        %1111 = vst [vmem:[#allocation2 + $0x70] sm:$0xff] %v1095
        %1112 = vst [vmem:[#allocation2 + $0x78] sm:$0xff] %v1096
        %s1113 = scalar_lea.vmem %s343, 384
        %v1114 = vld [vmem:[%s1113] sm:$0xff]
        %v1115 = vld [vmem:[%s1113 + $0x8] sm:$0xff]
        %v1116 = vld [vmem:[%s1113 + $0x10] sm:$0xff]
        %v1117 = vld [vmem:[%s1113 + $0x18] sm:$0xff]
        %v1118 = vld [vmem:[%s1113 + $0x20] sm:$0xff]
        %v1119 = vld [vmem:[%s1113 + $0x28] sm:$0xff]
        %v1120 = vld [vmem:[%s1113 + $0x30] sm:$0xff]
        %v1121 = vld [vmem:[%s1113 + $0x38] sm:$0xff]
        %v1122 = vld [vmem:[%s1113 + $0x40] sm:$0xff]
        %v1123 = vld [vmem:[%s1113 + $0x48] sm:$0xff]
        %v1124 = vld [vmem:[%s1113 + $0x50] sm:$0xff]
        %v1125 = vld [vmem:[%s1113 + $0x58] sm:$0xff]
        %v1126 = vld [vmem:[%s1113 + $0x60] sm:$0xff]
        %v1127 = vld [vmem:[%s1113 + $0x68] sm:$0xff]
        %v1128 = vld [vmem:[%s1113 + $0x70] sm:$0xff]
        %v1129 = vld [vmem:[%s1113 + $0x78] sm:$0xff]
        %1130 = vmatprep.subr.mxu0 0.0
        %1131 = vmatpush1.msra.mxu0 %v1114
        %1132 = vmatprep.subr.mxu0 0.0
        %1133 = vmatpush1.msra.mxu0 %v1115
        %1134 = vmatprep.subr.mxu0 0.0
        %1135 = vmatpush1.msra.mxu0 %v1116
        %1136 = vmatprep.subr.mxu0 0.0
        %1137 = vmatpush1.msra.mxu0 %v1117
        %1138 = vmatprep.subr.mxu0 0.0
        %1139 = vmatpush1.msra.mxu0 %v1118
        %1140 = vmatprep.subr.mxu0 0.0
        %1141 = vmatpush1.msra.mxu0 %v1119
        %1142 = vmatprep.subr.mxu0 0.0
        %1143 = vmatpush1.msra.mxu0 %v1120
        %1144 = vmatprep.subr.mxu0 0.0
        %1145 = vmatpush1.msra.mxu0 %v1121
        %1146 = vmatprep.subr.mxu0 0.0
        %1147 = vmatpush1.msra.mxu0 %v1122
        %1148 = vmatprep.subr.mxu0 0.0
        %1149 = vmatpush1.msra.mxu0 %v1123
        %1150 = vmatprep.subr.mxu0 0.0
        %1151 = vmatpush1.msra.mxu0 %v1124
        %1152 = vmatprep.subr.mxu0 0.0
        %1153 = vmatpush1.msra.mxu0 %v1125
        %1154 = vmatprep.subr.mxu0 0.0
        %1155 = vmatpush1.msra.mxu0 %v1126
        %1156 = vmatprep.subr.mxu0 0.0
        %1157 = vmatpush1.msra.mxu0 %v1127
        %1158 = vmatprep.subr.mxu0 0.0
        %1159 = vmatpush1.msra.mxu0 %v1128
        %1160 = vmatprep.subr.mxu0 0.0
        %1161 = vmatpush1.msra.mxu0 %v1129
        %1162 = vmatprep.subr.mxu0 0.0
        %1163 = vmatpush1.msra.mxu0 0.0
        %1164 = vmatprep.subr.mxu0 0.0
        %1165 = vmatpush1.msra.mxu0 0.0
        %1166 = vmatprep.subr.mxu0 0.0
        %1167 = vmatpush1.msra.mxu0 0.0
        %1168 = vmatprep.subr.mxu0 0.0
        %1169 = vmatpush1.msra.mxu0 0.0
        %1170 = vmatprep.subr.mxu0 0.0
        %1171 = vmatpush1.msra.mxu0 0.0
        %1172 = vmatprep.subr.mxu0 0.0
        %1173 = vmatpush1.msra.mxu0 0.0
        %1174 = vmatprep.subr.mxu0 0.0
        %1175 = vmatpush1.msra.mxu0 0.0
        %1176 = vmatprep.subr.mxu0 0.0
        %1177 = vmatpush1.msra.mxu0 0.0
        %1178 = vmatprep.subr.mxu0 0.0
        %1179 = vmatpush1.msra.mxu0 0.0
        %1180 = vmatprep.subr.mxu0 0.0
        %1181 = vmatpush1.msra.mxu0 0.0
        %1182 = vmatprep.subr.mxu0 0.0
        %1183 = vmatpush1.msra.mxu0 0.0
        %1184 = vmatprep.subr.mxu0 0.0
        %1185 = vmatpush1.msra.mxu0 0.0
        %1186 = vmatprep.subr.mxu0 0.0
        %1187 = vmatpush1.msra.mxu0 0.0
        %1188 = vmatprep.subr.mxu0 0.0
        %1189 = vmatpush1.msra.mxu0 0.0
        %1190 = vmatprep.subr.mxu0 0.0
        %1191 = vmatpush1.msra.mxu0 0.0
        %1192 = vmatprep.subr.mxu0 0.0
        %1193 = vmatpush1.msra.mxu0 0.0
        %1194 = vmatprep.mubr.f32.mxu0 0.0
        %1195 = vmatmul.mubr.f32.gmra.mrb[0].mxu0 %v351
        %v1196 = vpop.f32.mrb[0].mxu0
        %v1197 = vadd.f32 0.0, %v1196
        %v1198 = vpop.f32.mrb[0].mxu0
        %1199 = vmatprep.mubr.f32.mxu0 0.0
        %1200 = vmatmul.mubr.f32.gmra.mrb[0].mxu0 %v352
        %v1201 = vpop.f32.mrb[0].mxu0
        %v1202 = vadd.f32 0.0, %v1201
        %v1203 = vpop.f32.mrb[0].mxu0
        %1204 = vmatprep.mubr.f32.mxu0 0.0
        %1205 = vmatmul.mubr.f32.gmra.mrb[0].mxu0 %v354
        %v1206 = vpop.f32.mrb[0].mxu0
        %v1207 = vadd.f32 0.0, %v1206
        %v1208 = vpop.f32.mrb[0].mxu0
        %1209 = vmatprep.mubr.f32.mxu0 0.0
        %1210 = vmatmul.mubr.f32.gmra.mrb[0].mxu0 %v355
        %v1211 = vpop.f32.mrb[0].mxu0
        %v1212 = vadd.f32 0.0, %v1211
        %v1213 = vpop.f32.mrb[0].mxu0
        %1214 = vmatprep.mubr.f32.mxu0 0.0
        %1215 = vmatmul.mubr.f32.gmra.mrb[0].mxu0 %v357
        %v1216 = vpop.f32.mrb[0].mxu0
        %v1217 = vadd.f32 0.0, %v1216
        %v1218 = vpop.f32.mrb[0].mxu0
        %1219 = vmatprep.mubr.f32.mxu0 0.0
        %1220 = vmatmul.mubr.f32.gmra.mrb[0].mxu0 %v358
        %v1221 = vpop.f32.mrb[0].mxu0
        %v1222 = vadd.f32 0.0, %v1221
        %v1223 = vpop.f32.mrb[0].mxu0
        %1224 = vmatprep.mubr.f32.mxu0 0.0
        %1225 = vmatmul.mubr.f32.gmra.mrb[0].mxu0 %v360
        %v1226 = vpop.f32.mrb[0].mxu0
        %v1227 = vadd.f32 0.0, %v1226
        %v1228 = vpop.f32.mrb[0].mxu0
        %1229 = vmatprep.mubr.f32.mxu0 0.0
        %1230 = vmatmul.mubr.f32.gmra.mrb[0].mxu0 %v361
        %v1231 = vpop.f32.mrb[0].mxu0
        %v1232 = vadd.f32 0.0, %v1231
        %v1233 = vpop.f32.mrb[0].mxu0
        %1234 = vmatprep.mubr.f32.mxu0 0.0
        %1235 = vmatmul.mubr.f32.gmra.mrb[0].mxu0 %v363
        %v1236 = vpop.f32.mrb[0].mxu0
        %v1237 = vadd.f32 0.0, %v1236
        %v1238 = vpop.f32.mrb[0].mxu0
        %1239 = vmatprep.mubr.f32.mxu0 0.0
        %1240 = vmatmul.mubr.f32.gmra.mrb[0].mxu0 %v364
        %v1241 = vpop.f32.mrb[0].mxu0
        %v1242 = vadd.f32 0.0, %v1241
        %v1243 = vpop.f32.mrb[0].mxu0
        %1244 = vmatprep.mubr.f32.mxu0 0.0
        %1245 = vmatmul.mubr.f32.gmra.mrb[0].mxu0 %v366
        %v1246 = vpop.f32.mrb[0].mxu0
        %v1247 = vadd.f32 0.0, %v1246
        %v1248 = vpop.f32.mrb[0].mxu0
        %1249 = vmatprep.mubr.f32.mxu0 0.0
        %1250 = vmatmul.mubr.f32.gmra.mrb[0].mxu0 %v367
        %v1251 = vpop.f32.mrb[0].mxu0
        %v1252 = vadd.f32 0.0, %v1251
        %v1253 = vpop.f32.mrb[0].mxu0
        %1254 = vmatprep.mubr.f32.mxu0 0.0
        %1255 = vmatmul.mubr.f32.gmra.mrb[0].mxu0 %v369
        %v1256 = vpop.f32.mrb[0].mxu0
        %v1257 = vadd.f32 0.0, %v1256
        %v1258 = vpop.f32.mrb[0].mxu0
        %1259 = vmatprep.mubr.f32.mxu0 0.0
        %1260 = vmatmul.mubr.f32.gmra.mrb[0].mxu0 %v370
        %v1261 = vpop.f32.mrb[0].mxu0
        %v1262 = vadd.f32 0.0, %v1261
        %v1263 = vpop.f32.mrb[0].mxu0
        %1264 = vdwg.mxu0
        %v1265 = vld [vmem:[#allocation2] sm:$0xff]
        %v1266 = vld [vmem:[#allocation2 + $0x8] sm:$0xff]
        %v1267 = vld [vmem:[#allocation2 + $0x10] sm:$0xff]
        %v1268 = vld [vmem:[#allocation2 + $0x18] sm:$0xff]
        %v1269 = vld [vmem:[#allocation2 + $0x20] sm:$0xff]
        %v1270 = vld [vmem:[#allocation2 + $0x28] sm:$0xff]
        %v1271 = vld [vmem:[#allocation2 + $0x30] sm:$0xff]
        %v1272 = vld [vmem:[#allocation2 + $0x38] sm:$0xff]
        %v1273 = vld [vmem:[#allocation2 + $0x40] sm:$0xff]
        %v1274 = vld [vmem:[#allocation2 + $0x48] sm:$0xff]
        %v1275 = vld [vmem:[#allocation2 + $0x50] sm:$0xff]
        %v1276 = vld [vmem:[#allocation2 + $0x58] sm:$0xff]
        %v1277 = vld [vmem:[#allocation2 + $0x60] sm:$0xff]
        %v1278 = vld [vmem:[#allocation2 + $0x68] sm:$0xff]
        %v1279 = vadd.f32 %v1265, %v1197
        %v1280 = vadd.f32 %v1266, %v1202
        %v1281 = vadd.f32 %v1267, %v1207
        %v1282 = vadd.f32 %v1268, %v1212
        %v1283 = vadd.f32 %v1269, %v1217
        %v1284 = vadd.f32 %v1270, %v1222
        %v1285 = vadd.f32 %v1271, %v1227
        %v1286 = vadd.f32 %v1272, %v1232
        %v1287 = vadd.f32 %v1273, %v1237
        %v1288 = vadd.f32 %v1274, %v1242
        %v1289 = vadd.f32 %v1275, %v1247
        %v1290 = vadd.f32 %v1276, %v1252
        %v1291 = vadd.f32 %v1277, %v1257
        %v1292 = vadd.f32 %v1278, %v1262
        %1293 = vst [vmem:[#allocation2] sm:$0xff] %v1279
        %1294 = vst [vmem:[#allocation2 + $0x8] sm:$0xff] %v1280
        %1295 = vst [vmem:[#allocation2 + $0x10] sm:$0xff] %v1281
        %1296 = vst [vmem:[#allocation2 + $0x18] sm:$0xff] %v1282
        %1297 = vst [vmem:[#allocation2 + $0x20] sm:$0xff] %v1283
        %1298 = vst [vmem:[#allocation2 + $0x28] sm:$0xff] %v1284
        %1299 = vst [vmem:[#allocation2 + $0x30] sm:$0xff] %v1285
        %1300 = vst [vmem:[#allocation2 + $0x38] sm:$0xff] %v1286
        %1301 = vst [vmem:[#allocation2 + $0x40] sm:$0xff] %v1287
        %1302 = vst [vmem:[#allocation2 + $0x48] sm:$0xff] %v1288
        %1303 = vst [vmem:[#allocation2 + $0x50] sm:$0xff] %v1289
        %1304 = vst [vmem:[#allocation2 + $0x58] sm:$0xff] %v1290
        %1305 = vst [vmem:[#allocation2 + $0x60] sm:$0xff] %v1291
        %1306 = vst [vmem:[#allocation2 + $0x68] sm:$0xff] %v1292
        %1307 = vmatprep.subr.mxu0 0.0
        %1308 = vmatpush1.msra.mxu0 %v1114
        %1309 = vmatprep.subr.mxu0 0.0
        %1310 = vmatpush1.msra.mxu0 %v1115
        %1311 = vmatprep.subr.mxu0 0.0
        %1312 = vmatpush1.msra.mxu0 %v1116
        %1313 = vmatprep.subr.mxu0 0.0
        %1314 = vmatpush1.msra.mxu0 %v1117
        %1315 = vmatprep.subr.mxu0 0.0
        %1316 = vmatpush1.msra.mxu0 %v1118
        %1317 = vmatprep.subr.mxu0 0.0
        %1318 = vmatpush1.msra.mxu0 %v1119
        %1319 = vmatprep.subr.mxu0 0.0
        %1320 = vmatpush1.msra.mxu0 %v1120
        %1321 = vmatprep.subr.mxu0 0.0
        %1322 = vmatpush1.msra.mxu0 %v1121
        %1323 = vmatprep.subr.mxu0 0.0
        %1324 = vmatpush1.msra.mxu0 %v1122
        %1325 = vmatprep.subr.mxu0 0.0
        %1326 = vmatpush1.msra.mxu0 %v1123
        %1327 = vmatprep.subr.mxu0 0.0
        %1328 = vmatpush1.msra.mxu0 %v1124
        %1329 = vmatprep.subr.mxu0 0.0
        %1330 = vmatpush1.msra.mxu0 %v1125
        %1331 = vmatprep.subr.mxu0 0.0
        %1332 = vmatpush1.msra.mxu0 %v1126
        %1333 = vmatprep.subr.mxu0 0.0
        %1334 = vmatpush1.msra.mxu0 %v1127
        %1335 = vmatprep.subr.mxu0 0.0
        %1336 = vmatpush1.msra.mxu0 %v1128
        %1337 = vmatprep.subr.mxu0 0.0
        %1338 = vmatpush1.msra.mxu0 %v1129
        %1339 = vmatprep.subr.mxu0 0.0
        %1340 = vmatpush1.msra.mxu0 0.0
        %1341 = vmatprep.subr.mxu0 0.0
        %1342 = vmatpush1.msra.mxu0 0.0
        %1343 = vmatprep.subr.mxu0 0.0
        %1344 = vmatpush1.msra.mxu0 0.0
        %1345 = vmatprep.subr.mxu0 0.0
        %1346 = vmatpush1.msra.mxu0 0.0
        %1347 = vmatprep.subr.mxu0 0.0
        %1348 = vmatpush1.msra.mxu0 0.0
        %1349 = vmatprep.subr.mxu0 0.0
        %1350 = vmatpush1.msra.mxu0 0.0
        %1351 = vmatprep.subr.mxu0 0.0
        %1352 = vmatpush1.msra.mxu0 0.0
        %1353 = vmatprep.subr.mxu0 0.0
        %1354 = vmatpush1.msra.mxu0 0.0
        %1355 = vmatprep.subr.mxu0 0.0
        %1356 = vmatpush1.msra.mxu0 0.0
        %1357 = vmatprep.subr.mxu0 0.0
        %1358 = vmatpush1.msra.mxu0 0.0
        %1359 = vmatprep.subr.mxu0 0.0
        %1360 = vmatpush1.msra.mxu0 0.0
        %1361 = vmatprep.subr.mxu0 0.0
        %1362 = vmatpush1.msra.mxu0 0.0
        %1363 = vmatprep.subr.mxu0 0.0
        %1364 = vmatpush1.msra.mxu0 0.0
        %1365 = vmatprep.subr.mxu0 0.0
        %1366 = vmatpush1.msra.mxu0 0.0
        %1367 = vmatprep.subr.mxu0 0.0
        %1368 = vmatpush1.msra.mxu0 0.0
        %1369 = vmatprep.subr.mxu0 0.0
        %1370 = vmatpush1.msra.mxu0 0.0
        %1371 = vmatprep.mubr.f32.mxu0 0.0
        %1372 = vmatmul.mubr.f32.gmra.mrb[0].mxu0 %v372
        %v1373 = vpop.f32.mrb[0].mxu0
        %v1374 = vadd.f32 0.0, %v1373
        %v1375 = vpop.f32.mrb[0].mxu0
        %1376 = vmatprep.mubr.f32.mxu0 0.0
        %1377 = vmatmul.mubr.f32.gmra.mrb[0].mxu0 %v373
        %v1378 = vpop.f32.mrb[0].mxu0
        %v1379 = vadd.f32 0.0, %v1378
        %v1380 = vpop.f32.mrb[0].mxu0
        %1381 = vdwg.mxu0
        %s1382 = scalar_lea.vmem [#allocation2], 112
        %v1383 = vld [vmem:[%s1382] sm:$0xff]
        %v1384 = vld [vmem:[%s1382 + $0x8] sm:$0xff]
        %v1385 = vadd.f32 %v1383, %v1374
        %v1386 = vadd.f32 %v1384, %v1379
        %1387 = vst [vmem:[%s1382] sm:$0xff] %v1385
        %1388 = vst [vmem:[%s1382 + $0x8] sm:$0xff] %v1386
        %s1389 = scalar_lea.vmem %s343, 512
        %v1390 = vld [vmem:[%s1389] sm:$0xff]
        %v1391 = vld [vmem:[%s1389 + $0x8] sm:$0xff]
        %v1392 = vld [vmem:[%s1389 + $0x10] sm:$0xff]
        %v1393 = vld [vmem:[%s1389 + $0x18] sm:$0xff]
        %v1394 = vld [vmem:[%s1389 + $0x20] sm:$0xff]
        %v1395 = vld [vmem:[%s1389 + $0x28] sm:$0xff]
        %v1396 = vld [vmem:[%s1389 + $0x30] sm:$0xff]
        %v1397 = vld [vmem:[%s1389 + $0x38] sm:$0xff]
        %v1398 = vld [vmem:[%s1389 + $0x40] sm:$0xff]
        %v1399 = vld [vmem:[%s1389 + $0x48] sm:$0xff]
        %v1400 = vld [vmem:[%s1389 + $0x50] sm:$0xff]
        %v1401 = vld [vmem:[%s1389 + $0x58] sm:$0xff]
        %v1402 = vld [vmem:[%s1389 + $0x60] sm:$0xff]
        %v1403 = vld [vmem:[%s1389 + $0x68] sm:$0xff]
        %v1404 = vld [vmem:[%s1389 + $0x70] sm:$0xff]
        %v1405 = vld [vmem:[%s1389 + $0x78] sm:$0xff]
        %1406 = vmatprep.subr.mxu0 0.0
        %1407 = vmatpush1.msra.mxu0 %v1390
        %1408 = vmatprep.subr.mxu0 0.0
        %1409 = vmatpush1.msra.mxu0 %v1391
        %1410 = vmatprep.subr.mxu0 0.0
        %1411 = vmatpush1.msra.mxu0 %v1392
        %1412 = vmatprep.subr.mxu0 0.0
        %1413 = vmatpush1.msra.mxu0 %v1393
        %1414 = vmatprep.subr.mxu0 0.0
        %1415 = vmatpush1.msra.mxu0 %v1394
        %1416 = vmatprep.subr.mxu0 0.0
        %1417 = vmatpush1.msra.mxu0 %v1395
        %1418 = vmatprep.subr.mxu0 0.0
        %1419 = vmatpush1.msra.mxu0 %v1396
        %1420 = vmatprep.subr.mxu0 0.0
        %1421 = vmatpush1.msra.mxu0 %v1397
        %1422 = vmatprep.subr.mxu0 0.0
        %1423 = vmatpush1.msra.mxu0 %v1398
        %1424 = vmatprep.subr.mxu0 0.0
        %1425 = vmatpush1.msra.mxu0 %v1399
        %1426 = vmatprep.subr.mxu0 0.0
        %1427 = vmatpush1.msra.mxu0 %v1400
        %1428 = vmatprep.subr.mxu0 0.0
        %1429 = vmatpush1.msra.mxu0 %v1401
        %1430 = vmatprep.subr.mxu0 0.0
        %1431 = vmatpush1.msra.mxu0 %v1402
        %1432 = vmatprep.subr.mxu0 0.0
        %1433 = vmatpush1.msra.mxu0 %v1403
        %1434 = vmatprep.subr.mxu0 0.0
        %1435 = vmatpush1.msra.mxu0 %v1404
        %1436 = vmatprep.subr.mxu0 0.0
        %1437 = vmatpush1.msra.mxu0 %v1405
        %1438 = vmatprep.subr.mxu0 0.0
        %1439 = vmatpush1.msra.mxu0 0.0
        %1440 = vmatprep.subr.mxu0 0.0
        %1441 = vmatpush1.msra.mxu0 0.0
        %1442 = vmatprep.subr.mxu0 0.0
        %1443 = vmatpush1.msra.mxu0 0.0
        %1444 = vmatprep.subr.mxu0 0.0
        %1445 = vmatpush1.msra.mxu0 0.0
        %1446 = vmatprep.subr.mxu0 0.0
        %1447 = vmatpush1.msra.mxu0 0.0
        %1448 = vmatprep.subr.mxu0 0.0
        %1449 = vmatpush1.msra.mxu0 0.0
        %1450 = vmatprep.subr.mxu0 0.0
        %1451 = vmatpush1.msra.mxu0 0.0
        %1452 = vmatprep.subr.mxu0 0.0
        %1453 = vmatpush1.msra.mxu0 0.0
        %1454 = vmatprep.subr.mxu0 0.0
        %1455 = vmatpush1.msra.mxu0 0.0
        %1456 = vmatprep.subr.mxu0 0.0
        %1457 = vmatpush1.msra.mxu0 0.0
        %1458 = vmatprep.subr.mxu0 0.0
        %1459 = vmatpush1.msra.mxu0 0.0
        %1460 = vmatprep.subr.mxu0 0.0
        %1461 = vmatpush1.msra.mxu0 0.0
        %1462 = vmatprep.subr.mxu0 0.0
        %1463 = vmatpush1.msra.mxu0 0.0
        %1464 = vmatprep.subr.mxu0 0.0
        %1465 = vmatpush1.msra.mxu0 0.0
        %1466 = vmatprep.subr.mxu0 0.0
        %1467 = vmatpush1.msra.mxu0 0.0
        %1468 = vmatprep.subr.mxu0 0.0
        %1469 = vmatpush1.msra.mxu0 0.0
        %1470 = vmatprep.mubr.f32.mxu0 0.0
        %1471 = vmatmul.mubr.f32.gmra.mrb[0].mxu0 %v604
        %v1472 = vpop.f32.mrb[0].mxu0
        %v1473 = vadd.f32 0.0, %v1472
        %v1474 = vpop.f32.mrb[0].mxu0
        %1475 = vmatprep.mubr.f32.mxu0 0.0
        %1476 = vmatmul.mubr.f32.gmra.mrb[0].mxu0 %v606
        %v1477 = vpop.f32.mrb[0].mxu0
        %v1478 = vadd.f32 0.0, %v1477
        %v1479 = vpop.f32.mrb[0].mxu0
        %1480 = vmatprep.mubr.f32.mxu0 0.0
        %1481 = vmatmul.mubr.f32.gmra.mrb[0].mxu0 %v609
        %v1482 = vpop.f32.mrb[0].mxu0
        %v1483 = vadd.f32 0.0, %v1482
        %v1484 = vpop.f32.mrb[0].mxu0
        %1485 = vmatprep.mubr.f32.mxu0 0.0
        %1486 = vmatmul.mubr.f32.gmra.mrb[0].mxu0 %v611
        %v1487 = vpop.f32.mrb[0].mxu0
        %v1488 = vadd.f32 0.0, %v1487
        %v1489 = vpop.f32.mrb[0].mxu0
        %1490 = vmatprep.mubr.f32.mxu0 0.0
        %1491 = vmatmul.mubr.f32.gmra.mrb[0].mxu0 %v614
        %v1492 = vpop.f32.mrb[0].mxu0
        %v1493 = vadd.f32 0.0, %v1492
        %v1494 = vpop.f32.mrb[0].mxu0
        %1495 = vmatprep.mubr.f32.mxu0 0.0
        %1496 = vmatmul.mubr.f32.gmra.mrb[0].mxu0 %v616
        %v1497 = vpop.f32.mrb[0].mxu0
        %v1498 = vadd.f32 0.0, %v1497
        %v1499 = vpop.f32.mrb[0].mxu0
        %1500 = vmatprep.mubr.f32.mxu0 0.0
        %1501 = vmatmul.mubr.f32.gmra.mrb[0].mxu0 %v619
        %v1502 = vpop.f32.mrb[0].mxu0
        %v1503 = vadd.f32 0.0, %v1502
        %v1504 = vpop.f32.mrb[0].mxu0
        %1505 = vmatprep.mubr.f32.mxu0 0.0
        %1506 = vmatmul.mubr.f32.gmra.mrb[0].mxu0 %v621
        %v1507 = vpop.f32.mrb[0].mxu0
        %v1508 = vadd.f32 0.0, %v1507
        %v1509 = vpop.f32.mrb[0].mxu0
        %1510 = vmatprep.mubr.f32.mxu0 0.0
        %1511 = vmatmul.mubr.f32.gmra.mrb[0].mxu0 %v624
        %v1512 = vpop.f32.mrb[0].mxu0
        %v1513 = vadd.f32 0.0, %v1512
        %v1514 = vpop.f32.mrb[0].mxu0
        %1515 = vmatprep.mubr.f32.mxu0 0.0
        %1516 = vmatmul.mubr.f32.gmra.mrb[0].mxu0 %v626
        %v1517 = vpop.f32.mrb[0].mxu0
        %v1518 = vadd.f32 0.0, %v1517
        %v1519 = vpop.f32.mrb[0].mxu0
        %1520 = vmatprep.mubr.f32.mxu0 0.0
        %1521 = vmatmul.mubr.f32.gmra.mrb[0].mxu0 %v629
        %v1522 = vpop.f32.mrb[0].mxu0
        %v1523 = vadd.f32 0.0, %v1522
        %v1524 = vpop.f32.mrb[0].mxu0
        %1525 = vmatprep.mubr.f32.mxu0 0.0
        %1526 = vmatmul.mubr.f32.gmra.mrb[0].mxu0 %v631
        %v1527 = vpop.f32.mrb[0].mxu0
        %v1528 = vadd.f32 0.0, %v1527
        %v1529 = vpop.f32.mrb[0].mxu0
        %1530 = vmatprep.mubr.f32.mxu0 0.0
        %1531 = vmatmul.mubr.f32.gmra.mrb[0].mxu0 %v634
        %v1532 = vpop.f32.mrb[0].mxu0
        %v1533 = vadd.f32 0.0, %v1532
        %v1534 = vpop.f32.mrb[0].mxu0
        %1535 = vmatprep.mubr.f32.mxu0 0.0
        %1536 = vmatmul.mubr.f32.gmra.mrb[0].mxu0 %v636
        %v1537 = vpop.f32.mrb[0].mxu0
        %v1538 = vadd.f32 0.0, %v1537
        %v1539 = vpop.f32.mrb[0].mxu0
        %1540 = vdwg.mxu0
        %v1541 = vld [vmem:[#allocation2] sm:$0xff]
        %v1542 = vld [vmem:[#allocation2 + $0x8] sm:$0xff]
        %v1543 = vld [vmem:[#allocation2 + $0x10] sm:$0xff]
        %v1544 = vld [vmem:[#allocation2 + $0x18] sm:$0xff]
        %v1545 = vld [vmem:[#allocation2 + $0x20] sm:$0xff]
        %v1546 = vld [vmem:[#allocation2 + $0x28] sm:$0xff]
        %v1547 = vld [vmem:[#allocation2 + $0x30] sm:$0xff]
        %v1548 = vld [vmem:[#allocation2 + $0x38] sm:$0xff]
        %v1549 = vld [vmem:[#allocation2 + $0x40] sm:$0xff]
        %v1550 = vld [vmem:[#allocation2 + $0x48] sm:$0xff]
        %v1551 = vld [vmem:[#allocation2 + $0x50] sm:$0xff]
        %v1552 = vld [vmem:[#allocation2 + $0x58] sm:$0xff]
        %v1553 = vld [vmem:[#allocation2 + $0x60] sm:$0xff]
        %v1554 = vld [vmem:[#allocation2 + $0x68] sm:$0xff]
        %v1555 = vadd.f32 %v1541, %v1473
        %v1556 = vadd.f32 %v1542, %v1478
        %v1557 = vadd.f32 %v1543, %v1483
        %v1558 = vadd.f32 %v1544, %v1488
        %v1559 = vadd.f32 %v1545, %v1493
        %v1560 = vadd.f32 %v1546, %v1498
        %v1561 = vadd.f32 %v1547, %v1503
        %v1562 = vadd.f32 %v1548, %v1508
        %v1563 = vadd.f32 %v1549, %v1513
        %v1564 = vadd.f32 %v1550, %v1518
        %v1565 = vadd.f32 %v1551, %v1523
        %v1566 = vadd.f32 %v1552, %v1528
        %v1567 = vadd.f32 %v1553, %v1533
        %v1568 = vadd.f32 %v1554, %v1538
        %1569 = vst [vmem:[#allocation2] sm:$0xff] %v1555
        %1570 = vst [vmem:[#allocation2 + $0x8] sm:$0xff] %v1556
        %1571 = vst [vmem:[#allocation2 + $0x10] sm:$0xff] %v1557
        %1572 = vst [vmem:[#allocation2 + $0x18] sm:$0xff] %v1558
        %1573 = vst [vmem:[#allocation2 + $0x20] sm:$0xff] %v1559
        %1574 = vst [vmem:[#allocation2 + $0x28] sm:$0xff] %v1560
        %1575 = vst [vmem:[#allocation2 + $0x30] sm:$0xff] %v1561
        %1576 = vst [vmem:[#allocation2 + $0x38] sm:$0xff] %v1562
        %1577 = vst [vmem:[#allocation2 + $0x40] sm:$0xff] %v1563
        %1578 = vst [vmem:[#allocation2 + $0x48] sm:$0xff] %v1564
        %1579 = vst [vmem:[#allocation2 + $0x50] sm:$0xff] %v1565
        %1580 = vst [vmem:[#allocation2 + $0x58] sm:$0xff] %v1566
        %1581 = vst [vmem:[#allocation2 + $0x60] sm:$0xff] %v1567
        %1582 = vst [vmem:[#allocation2 + $0x68] sm:$0xff] %v1568
        %v1586 = vrot.slane %v372, 1
        %v1587 = vrot.slane %v373, 1
        %v1588 = vsel %vm596, %v1586, %v1587
        %v1589 = vrot.slane %v374, 1
        %v1590 = vsel %vm596, %v1587, %v1589
        %1593 = vmatprep.subr.mxu0 0.0
        %1594 = vmatpush1.msra.mxu0 %v1390
        %1595 = vmatprep.subr.mxu0 0.0
        %1596 = vmatpush1.msra.mxu0 %v1391
        %1597 = vmatprep.subr.mxu0 0.0
        %1598 = vmatpush1.msra.mxu0 %v1392
        %1599 = vmatprep.subr.mxu0 0.0
        %1600 = vmatpush1.msra.mxu0 %v1393
        %1601 = vmatprep.subr.mxu0 0.0
        %1602 = vmatpush1.msra.mxu0 %v1394
        %1603 = vmatprep.subr.mxu0 0.0
        %1604 = vmatpush1.msra.mxu0 %v1395
        %1605 = vmatprep.subr.mxu0 0.0
        %1606 = vmatpush1.msra.mxu0 %v1396
        %1607 = vmatprep.subr.mxu0 0.0
        %1608 = vmatpush1.msra.mxu0 %v1397
        %1609 = vmatprep.subr.mxu0 0.0
        %1610 = vmatpush1.msra.mxu0 %v1398
        %1611 = vmatprep.subr.mxu0 0.0
        %1612 = vmatpush1.msra.mxu0 %v1399
        %1613 = vmatprep.subr.mxu0 0.0
        %1614 = vmatpush1.msra.mxu0 %v1400
        %1615 = vmatprep.subr.mxu0 0.0
        %1616 = vmatpush1.msra.mxu0 %v1401
        %1617 = vmatprep.subr.mxu0 0.0
        %1618 = vmatpush1.msra.mxu0 %v1402
        %1619 = vmatprep.subr.mxu0 0.0
        %1620 = vmatpush1.msra.mxu0 %v1403
        %1621 = vmatprep.subr.mxu0 0.0
        %1622 = vmatpush1.msra.mxu0 %v1404
        %1623 = vmatprep.subr.mxu0 0.0
        %1624 = vmatpush1.msra.mxu0 %v1405
        %1625 = vmatprep.subr.mxu0 0.0
        %1626 = vmatpush1.msra.mxu0 0.0
        %1627 = vmatprep.subr.mxu0 0.0
        %1628 = vmatpush1.msra.mxu0 0.0
        %1629 = vmatprep.subr.mxu0 0.0
        %1630 = vmatpush1.msra.mxu0 0.0
        %1631 = vmatprep.subr.mxu0 0.0
        %1632 = vmatpush1.msra.mxu0 0.0
        %1633 = vmatprep.subr.mxu0 0.0
        %1634 = vmatpush1.msra.mxu0 0.0
        %1635 = vmatprep.subr.mxu0 0.0
        %1636 = vmatpush1.msra.mxu0 0.0
        %1637 = vmatprep.subr.mxu0 0.0
        %1638 = vmatpush1.msra.mxu0 0.0
        %1639 = vmatprep.subr.mxu0 0.0
        %1640 = vmatpush1.msra.mxu0 0.0
        %1641 = vmatprep.subr.mxu0 0.0
        %1642 = vmatpush1.msra.mxu0 0.0
        %1643 = vmatprep.subr.mxu0 0.0
        %1644 = vmatpush1.msra.mxu0 0.0
        %1645 = vmatprep.subr.mxu0 0.0
        %1646 = vmatpush1.msra.mxu0 0.0
        %1647 = vmatprep.subr.mxu0 0.0
        %1648 = vmatpush1.msra.mxu0 0.0
        %1649 = vmatprep.subr.mxu0 0.0
        %1650 = vmatpush1.msra.mxu0 0.0
        %1651 = vmatprep.subr.mxu0 0.0
        %1652 = vmatpush1.msra.mxu0 0.0
        %1653 = vmatprep.subr.mxu0 0.0
        %1654 = vmatpush1.msra.mxu0 0.0
        %1655 = vmatprep.subr.mxu0 0.0
        %1656 = vmatpush1.msra.mxu0 0.0
        %1657 = vmatprep.mubr.f32.mxu0 0.0
        %1658 = vmatmul.mubr.f32.gmra.mrb[0].mxu0 %v1588
        %v1659 = vpop.f32.mrb[0].mxu0
        %v1660 = vadd.f32 0.0, %v1659
        %v1661 = vpop.f32.mrb[0].mxu0
        %1662 = vmatprep.mubr.f32.mxu0 0.0
        %1663 = vmatmul.mubr.f32.gmra.mrb[0].mxu0 %v1590
        %v1664 = vpop.f32.mrb[0].mxu0
        %v1665 = vadd.f32 0.0, %v1664
        %v1666 = vpop.f32.mrb[0].mxu0
        %1667 = vdwg.mxu0
        %v1668 = vld [vmem:[%s1382] sm:$0xff]
        %v1669 = vld [vmem:[%s1382 + $0x8] sm:$0xff]
        %v1670 = vadd.f32 %v1668, %v1660
        %v1671 = vadd.f32 %v1669, %v1665
        %1672 = vst [vmem:[%s1382] sm:$0xff] %v1670
        %1673 = vst [vmem:[%s1382 + $0x8] sm:$0xff] %v1671
        %s1674 = scalar_lea.vmem %s343, 640
        %v1675 = vld [vmem:[%s1674] sm:$0xff]
        %v1676 = vld [vmem:[%s1674 + $0x8] sm:$0xff]
        %v1677 = vld [vmem:[%s1674 + $0x10] sm:$0xff]
        %v1678 = vld [vmem:[%s1674 + $0x18] sm:$0xff]
        %v1679 = vld [vmem:[%s1674 + $0x20] sm:$0xff]
        %v1680 = vld [vmem:[%s1674 + $0x28] sm:$0xff]
        %v1681 = vld [vmem:[%s1674 + $0x30] sm:$0xff]
        %v1682 = vld [vmem:[%s1674 + $0x38] sm:$0xff]
        %v1683 = vld [vmem:[%s1674 + $0x40] sm:$0xff]
        %v1684 = vld [vmem:[%s1674 + $0x48] sm:$0xff]
        %v1685 = vld [vmem:[%s1674 + $0x50] sm:$0xff]
        %v1686 = vld [vmem:[%s1674 + $0x58] sm:$0xff]
        %v1687 = vld [vmem:[%s1674 + $0x60] sm:$0xff]
        %v1688 = vld [vmem:[%s1674 + $0x68] sm:$0xff]
        %v1689 = vld [vmem:[%s1674 + $0x70] sm:$0xff]
        %v1690 = vld [vmem:[%s1674 + $0x78] sm:$0xff]
        %1691 = vmatprep.subr.mxu0 0.0
        %1692 = vmatpush1.msra.mxu0 %v1675
        %1693 = vmatprep.subr.mxu0 0.0
        %1694 = vmatpush1.msra.mxu0 %v1676
        %1695 = vmatprep.subr.mxu0 0.0
        %1696 = vmatpush1.msra.mxu0 %v1677
        %1697 = vmatprep.subr.mxu0 0.0
        %1698 = vmatpush1.msra.mxu0 %v1678
        %1699 = vmatprep.subr.mxu0 0.0
        %1700 = vmatpush1.msra.mxu0 %v1679
        %1701 = vmatprep.subr.mxu0 0.0
        %1702 = vmatpush1.msra.mxu0 %v1680
        %1703 = vmatprep.subr.mxu0 0.0
        %1704 = vmatpush1.msra.mxu0 %v1681
        %1705 = vmatprep.subr.mxu0 0.0
        %1706 = vmatpush1.msra.mxu0 %v1682
        %1707 = vmatprep.subr.mxu0 0.0
        %1708 = vmatpush1.msra.mxu0 %v1683
        %1709 = vmatprep.subr.mxu0 0.0
        %1710 = vmatpush1.msra.mxu0 %v1684
        %1711 = vmatprep.subr.mxu0 0.0
        %1712 = vmatpush1.msra.mxu0 %v1685
        %1713 = vmatprep.subr.mxu0 0.0
        %1714 = vmatpush1.msra.mxu0 %v1686
        %1715 = vmatprep.subr.mxu0 0.0
        %1716 = vmatpush1.msra.mxu0 %v1687
        %1717 = vmatprep.subr.mxu0 0.0
        %1718 = vmatpush1.msra.mxu0 %v1688
        %1719 = vmatprep.subr.mxu0 0.0
        %1720 = vmatpush1.msra.mxu0 %v1689
        %1721 = vmatprep.subr.mxu0 0.0
        %1722 = vmatpush1.msra.mxu0 %v1690
        %1723 = vmatprep.subr.mxu0 0.0
        %1724 = vmatpush1.msra.mxu0 0.0
        %1725 = vmatprep.subr.mxu0 0.0
        %1726 = vmatpush1.msra.mxu0 0.0
        %1727 = vmatprep.subr.mxu0 0.0
        %1728 = vmatpush1.msra.mxu0 0.0
        %1729 = vmatprep.subr.mxu0 0.0
        %1730 = vmatpush1.msra.mxu0 0.0
        %1731 = vmatprep.subr.mxu0 0.0
        %1732 = vmatpush1.msra.mxu0 0.0
        %1733 = vmatprep.subr.mxu0 0.0
        %1734 = vmatpush1.msra.mxu0 0.0
        %1735 = vmatprep.subr.mxu0 0.0
        %1736 = vmatpush1.msra.mxu0 0.0
        %1737 = vmatprep.subr.mxu0 0.0
        %1738 = vmatpush1.msra.mxu0 0.0
        %1739 = vmatprep.subr.mxu0 0.0
        %1740 = vmatpush1.msra.mxu0 0.0
        %1741 = vmatprep.subr.mxu0 0.0
        %1742 = vmatpush1.msra.mxu0 0.0
        %1743 = vmatprep.subr.mxu0 0.0
        %1744 = vmatpush1.msra.mxu0 0.0
        %1745 = vmatprep.subr.mxu0 0.0
        %1746 = vmatpush1.msra.mxu0 0.0
        %1747 = vmatprep.subr.mxu0 0.0
        %1748 = vmatpush1.msra.mxu0 0.0
        %1749 = vmatprep.subr.mxu0 0.0
        %1750 = vmatpush1.msra.mxu0 0.0
        %1751 = vmatprep.subr.mxu0 0.0
        %1752 = vmatpush1.msra.mxu0 0.0
        %1753 = vmatprep.subr.mxu0 0.0
        %1754 = vmatpush1.msra.mxu0 0.0
        %1755 = vmatprep.mubr.f32.mxu0 0.0
        %1756 = vmatmul.mubr.f32.gmra.mrb[0].mxu0 %v871
        %v1757 = vpop.f32.mrb[0].mxu0
        %v1758 = vadd.f32 0.0, %v1757
        %v1759 = vpop.f32.mrb[0].mxu0
        %1760 = vmatprep.mubr.f32.mxu0 0.0
        %1761 = vmatmul.mubr.f32.gmra.mrb[0].mxu0 %v873
        %v1762 = vpop.f32.mrb[0].mxu0
        %v1763 = vadd.f32 0.0, %v1762
        %v1764 = vpop.f32.mrb[0].mxu0
        %1765 = vmatprep.mubr.f32.mxu0 0.0
        %1766 = vmatmul.mubr.f32.gmra.mrb[0].mxu0 %v876
        %v1767 = vpop.f32.mrb[0].mxu0
        %v1768 = vadd.f32 0.0, %v1767
        %v1769 = vpop.f32.mrb[0].mxu0
        %1770 = vmatprep.mubr.f32.mxu0 0.0
        %1771 = vmatmul.mubr.f32.gmra.mrb[0].mxu0 %v878
        %v1772 = vpop.f32.mrb[0].mxu0
        %v1773 = vadd.f32 0.0, %v1772
        %v1774 = vpop.f32.mrb[0].mxu0
        %1775 = vmatprep.mubr.f32.mxu0 0.0
        %1776 = vmatmul.mubr.f32.gmra.mrb[0].mxu0 %v881
        %v1777 = vpop.f32.mrb[0].mxu0
        %v1778 = vadd.f32 0.0, %v1777
        %v1779 = vpop.f32.mrb[0].mxu0
        %1780 = vmatprep.mubr.f32.mxu0 0.0
        %1781 = vmatmul.mubr.f32.gmra.mrb[0].mxu0 %v883
        %v1782 = vpop.f32.mrb[0].mxu0
        %v1783 = vadd.f32 0.0, %v1782
        %v1784 = vpop.f32.mrb[0].mxu0
        %1785 = vmatprep.mubr.f32.mxu0 0.0
        %1786 = vmatmul.mubr.f32.gmra.mrb[0].mxu0 %v886
        %v1787 = vpop.f32.mrb[0].mxu0
        %v1788 = vadd.f32 0.0, %v1787
        %v1789 = vpop.f32.mrb[0].mxu0
        %1790 = vmatprep.mubr.f32.mxu0 0.0
        %1791 = vmatmul.mubr.f32.gmra.mrb[0].mxu0 %v888
        %v1792 = vpop.f32.mrb[0].mxu0
        %v1793 = vadd.f32 0.0, %v1792
        %v1794 = vpop.f32.mrb[0].mxu0
        %1795 = vmatprep.mubr.f32.mxu0 0.0
        %1796 = vmatmul.mubr.f32.gmra.mrb[0].mxu0 %v891
        %v1797 = vpop.f32.mrb[0].mxu0
        %v1798 = vadd.f32 0.0, %v1797
        %v1799 = vpop.f32.mrb[0].mxu0
        %1800 = vmatprep.mubr.f32.mxu0 0.0
        %1801 = vmatmul.mubr.f32.gmra.mrb[0].mxu0 %v893
        %v1802 = vpop.f32.mrb[0].mxu0
        %v1803 = vadd.f32 0.0, %v1802
        %v1804 = vpop.f32.mrb[0].mxu0
        %1805 = vmatprep.mubr.f32.mxu0 0.0
        %1806 = vmatmul.mubr.f32.gmra.mrb[0].mxu0 %v896
        %v1807 = vpop.f32.mrb[0].mxu0
        %v1808 = vadd.f32 0.0, %v1807
        %v1809 = vpop.f32.mrb[0].mxu0
        %1810 = vmatprep.mubr.f32.mxu0 0.0
        %1811 = vmatmul.mubr.f32.gmra.mrb[0].mxu0 %v898
        %v1812 = vpop.f32.mrb[0].mxu0
        %v1813 = vadd.f32 0.0, %v1812
        %v1814 = vpop.f32.mrb[0].mxu0
        %1815 = vmatprep.mubr.f32.mxu0 0.0
        %1816 = vmatmul.mubr.f32.gmra.mrb[0].mxu0 %v901
        %v1817 = vpop.f32.mrb[0].mxu0
        %v1818 = vadd.f32 0.0, %v1817
        %v1819 = vpop.f32.mrb[0].mxu0
        %1820 = vmatprep.mubr.f32.mxu0 0.0
        %1821 = vmatmul.mubr.f32.gmra.mrb[0].mxu0 %v903
        %v1822 = vpop.f32.mrb[0].mxu0
        %v1823 = vadd.f32 0.0, %v1822
        %v1824 = vpop.f32.mrb[0].mxu0
        %1825 = vdwg.mxu0
        %v1826 = vld [vmem:[#allocation2] sm:$0xff]
        %v1827 = vld [vmem:[#allocation2 + $0x8] sm:$0xff]
        %v1828 = vld [vmem:[#allocation2 + $0x10] sm:$0xff]
        %v1829 = vld [vmem:[#allocation2 + $0x18] sm:$0xff]
        %v1830 = vld [vmem:[#allocation2 + $0x20] sm:$0xff]
        %v1831 = vld [vmem:[#allocation2 + $0x28] sm:$0xff]
        %v1832 = vld [vmem:[#allocation2 + $0x30] sm:$0xff]
        %v1833 = vld [vmem:[#allocation2 + $0x38] sm:$0xff]
        %v1834 = vld [vmem:[#allocation2 + $0x40] sm:$0xff]
        %v1835 = vld [vmem:[#allocation2 + $0x48] sm:$0xff]
        %v1836 = vld [vmem:[#allocation2 + $0x50] sm:$0xff]
        %v1837 = vld [vmem:[#allocation2 + $0x58] sm:$0xff]
        %v1838 = vld [vmem:[#allocation2 + $0x60] sm:$0xff]
        %v1839 = vld [vmem:[#allocation2 + $0x68] sm:$0xff]
        %v1840 = vadd.f32 %v1826, %v1758
        %v1841 = vadd.f32 %v1827, %v1763
        %v1842 = vadd.f32 %v1828, %v1768
        %v1843 = vadd.f32 %v1829, %v1773
        %v1844 = vadd.f32 %v1830, %v1778
        %v1845 = vadd.f32 %v1831, %v1783
        %v1846 = vadd.f32 %v1832, %v1788
        %v1847 = vadd.f32 %v1833, %v1793
        %v1848 = vadd.f32 %v1834, %v1798
        %v1849 = vadd.f32 %v1835, %v1803
        %v1850 = vadd.f32 %v1836, %v1808
        %v1851 = vadd.f32 %v1837, %v1813
        %v1852 = vadd.f32 %v1838, %v1818
        %v1853 = vadd.f32 %v1839, %v1823
        %1854 = vst [vmem:[#allocation2] sm:$0xff] %v1840
        %1855 = vst [vmem:[#allocation2 + $0x8] sm:$0xff] %v1841
        %1856 = vst [vmem:[#allocation2 + $0x10] sm:$0xff] %v1842
        %1857 = vst [vmem:[#allocation2 + $0x18] sm:$0xff] %v1843
        %1858 = vst [vmem:[#allocation2 + $0x20] sm:$0xff] %v1844
        %1859 = vst [vmem:[#allocation2 + $0x28] sm:$0xff] %v1845
        %1860 = vst [vmem:[#allocation2 + $0x30] sm:$0xff] %v1846
        %1861 = vst [vmem:[#allocation2 + $0x38] sm:$0xff] %v1847
        %1862 = vst [vmem:[#allocation2 + $0x40] sm:$0xff] %v1848
        %1863 = vst [vmem:[#allocation2 + $0x48] sm:$0xff] %v1849
        %1864 = vst [vmem:[#allocation2 + $0x50] sm:$0xff] %v1850
        %1865 = vst [vmem:[#allocation2 + $0x58] sm:$0xff] %v1851
        %1866 = vst [vmem:[#allocation2 + $0x60] sm:$0xff] %v1852
        %1867 = vst [vmem:[#allocation2 + $0x68] sm:$0xff] %v1853
        %v1868 = vrot.slane %v372, 2
        %v1869 = vrot.slane %v373, 2
        %v1870 = vsel %vm863, %v1868, %v1869
        %v1871 = vrot.slane %v374, 2
        %v1872 = vsel %vm863, %v1869, %v1871
        %1875 = vmatprep.subr.mxu0 0.0
        %1876 = vmatpush1.msra.mxu0 %v1675
        %1877 = vmatprep.subr.mxu0 0.0
        %1878 = vmatpush1.msra.mxu0 %v1676
        %1879 = vmatprep.subr.mxu0 0.0
        %1880 = vmatpush1.msra.mxu0 %v1677
        %1881 = vmatprep.subr.mxu0 0.0
        %1882 = vmatpush1.msra.mxu0 %v1678
        %1883 = vmatprep.subr.mxu0 0.0
        %1884 = vmatpush1.msra.mxu0 %v1679
        %1885 = vmatprep.subr.mxu0 0.0
        %1886 = vmatpush1.msra.mxu0 %v1680
        %1887 = vmatprep.subr.mxu0 0.0
        %1888 = vmatpush1.msra.mxu0 %v1681
        %1889 = vmatprep.subr.mxu0 0.0
        %1890 = vmatpush1.msra.mxu0 %v1682
        %1891 = vmatprep.subr.mxu0 0.0
        %1892 = vmatpush1.msra.mxu0 %v1683
        %1893 = vmatprep.subr.mxu0 0.0
        %1894 = vmatpush1.msra.mxu0 %v1684
        %1895 = vmatprep.subr.mxu0 0.0
        %1896 = vmatpush1.msra.mxu0 %v1685
        %1897 = vmatprep.subr.mxu0 0.0
        %1898 = vmatpush1.msra.mxu0 %v1686
        %1899 = vmatprep.subr.mxu0 0.0
        %1900 = vmatpush1.msra.mxu0 %v1687
        %1901 = vmatprep.subr.mxu0 0.0
        %1902 = vmatpush1.msra.mxu0 %v1688
        %1903 = vmatprep.subr.mxu0 0.0
        %1904 = vmatpush1.msra.mxu0 %v1689
        %1905 = vmatprep.subr.mxu0 0.0
        %1906 = vmatpush1.msra.mxu0 %v1690
        %1907 = vmatprep.subr.mxu0 0.0
        %1908 = vmatpush1.msra.mxu0 0.0
        %1909 = vmatprep.subr.mxu0 0.0
        %1910 = vmatpush1.msra.mxu0 0.0
        %1911 = vmatprep.subr.mxu0 0.0
        %1912 = vmatpush1.msra.mxu0 0.0
        %1913 = vmatprep.subr.mxu0 0.0
        %1914 = vmatpush1.msra.mxu0 0.0
        %1915 = vmatprep.subr.mxu0 0.0
        %1916 = vmatpush1.msra.mxu0 0.0
        %1917 = vmatprep.subr.mxu0 0.0
        %1918 = vmatpush1.msra.mxu0 0.0
        %1919 = vmatprep.subr.mxu0 0.0
        %1920 = vmatpush1.msra.mxu0 0.0
        %1921 = vmatprep.subr.mxu0 0.0
        %1922 = vmatpush1.msra.mxu0 0.0
        %1923 = vmatprep.subr.mxu0 0.0
        %1924 = vmatpush1.msra.mxu0 0.0
        %1925 = vmatprep.subr.mxu0 0.0
        %1926 = vmatpush1.msra.mxu0 0.0
        %1927 = vmatprep.subr.mxu0 0.0
        %1928 = vmatpush1.msra.mxu0 0.0
        %1929 = vmatprep.subr.mxu0 0.0
        %1930 = vmatpush1.msra.mxu0 0.0
        %1931 = vmatprep.subr.mxu0 0.0
        %1932 = vmatpush1.msra.mxu0 0.0
        %1933 = vmatprep.subr.mxu0 0.0
        %1934 = vmatpush1.msra.mxu0 0.0
        %1935 = vmatprep.subr.mxu0 0.0
        %1936 = vmatpush1.msra.mxu0 0.0
        %1937 = vmatprep.subr.mxu0 0.0
        %1938 = vmatpush1.msra.mxu0 0.0
        %1939 = vmatprep.mubr.f32.mxu0 0.0
        %1940 = vmatmul.mubr.f32.gmra.mrb[0].mxu0 %v1870
        %v1941 = vpop.f32.mrb[0].mxu0
        %v1942 = vadd.f32 0.0, %v1941
        %v1943 = vpop.f32.mrb[0].mxu0
        %1944 = vmatprep.mubr.f32.mxu0 0.0
        %1945 = vmatmul.mubr.f32.gmra.mrb[0].mxu0 %v1872
        %v1946 = vpop.f32.mrb[0].mxu0
        %v1947 = vadd.f32 0.0, %v1946
        %v1948 = vpop.f32.mrb[0].mxu0
        %1949 = vdwg.mxu0
        %v1950 = vld [vmem:[%s1382] sm:$0xff]
        %v1951 = vld [vmem:[%s1382 + $0x8] sm:$0xff]
        %v1952 = vadd.f32 %v1950, %v1942
        %v1953 = vadd.f32 %v1951, %v1947
        %1954 = vst [vmem:[%s1382] sm:$0xff] %v1952
        %1955 = vst [vmem:[%s1382 + $0x8] sm:$0xff] %v1953
        %s1956 = scalar_lea.vmem %s343, 768
        %v1957 = vld [vmem:[%s1956] sm:$0xff]
        %v1958 = vld [vmem:[%s1956 + $0x8] sm:$0xff]
        %v1959 = vld [vmem:[%s1956 + $0x10] sm:$0xff]
        %v1960 = vld [vmem:[%s1956 + $0x18] sm:$0xff]
        %v1961 = vld [vmem:[%s1956 + $0x20] sm:$0xff]
        %v1962 = vld [vmem:[%s1956 + $0x28] sm:$0xff]
        %v1963 = vld [vmem:[%s1956 + $0x30] sm:$0xff]
        %v1964 = vld [vmem:[%s1956 + $0x38] sm:$0xff]
        %v1965 = vld [vmem:[%s1956 + $0x40] sm:$0xff]
        %v1966 = vld [vmem:[%s1956 + $0x48] sm:$0xff]
        %v1967 = vld [vmem:[%s1956 + $0x50] sm:$0xff]
        %v1968 = vld [vmem:[%s1956 + $0x58] sm:$0xff]
        %v1969 = vld [vmem:[%s1956 + $0x60] sm:$0xff]
        %v1970 = vld [vmem:[%s1956 + $0x68] sm:$0xff]
        %v1971 = vld [vmem:[%s1956 + $0x70] sm:$0xff]
        %v1972 = vld [vmem:[%s1956 + $0x78] sm:$0xff]
        %1973 = vmatprep.subr.mxu0 0.0
        %1974 = vmatpush1.msra.mxu0 %v1957
        %1975 = vmatprep.subr.mxu0 0.0
        %1976 = vmatpush1.msra.mxu0 %v1958
        %1977 = vmatprep.subr.mxu0 0.0
        %1978 = vmatpush1.msra.mxu0 %v1959
        %1979 = vmatprep.subr.mxu0 0.0
        %1980 = vmatpush1.msra.mxu0 %v1960
        %1981 = vmatprep.subr.mxu0 0.0
        %1982 = vmatpush1.msra.mxu0 %v1961
        %1983 = vmatprep.subr.mxu0 0.0
        %1984 = vmatpush1.msra.mxu0 %v1962
        %1985 = vmatprep.subr.mxu0 0.0
        %1986 = vmatpush1.msra.mxu0 %v1963
        %1987 = vmatprep.subr.mxu0 0.0
        %1988 = vmatpush1.msra.mxu0 %v1964
        %1989 = vmatprep.subr.mxu0 0.0
        %1990 = vmatpush1.msra.mxu0 %v1965
        %1991 = vmatprep.subr.mxu0 0.0
        %1992 = vmatpush1.msra.mxu0 %v1966
        %1993 = vmatprep.subr.mxu0 0.0
        %1994 = vmatpush1.msra.mxu0 %v1967
        %1995 = vmatprep.subr.mxu0 0.0
        %1996 = vmatpush1.msra.mxu0 %v1968
        %1997 = vmatprep.subr.mxu0 0.0
        %1998 = vmatpush1.msra.mxu0 %v1969
        %1999 = vmatprep.subr.mxu0 0.0
        %2000 = vmatpush1.msra.mxu0 %v1970
        %2001 = vmatprep.subr.mxu0 0.0
        %2002 = vmatpush1.msra.mxu0 %v1971
        %2003 = vmatprep.subr.mxu0 0.0
        %2004 = vmatpush1.msra.mxu0 %v1972
        %2005 = vmatprep.subr.mxu0 0.0
        %2006 = vmatpush1.msra.mxu0 0.0
        %2007 = vmatprep.subr.mxu0 0.0
        %2008 = vmatpush1.msra.mxu0 0.0
        %2009 = vmatprep.subr.mxu0 0.0
        %2010 = vmatpush1.msra.mxu0 0.0
        %2011 = vmatprep.subr.mxu0 0.0
        %2012 = vmatpush1.msra.mxu0 0.0
        %2013 = vmatprep.subr.mxu0 0.0
        %2014 = vmatpush1.msra.mxu0 0.0
        %2015 = vmatprep.subr.mxu0 0.0
        %2016 = vmatpush1.msra.mxu0 0.0
        %2017 = vmatprep.subr.mxu0 0.0
        %2018 = vmatpush1.msra.mxu0 0.0
        %2019 = vmatprep.subr.mxu0 0.0
        %2020 = vmatpush1.msra.mxu0 0.0
        %2021 = vmatprep.subr.mxu0 0.0
        %2022 = vmatpush1.msra.mxu0 0.0
        %2023 = vmatprep.subr.mxu0 0.0
        %2024 = vmatpush1.msra.mxu0 0.0
        %2025 = vmatprep.subr.mxu0 0.0
        %2026 = vmatpush1.msra.mxu0 0.0
        %2027 = vmatprep.subr.mxu0 0.0
        %2028 = vmatpush1.msra.mxu0 0.0
        %2029 = vmatprep.subr.mxu0 0.0
        %2030 = vmatpush1.msra.mxu0 0.0
        %2031 = vmatprep.subr.mxu0 0.0
        %2032 = vmatpush1.msra.mxu0 0.0
        %2033 = vmatprep.subr.mxu0 0.0
        %2034 = vmatpush1.msra.mxu0 0.0
        %2035 = vmatprep.subr.mxu0 0.0
        %2036 = vmatpush1.msra.mxu0 0.0
        %2037 = vmatprep.mubr.f32.mxu0 0.0
        %2038 = vmatmul.mubr.f32.gmra.mrb[0].mxu0 %v354
        %v2039 = vpop.f32.mrb[0].mxu0
        %v2040 = vadd.f32 0.0, %v2039
        %v2041 = vpop.f32.mrb[0].mxu0
        %2042 = vmatprep.mubr.f32.mxu0 0.0
        %2043 = vmatmul.mubr.f32.gmra.mrb[0].mxu0 %v355
        %v2044 = vpop.f32.mrb[0].mxu0
        %v2045 = vadd.f32 0.0, %v2044
        %v2046 = vpop.f32.mrb[0].mxu0
        %2047 = vmatprep.mubr.f32.mxu0 0.0
        %2048 = vmatmul.mubr.f32.gmra.mrb[0].mxu0 %v357
        %v2049 = vpop.f32.mrb[0].mxu0
        %v2050 = vadd.f32 0.0, %v2049
        %v2051 = vpop.f32.mrb[0].mxu0
        %2052 = vmatprep.mubr.f32.mxu0 0.0
        %2053 = vmatmul.mubr.f32.gmra.mrb[0].mxu0 %v358
        %v2054 = vpop.f32.mrb[0].mxu0
        %v2055 = vadd.f32 0.0, %v2054
        %v2056 = vpop.f32.mrb[0].mxu0
        %2057 = vmatprep.mubr.f32.mxu0 0.0
        %2058 = vmatmul.mubr.f32.gmra.mrb[0].mxu0 %v360
        %v2059 = vpop.f32.mrb[0].mxu0
        %v2060 = vadd.f32 0.0, %v2059
        %v2061 = vpop.f32.mrb[0].mxu0
        %2062 = vmatprep.mubr.f32.mxu0 0.0
        %2063 = vmatmul.mubr.f32.gmra.mrb[0].mxu0 %v361
        %v2064 = vpop.f32.mrb[0].mxu0
        %v2065 = vadd.f32 0.0, %v2064
        %v2066 = vpop.f32.mrb[0].mxu0
        %2067 = vmatprep.mubr.f32.mxu0 0.0
        %2068 = vmatmul.mubr.f32.gmra.mrb[0].mxu0 %v363
        %v2069 = vpop.f32.mrb[0].mxu0
        %v2070 = vadd.f32 0.0, %v2069
        %v2071 = vpop.f32.mrb[0].mxu0
        %2072 = vmatprep.mubr.f32.mxu0 0.0
        %2073 = vmatmul.mubr.f32.gmra.mrb[0].mxu0 %v364
        %v2074 = vpop.f32.mrb[0].mxu0
        %v2075 = vadd.f32 0.0, %v2074
        %v2076 = vpop.f32.mrb[0].mxu0
        %2077 = vmatprep.mubr.f32.mxu0 0.0
        %2078 = vmatmul.mubr.f32.gmra.mrb[0].mxu0 %v366
        %v2079 = vpop.f32.mrb[0].mxu0
        %v2080 = vadd.f32 0.0, %v2079
        %v2081 = vpop.f32.mrb[0].mxu0
        %2082 = vmatprep.mubr.f32.mxu0 0.0
        %2083 = vmatmul.mubr.f32.gmra.mrb[0].mxu0 %v367
        %v2084 = vpop.f32.mrb[0].mxu0
        %v2085 = vadd.f32 0.0, %v2084
        %v2086 = vpop.f32.mrb[0].mxu0
        %2087 = vmatprep.mubr.f32.mxu0 0.0
        %2088 = vmatmul.mubr.f32.gmra.mrb[0].mxu0 %v369
        %v2089 = vpop.f32.mrb[0].mxu0
        %v2090 = vadd.f32 0.0, %v2089
        %v2091 = vpop.f32.mrb[0].mxu0
        %2092 = vmatprep.mubr.f32.mxu0 0.0
        %2093 = vmatmul.mubr.f32.gmra.mrb[0].mxu0 %v370
        %v2094 = vpop.f32.mrb[0].mxu0
        %v2095 = vadd.f32 0.0, %v2094
        %v2096 = vpop.f32.mrb[0].mxu0
        %2097 = vdwg.mxu0
        %v2098 = vld [vmem:[#allocation2] sm:$0xff]
        %v2099 = vld [vmem:[#allocation2 + $0x8] sm:$0xff]
        %v2100 = vld [vmem:[#allocation2 + $0x10] sm:$0xff]
        %v2101 = vld [vmem:[#allocation2 + $0x18] sm:$0xff]
        %v2102 = vld [vmem:[#allocation2 + $0x20] sm:$0xff]
        %v2103 = vld [vmem:[#allocation2 + $0x28] sm:$0xff]
        %v2104 = vld [vmem:[#allocation2 + $0x30] sm:$0xff]
        %v2105 = vld [vmem:[#allocation2 + $0x38] sm:$0xff]
        %v2106 = vld [vmem:[#allocation2 + $0x40] sm:$0xff]
        %v2107 = vld [vmem:[#allocation2 + $0x48] sm:$0xff]
        %v2108 = vld [vmem:[#allocation2 + $0x50] sm:$0xff]
        %v2109 = vld [vmem:[#allocation2 + $0x58] sm:$0xff]
        %v2110 = vadd.f32 %v2098, %v2040
        %v2111 = vadd.f32 %v2099, %v2045
        %v2112 = vadd.f32 %v2100, %v2050
        %v2113 = vadd.f32 %v2101, %v2055
        %v2114 = vadd.f32 %v2102, %v2060
        %v2115 = vadd.f32 %v2103, %v2065
        %v2116 = vadd.f32 %v2104, %v2070
        %v2117 = vadd.f32 %v2105, %v2075
        %v2118 = vadd.f32 %v2106, %v2080
        %v2119 = vadd.f32 %v2107, %v2085
        %v2120 = vadd.f32 %v2108, %v2090
        %v2121 = vadd.f32 %v2109, %v2095
        %2122 = vst [vmem:[#allocation2] sm:$0xff] %v2110
        %2123 = vst [vmem:[#allocation2 + $0x8] sm:$0xff] %v2111
        %2124 = vst [vmem:[#allocation2 + $0x10] sm:$0xff] %v2112
        %2125 = vst [vmem:[#allocation2 + $0x18] sm:$0xff] %v2113
        %2126 = vst [vmem:[#allocation2 + $0x20] sm:$0xff] %v2114
        %2127 = vst [vmem:[#allocation2 + $0x28] sm:$0xff] %v2115
        %2128 = vst [vmem:[#allocation2 + $0x30] sm:$0xff] %v2116
        %2129 = vst [vmem:[#allocation2 + $0x38] sm:$0xff] %v2117
        %2130 = vst [vmem:[#allocation2 + $0x40] sm:$0xff] %v2118
        %2131 = vst [vmem:[#allocation2 + $0x48] sm:$0xff] %v2119
        %2132 = vst [vmem:[#allocation2 + $0x50] sm:$0xff] %v2120
        %2133 = vst [vmem:[#allocation2 + $0x58] sm:$0xff] %v2121
        %2134 = vmatprep.subr.mxu0 0.0
        %2135 = vmatpush1.msra.mxu0 %v1957
        %2136 = vmatprep.subr.mxu0 0.0
        %2137 = vmatpush1.msra.mxu0 %v1958
        %2138 = vmatprep.subr.mxu0 0.0
        %2139 = vmatpush1.msra.mxu0 %v1959
        %2140 = vmatprep.subr.mxu0 0.0
        %2141 = vmatpush1.msra.mxu0 %v1960
        %2142 = vmatprep.subr.mxu0 0.0
        %2143 = vmatpush1.msra.mxu0 %v1961
        %2144 = vmatprep.subr.mxu0 0.0
        %2145 = vmatpush1.msra.mxu0 %v1962
        %2146 = vmatprep.subr.mxu0 0.0
        %2147 = vmatpush1.msra.mxu0 %v1963
        %2148 = vmatprep.subr.mxu0 0.0
        %2149 = vmatpush1.msra.mxu0 %v1964
        %2150 = vmatprep.subr.mxu0 0.0
        %2151 = vmatpush1.msra.mxu0 %v1965
        %2152 = vmatprep.subr.mxu0 0.0
        %2153 = vmatpush1.msra.mxu0 %v1966
        %2154 = vmatprep.subr.mxu0 0.0
        %2155 = vmatpush1.msra.mxu0 %v1967
        %2156 = vmatprep.subr.mxu0 0.0
        %2157 = vmatpush1.msra.mxu0 %v1968
        %2158 = vmatprep.subr.mxu0 0.0
        %2159 = vmatpush1.msra.mxu0 %v1969
        %2160 = vmatprep.subr.mxu0 0.0
        %2161 = vmatpush1.msra.mxu0 %v1970
        %2162 = vmatprep.subr.mxu0 0.0
        %2163 = vmatpush1.msra.mxu0 %v1971
        %2164 = vmatprep.subr.mxu0 0.0
        %2165 = vmatpush1.msra.mxu0 %v1972
        %2166 = vmatprep.subr.mxu0 0.0
        %2167 = vmatpush1.msra.mxu0 0.0
        %2168 = vmatprep.subr.mxu0 0.0
        %2169 = vmatpush1.msra.mxu0 0.0
        %2170 = vmatprep.subr.mxu0 0.0
        %2171 = vmatpush1.msra.mxu0 0.0
        %2172 = vmatprep.subr.mxu0 0.0
        %2173 = vmatpush1.msra.mxu0 0.0
        %2174 = vmatprep.subr.mxu0 0.0
        %2175 = vmatpush1.msra.mxu0 0.0
        %2176 = vmatprep.subr.mxu0 0.0
        %2177 = vmatpush1.msra.mxu0 0.0
        %2178 = vmatprep.subr.mxu0 0.0
        %2179 = vmatpush1.msra.mxu0 0.0
        %2180 = vmatprep.subr.mxu0 0.0
        %2181 = vmatpush1.msra.mxu0 0.0
        %2182 = vmatprep.subr.mxu0 0.0
        %2183 = vmatpush1.msra.mxu0 0.0
        %2184 = vmatprep.subr.mxu0 0.0
        %2185 = vmatpush1.msra.mxu0 0.0
        %2186 = vmatprep.subr.mxu0 0.0
        %2187 = vmatpush1.msra.mxu0 0.0
        %2188 = vmatprep.subr.mxu0 0.0
        %2189 = vmatpush1.msra.mxu0 0.0
        %2190 = vmatprep.subr.mxu0 0.0
        %2191 = vmatpush1.msra.mxu0 0.0
        %2192 = vmatprep.subr.mxu0 0.0
        %2193 = vmatpush1.msra.mxu0 0.0
        %2194 = vmatprep.subr.mxu0 0.0
        %2195 = vmatpush1.msra.mxu0 0.0
        %2196 = vmatprep.subr.mxu0 0.0
        %2197 = vmatpush1.msra.mxu0 0.0
        %2198 = vmatprep.mubr.f32.mxu0 0.0
        %2199 = vmatmul.mubr.f32.gmra.mrb[0].mxu0 %v372
        %v2200 = vpop.f32.mrb[0].mxu0
        %v2201 = vadd.f32 0.0, %v2200
        %v2202 = vpop.f32.mrb[0].mxu0
        %2203 = vmatprep.mubr.f32.mxu0 0.0
        %2204 = vmatmul.mubr.f32.gmra.mrb[0].mxu0 %v373
        %v2205 = vpop.f32.mrb[0].mxu0
        %v2206 = vadd.f32 0.0, %v2205
        %v2207 = vpop.f32.mrb[0].mxu0
        %2208 = vmatprep.mubr.f32.mxu0 0.0
        %2209 = vmatmul.mubr.f32.gmra.mrb[0].mxu0 %v375
        %v2210 = vpop.f32.mrb[0].mxu0
        %v2211 = vadd.f32 0.0, %v2210
        %v2212 = vpop.f32.mrb[0].mxu0
        %2213 = vmatprep.mubr.f32.mxu0 0.0
        %2214 = vmatmul.mubr.f32.gmra.mrb[0].mxu0 %v376
        %v2215 = vpop.f32.mrb[0].mxu0
        %v2216 = vadd.f32 0.0, %v2215
        %v2217 = vpop.f32.mrb[0].mxu0
        %2218 = vdwg.mxu0
        %s2219 = scalar_lea.vmem [#allocation2], 96
        %v2220 = vld [vmem:[%s2219] sm:$0xff]
        %v2221 = vld [vmem:[%s2219 + $0x8] sm:$0xff]
        %v2222 = vld [vmem:[%s2219 + $0x10] sm:$0xff]
        %v2223 = vld [vmem:[%s2219 + $0x18] sm:$0xff]
        %v2224 = vadd.f32 %v2220, %v2201
        %v2225 = vadd.f32 %v2221, %v2206
        %v2226 = vadd.f32 %v2222, %v2211
        %v2227 = vadd.f32 %v2223, %v2216
        %2228 = vst [vmem:[%s2219] sm:$0xff] %v2224
        %2229 = vst [vmem:[%s2219 + $0x8] sm:$0xff] %v2225
        %2230 = vst [vmem:[%s2219 + $0x10] sm:$0xff] %v2226
        %2231 = vst [vmem:[%s2219 + $0x18] sm:$0xff] %v2227
        %s2232 = scalar_lea.vmem %s343, 896
        %v2233 = vld [vmem:[%s2232] sm:$0xff]
        %v2234 = vld [vmem:[%s2232 + $0x8] sm:$0xff]
        %v2235 = vld [vmem:[%s2232 + $0x10] sm:$0xff]
        %v2236 = vld [vmem:[%s2232 + $0x18] sm:$0xff]
        %v2237 = vld [vmem:[%s2232 + $0x20] sm:$0xff]
        %v2238 = vld [vmem:[%s2232 + $0x28] sm:$0xff]
        %v2239 = vld [vmem:[%s2232 + $0x30] sm:$0xff]
        %v2240 = vld [vmem:[%s2232 + $0x38] sm:$0xff]
        %v2241 = vld [vmem:[%s2232 + $0x40] sm:$0xff]
        %v2242 = vld [vmem:[%s2232 + $0x48] sm:$0xff]
        %v2243 = vld [vmem:[%s2232 + $0x50] sm:$0xff]
        %v2244 = vld [vmem:[%s2232 + $0x58] sm:$0xff]
        %v2245 = vld [vmem:[%s2232 + $0x60] sm:$0xff]
        %v2246 = vld [vmem:[%s2232 + $0x68] sm:$0xff]
        %v2247 = vld [vmem:[%s2232 + $0x70] sm:$0xff]
        %v2248 = vld [vmem:[%s2232 + $0x78] sm:$0xff]
        %2249 = vmatprep.subr.mxu0 0.0
        %2250 = vmatpush1.msra.mxu0 %v2233
        %2251 = vmatprep.subr.mxu0 0.0
        %2252 = vmatpush1.msra.mxu0 %v2234
        %2253 = vmatprep.subr.mxu0 0.0
        %2254 = vmatpush1.msra.mxu0 %v2235
        %2255 = vmatprep.subr.mxu0 0.0
        %2256 = vmatpush1.msra.mxu0 %v2236
        %2257 = vmatprep.subr.mxu0 0.0
        %2258 = vmatpush1.msra.mxu0 %v2237
        %2259 = vmatprep.subr.mxu0 0.0
        %2260 = vmatpush1.msra.mxu0 %v2238
        %2261 = vmatprep.subr.mxu0 0.0
        %2262 = vmatpush1.msra.mxu0 %v2239
        %2263 = vmatprep.subr.mxu0 0.0
        %2264 = vmatpush1.msra.mxu0 %v2240
        %2265 = vmatprep.subr.mxu0 0.0
        %2266 = vmatpush1.msra.mxu0 %v2241
        %2267 = vmatprep.subr.mxu0 0.0
        %2268 = vmatpush1.msra.mxu0 %v2242
        %2269 = vmatprep.subr.mxu0 0.0
        %2270 = vmatpush1.msra.mxu0 %v2243
        %2271 = vmatprep.subr.mxu0 0.0
        %2272 = vmatpush1.msra.mxu0 %v2244
        %2273 = vmatprep.subr.mxu0 0.0
        %2274 = vmatpush1.msra.mxu0 %v2245
        %2275 = vmatprep.subr.mxu0 0.0
        %2276 = vmatpush1.msra.mxu0 %v2246
        %2277 = vmatprep.subr.mxu0 0.0
        %2278 = vmatpush1.msra.mxu0 %v2247
        %2279 = vmatprep.subr.mxu0 0.0
        %2280 = vmatpush1.msra.mxu0 %v2248
        %2281 = vmatprep.subr.mxu0 0.0
        %2282 = vmatpush1.msra.mxu0 0.0
        %2283 = vmatprep.subr.mxu0 0.0
        %2284 = vmatpush1.msra.mxu0 0.0
        %2285 = vmatprep.subr.mxu0 0.0
        %2286 = vmatpush1.msra.mxu0 0.0
        %2287 = vmatprep.subr.mxu0 0.0
        %2288 = vmatpush1.msra.mxu0 0.0
        %2289 = vmatprep.subr.mxu0 0.0
        %2290 = vmatpush1.msra.mxu0 0.0
        %2291 = vmatprep.subr.mxu0 0.0
        %2292 = vmatpush1.msra.mxu0 0.0
        %2293 = vmatprep.subr.mxu0 0.0
        %2294 = vmatpush1.msra.mxu0 0.0
        %2295 = vmatprep.subr.mxu0 0.0
        %2296 = vmatpush1.msra.mxu0 0.0
        %2297 = vmatprep.subr.mxu0 0.0
        %2298 = vmatpush1.msra.mxu0 0.0
        %2299 = vmatprep.subr.mxu0 0.0
        %2300 = vmatpush1.msra.mxu0 0.0
        %2301 = vmatprep.subr.mxu0 0.0
        %2302 = vmatpush1.msra.mxu0 0.0
        %2303 = vmatprep.subr.mxu0 0.0
        %2304 = vmatpush1.msra.mxu0 0.0
        %2305 = vmatprep.subr.mxu0 0.0
        %2306 = vmatpush1.msra.mxu0 0.0
        %2307 = vmatprep.subr.mxu0 0.0
        %2308 = vmatpush1.msra.mxu0 0.0
        %2309 = vmatprep.subr.mxu0 0.0
        %2310 = vmatpush1.msra.mxu0 0.0
        %2311 = vmatprep.subr.mxu0 0.0
        %2312 = vmatpush1.msra.mxu0 0.0
        %2313 = vmatprep.mubr.f32.mxu0 0.0
        %2314 = vmatmul.mubr.f32.gmra.mrb[0].mxu0 %v609
        %v2315 = vpop.f32.mrb[0].mxu0
        %v2316 = vadd.f32 0.0, %v2315
        %v2317 = vpop.f32.mrb[0].mxu0
        %2318 = vmatprep.mubr.f32.mxu0 0.0
        %2319 = vmatmul.mubr.f32.gmra.mrb[0].mxu0 %v611
        %v2320 = vpop.f32.mrb[0].mxu0
        %v2321 = vadd.f32 0.0, %v2320
        %v2322 = vpop.f32.mrb[0].mxu0
        %2323 = vmatprep.mubr.f32.mxu0 0.0
        %2324 = vmatmul.mubr.f32.gmra.mrb[0].mxu0 %v614
        %v2325 = vpop.f32.mrb[0].mxu0
        %v2326 = vadd.f32 0.0, %v2325
        %v2327 = vpop.f32.mrb[0].mxu0
        %2328 = vmatprep.mubr.f32.mxu0 0.0
        %2329 = vmatmul.mubr.f32.gmra.mrb[0].mxu0 %v616
        %v2330 = vpop.f32.mrb[0].mxu0
        %v2331 = vadd.f32 0.0, %v2330
        %v2332 = vpop.f32.mrb[0].mxu0
        %2333 = vmatprep.mubr.f32.mxu0 0.0
        %2334 = vmatmul.mubr.f32.gmra.mrb[0].mxu0 %v619
        %v2335 = vpop.f32.mrb[0].mxu0
        %v2336 = vadd.f32 0.0, %v2335
        %v2337 = vpop.f32.mrb[0].mxu0
        %2338 = vmatprep.mubr.f32.mxu0 0.0
        %2339 = vmatmul.mubr.f32.gmra.mrb[0].mxu0 %v621
        %v2340 = vpop.f32.mrb[0].mxu0
        %v2341 = vadd.f32 0.0, %v2340
        %v2342 = vpop.f32.mrb[0].mxu0
        %2343 = vmatprep.mubr.f32.mxu0 0.0
        %2344 = vmatmul.mubr.f32.gmra.mrb[0].mxu0 %v624
        %v2345 = vpop.f32.mrb[0].mxu0
        %v2346 = vadd.f32 0.0, %v2345
        %v2347 = vpop.f32.mrb[0].mxu0
        %2348 = vmatprep.mubr.f32.mxu0 0.0
        %2349 = vmatmul.mubr.f32.gmra.mrb[0].mxu0 %v626
        %v2350 = vpop.f32.mrb[0].mxu0
        %v2351 = vadd.f32 0.0, %v2350
        %v2352 = vpop.f32.mrb[0].mxu0
        %2353 = vmatprep.mubr.f32.mxu0 0.0
        %2354 = vmatmul.mubr.f32.gmra.mrb[0].mxu0 %v629
        %v2355 = vpop.f32.mrb[0].mxu0
        %v2356 = vadd.f32 0.0, %v2355
        %v2357 = vpop.f32.mrb[0].mxu0
        %2358 = vmatprep.mubr.f32.mxu0 0.0
        %2359 = vmatmul.mubr.f32.gmra.mrb[0].mxu0 %v631
        %v2360 = vpop.f32.mrb[0].mxu0
        %v2361 = vadd.f32 0.0, %v2360
        %v2362 = vpop.f32.mrb[0].mxu0
        %2363 = vmatprep.mubr.f32.mxu0 0.0
        %2364 = vmatmul.mubr.f32.gmra.mrb[0].mxu0 %v634
        %v2365 = vpop.f32.mrb[0].mxu0
        %v2366 = vadd.f32 0.0, %v2365
        %v2367 = vpop.f32.mrb[0].mxu0
        %2368 = vmatprep.mubr.f32.mxu0 0.0
        %2369 = vmatmul.mubr.f32.gmra.mrb[0].mxu0 %v636
        %v2370 = vpop.f32.mrb[0].mxu0
        %v2371 = vadd.f32 0.0, %v2370
        %v2372 = vpop.f32.mrb[0].mxu0
        %2373 = vdwg.mxu0
        %v2374 = vld [vmem:[#allocation2] sm:$0xff]
        %v2375 = vld [vmem:[#allocation2 + $0x8] sm:$0xff]
        %v2376 = vld [vmem:[#allocation2 + $0x10] sm:$0xff]
        %v2377 = vld [vmem:[#allocation2 + $0x18] sm:$0xff]
        %v2378 = vld [vmem:[#allocation2 + $0x20] sm:$0xff]
        %v2379 = vld [vmem:[#allocation2 + $0x28] sm:$0xff]
        %v2380 = vld [vmem:[#allocation2 + $0x30] sm:$0xff]
        %v2381 = vld [vmem:[#allocation2 + $0x38] sm:$0xff]
        %v2382 = vld [vmem:[#allocation2 + $0x40] sm:$0xff]
        %v2383 = vld [vmem:[#allocation2 + $0x48] sm:$0xff]
        %v2384 = vld [vmem:[#allocation2 + $0x50] sm:$0xff]
        %v2385 = vld [vmem:[#allocation2 + $0x58] sm:$0xff]
        %v2386 = vadd.f32 %v2374, %v2316
        %v2387 = vadd.f32 %v2375, %v2321
        %v2388 = vadd.f32 %v2376, %v2326
        %v2389 = vadd.f32 %v2377, %v2331
        %v2390 = vadd.f32 %v2378, %v2336
        %v2391 = vadd.f32 %v2379, %v2341
        %v2392 = vadd.f32 %v2380, %v2346
        %v2393 = vadd.f32 %v2381, %v2351
        %v2394 = vadd.f32 %v2382, %v2356
        %v2395 = vadd.f32 %v2383, %v2361
        %v2396 = vadd.f32 %v2384, %v2366
        %v2397 = vadd.f32 %v2385, %v2371
        %2398 = vst [vmem:[#allocation2] sm:$0xff] %v2386
        %2399 = vst [vmem:[#allocation2 + $0x8] sm:$0xff] %v2387
        %2400 = vst [vmem:[#allocation2 + $0x10] sm:$0xff] %v2388
        %2401 = vst [vmem:[#allocation2 + $0x18] sm:$0xff] %v2389
        %2402 = vst [vmem:[#allocation2 + $0x20] sm:$0xff] %v2390
        %2403 = vst [vmem:[#allocation2 + $0x28] sm:$0xff] %v2391
        %2404 = vst [vmem:[#allocation2 + $0x30] sm:$0xff] %v2392
        %2405 = vst [vmem:[#allocation2 + $0x38] sm:$0xff] %v2393
        %2406 = vst [vmem:[#allocation2 + $0x40] sm:$0xff] %v2394
        %2407 = vst [vmem:[#allocation2 + $0x48] sm:$0xff] %v2395
        %2408 = vst [vmem:[#allocation2 + $0x50] sm:$0xff] %v2396
        %2409 = vst [vmem:[#allocation2 + $0x58] sm:$0xff] %v2397
        %v2413 = vrot.slane %v375, 1
        %v2414 = vrot.slane %v376, 1
        %v2415 = vsel %vm596, %v2413, %v2414
        %v2416 = vrot.slane %v377, 1
        %v2417 = vsel %vm596, %v2414, %v2416
        %2420 = vmatprep.subr.mxu0 0.0
        %2421 = vmatpush1.msra.mxu0 %v2233
        %2422 = vmatprep.subr.mxu0 0.0
        %2423 = vmatpush1.msra.mxu0 %v2234
        %2424 = vmatprep.subr.mxu0 0.0
        %2425 = vmatpush1.msra.mxu0 %v2235
        %2426 = vmatprep.subr.mxu0 0.0
        %2427 = vmatpush1.msra.mxu0 %v2236
        %2428 = vmatprep.subr.mxu0 0.0
        %2429 = vmatpush1.msra.mxu0 %v2237
        %2430 = vmatprep.subr.mxu0 0.0
        %2431 = vmatpush1.msra.mxu0 %v2238
        %2432 = vmatprep.subr.mxu0 0.0
        %2433 = vmatpush1.msra.mxu0 %v2239
        %2434 = vmatprep.subr.mxu0 0.0
        %2435 = vmatpush1.msra.mxu0 %v2240
        %2436 = vmatprep.subr.mxu0 0.0
        %2437 = vmatpush1.msra.mxu0 %v2241
        %2438 = vmatprep.subr.mxu0 0.0
        %2439 = vmatpush1.msra.mxu0 %v2242
        %2440 = vmatprep.subr.mxu0 0.0
        %2441 = vmatpush1.msra.mxu0 %v2243
        %2442 = vmatprep.subr.mxu0 0.0
        %2443 = vmatpush1.msra.mxu0 %v2244
        %2444 = vmatprep.subr.mxu0 0.0
        %2445 = vmatpush1.msra.mxu0 %v2245
        %2446 = vmatprep.subr.mxu0 0.0
        %2447 = vmatpush1.msra.mxu0 %v2246
        %2448 = vmatprep.subr.mxu0 0.0
        %2449 = vmatpush1.msra.mxu0 %v2247
        %2450 = vmatprep.subr.mxu0 0.0
        %2451 = vmatpush1.msra.mxu0 %v2248
        %2452 = vmatprep.subr.mxu0 0.0
        %2453 = vmatpush1.msra.mxu0 0.0
        %2454 = vmatprep.subr.mxu0 0.0
        %2455 = vmatpush1.msra.mxu0 0.0
        %2456 = vmatprep.subr.mxu0 0.0
        %2457 = vmatpush1.msra.mxu0 0.0
        %2458 = vmatprep.subr.mxu0 0.0
        %2459 = vmatpush1.msra.mxu0 0.0
        %2460 = vmatprep.subr.mxu0 0.0
        %2461 = vmatpush1.msra.mxu0 0.0
        %2462 = vmatprep.subr.mxu0 0.0
        %2463 = vmatpush1.msra.mxu0 0.0
        %2464 = vmatprep.subr.mxu0 0.0
        %2465 = vmatpush1.msra.mxu0 0.0
        %2466 = vmatprep.subr.mxu0 0.0
        %2467 = vmatpush1.msra.mxu0 0.0
        %2468 = vmatprep.subr.mxu0 0.0
        %2469 = vmatpush1.msra.mxu0 0.0
        %2470 = vmatprep.subr.mxu0 0.0
        %2471 = vmatpush1.msra.mxu0 0.0
        %2472 = vmatprep.subr.mxu0 0.0
        %2473 = vmatpush1.msra.mxu0 0.0
        %2474 = vmatprep.subr.mxu0 0.0
        %2475 = vmatpush1.msra.mxu0 0.0
        %2476 = vmatprep.subr.mxu0 0.0
        %2477 = vmatpush1.msra.mxu0 0.0
        %2478 = vmatprep.subr.mxu0 0.0
        %2479 = vmatpush1.msra.mxu0 0.0
        %2480 = vmatprep.subr.mxu0 0.0
        %2481 = vmatpush1.msra.mxu0 0.0
        %2482 = vmatprep.subr.mxu0 0.0
        %2483 = vmatpush1.msra.mxu0 0.0
        %2484 = vmatprep.mubr.f32.mxu0 0.0
        %2485 = vmatmul.mubr.f32.gmra.mrb[0].mxu0 %v1588
        %v2486 = vpop.f32.mrb[0].mxu0
        %v2487 = vadd.f32 0.0, %v2486
        %v2488 = vpop.f32.mrb[0].mxu0
        %2489 = vmatprep.mubr.f32.mxu0 0.0
        %2490 = vmatmul.mubr.f32.gmra.mrb[0].mxu0 %v1590
        %v2491 = vpop.f32.mrb[0].mxu0
        %v2492 = vadd.f32 0.0, %v2491
        %v2493 = vpop.f32.mrb[0].mxu0
        %2494 = vmatprep.mubr.f32.mxu0 0.0
        %2495 = vmatmul.mubr.f32.gmra.mrb[0].mxu0 %v2415
        %v2496 = vpop.f32.mrb[0].mxu0
        %v2497 = vadd.f32 0.0, %v2496
        %v2498 = vpop.f32.mrb[0].mxu0
        %2499 = vmatprep.mubr.f32.mxu0 0.0
        %2500 = vmatmul.mubr.f32.gmra.mrb[0].mxu0 %v2417
        %v2501 = vpop.f32.mrb[0].mxu0
        %v2502 = vadd.f32 0.0, %v2501
        %v2503 = vpop.f32.mrb[0].mxu0
        %2504 = vdwg.mxu0
        %v2505 = vld [vmem:[%s2219] sm:$0xff]
        %v2506 = vld [vmem:[%s2219 + $0x8] sm:$0xff]
        %v2507 = vld [vmem:[%s2219 + $0x10] sm:$0xff]
        %v2508 = vld [vmem:[%s2219 + $0x18] sm:$0xff]
        %v2509 = vadd.f32 %v2505, %v2487
        %v2510 = vadd.f32 %v2506, %v2492
        %v2511 = vadd.f32 %v2507, %v2497
        %v2512 = vadd.f32 %v2508, %v2502
        %2513 = vst [vmem:[%s2219] sm:$0xff] %v2509
        %2514 = vst [vmem:[%s2219 + $0x8] sm:$0xff] %v2510
        %2515 = vst [vmem:[%s2219 + $0x10] sm:$0xff] %v2511
        %2516 = vst [vmem:[%s2219 + $0x18] sm:$0xff] %v2512
        %s2517 = scalar_lea.vmem %s343, 1024
        %v2518 = vld [vmem:[%s2517] sm:$0xff]
        %v2519 = vld [vmem:[%s2517 + $0x8] sm:$0xff]
        %v2520 = vld [vmem:[%s2517 + $0x10] sm:$0xff]
        %v2521 = vld [vmem:[%s2517 + $0x18] sm:$0xff]
        %v2522 = vld [vmem:[%s2517 + $0x20] sm:$0xff]
        %v2523 = vld [vmem:[%s2517 + $0x28] sm:$0xff]
        %v2524 = vld [vmem:[%s2517 + $0x30] sm:$0xff]
        %v2525 = vld [vmem:[%s2517 + $0x38] sm:$0xff]
        %v2526 = vld [vmem:[%s2517 + $0x40] sm:$0xff]
        %v2527 = vld [vmem:[%s2517 + $0x48] sm:$0xff]
        %v2528 = vld [vmem:[%s2517 + $0x50] sm:$0xff]
        %v2529 = vld [vmem:[%s2517 + $0x58] sm:$0xff]
        %v2530 = vld [vmem:[%s2517 + $0x60] sm:$0xff]
        %v2531 = vld [vmem:[%s2517 + $0x68] sm:$0xff]
        %v2532 = vld [vmem:[%s2517 + $0x70] sm:$0xff]
        %v2533 = vld [vmem:[%s2517 + $0x78] sm:$0xff]
        %2534 = vmatprep.subr.mxu0 0.0
        %2535 = vmatpush1.msra.mxu0 %v2518
        %2536 = vmatprep.subr.mxu0 0.0
        %2537 = vmatpush1.msra.mxu0 %v2519
        %2538 = vmatprep.subr.mxu0 0.0
        %2539 = vmatpush1.msra.mxu0 %v2520
        %2540 = vmatprep.subr.mxu0 0.0
        %2541 = vmatpush1.msra.mxu0 %v2521
        %2542 = vmatprep.subr.mxu0 0.0
        %2543 = vmatpush1.msra.mxu0 %v2522
        %2544 = vmatprep.subr.mxu0 0.0
        %2545 = vmatpush1.msra.mxu0 %v2523
        %2546 = vmatprep.subr.mxu0 0.0
        %2547 = vmatpush1.msra.mxu0 %v2524
        %2548 = vmatprep.subr.mxu0 0.0
        %2549 = vmatpush1.msra.mxu0 %v2525
        %2550 = vmatprep.subr.mxu0 0.0
        %2551 = vmatpush1.msra.mxu0 %v2526
        %2552 = vmatprep.subr.mxu0 0.0
        %2553 = vmatpush1.msra.mxu0 %v2527
        %2554 = vmatprep.subr.mxu0 0.0
        %2555 = vmatpush1.msra.mxu0 %v2528
        %2556 = vmatprep.subr.mxu0 0.0
        %2557 = vmatpush1.msra.mxu0 %v2529
        %2558 = vmatprep.subr.mxu0 0.0
        %2559 = vmatpush1.msra.mxu0 %v2530
        %2560 = vmatprep.subr.mxu0 0.0
        %2561 = vmatpush1.msra.mxu0 %v2531
        %2562 = vmatprep.subr.mxu0 0.0
        %2563 = vmatpush1.msra.mxu0 %v2532
        %2564 = vmatprep.subr.mxu0 0.0
        %2565 = vmatpush1.msra.mxu0 %v2533
        %2566 = vmatprep.subr.mxu0 0.0
        %2567 = vmatpush1.msra.mxu0 0.0
        %2568 = vmatprep.subr.mxu0 0.0
        %2569 = vmatpush1.msra.mxu0 0.0
        %2570 = vmatprep.subr.mxu0 0.0
        %2571 = vmatpush1.msra.mxu0 0.0
        %2572 = vmatprep.subr.mxu0 0.0
        %2573 = vmatpush1.msra.mxu0 0.0
        %2574 = vmatprep.subr.mxu0 0.0
        %2575 = vmatpush1.msra.mxu0 0.0
        %2576 = vmatprep.subr.mxu0 0.0
        %2577 = vmatpush1.msra.mxu0 0.0
        %2578 = vmatprep.subr.mxu0 0.0
        %2579 = vmatpush1.msra.mxu0 0.0
        %2580 = vmatprep.subr.mxu0 0.0
        %2581 = vmatpush1.msra.mxu0 0.0
        %2582 = vmatprep.subr.mxu0 0.0
        %2583 = vmatpush1.msra.mxu0 0.0
        %2584 = vmatprep.subr.mxu0 0.0
        %2585 = vmatpush1.msra.mxu0 0.0
        %2586 = vmatprep.subr.mxu0 0.0
        %2587 = vmatpush1.msra.mxu0 0.0
        %2588 = vmatprep.subr.mxu0 0.0
        %2589 = vmatpush1.msra.mxu0 0.0
        %2590 = vmatprep.subr.mxu0 0.0
        %2591 = vmatpush1.msra.mxu0 0.0
        %2592 = vmatprep.subr.mxu0 0.0
        %2593 = vmatpush1.msra.mxu0 0.0
        %2594 = vmatprep.subr.mxu0 0.0
        %2595 = vmatpush1.msra.mxu0 0.0
        %2596 = vmatprep.subr.mxu0 0.0
        %2597 = vmatpush1.msra.mxu0 0.0
        %2598 = vmatprep.mubr.f32.mxu0 0.0
        %2599 = vmatmul.mubr.f32.gmra.mrb[0].mxu0 %v876
        %v2600 = vpop.f32.mrb[0].mxu0
        %v2601 = vadd.f32 0.0, %v2600
        %v2602 = vpop.f32.mrb[0].mxu0
        %2603 = vmatprep.mubr.f32.mxu0 0.0
        %2604 = vmatmul.mubr.f32.gmra.mrb[0].mxu0 %v878
        %v2605 = vpop.f32.mrb[0].mxu0
        %v2606 = vadd.f32 0.0, %v2605
        %v2607 = vpop.f32.mrb[0].mxu0
        %2608 = vmatprep.mubr.f32.mxu0 0.0
        %2609 = vmatmul.mubr.f32.gmra.mrb[0].mxu0 %v881
        %v2610 = vpop.f32.mrb[0].mxu0
        %v2611 = vadd.f32 0.0, %v2610
        %v2612 = vpop.f32.mrb[0].mxu0
        %2613 = vmatprep.mubr.f32.mxu0 0.0
        %2614 = vmatmul.mubr.f32.gmra.mrb[0].mxu0 %v883
        %v2615 = vpop.f32.mrb[0].mxu0
        %v2616 = vadd.f32 0.0, %v2615
        %v2617 = vpop.f32.mrb[0].mxu0
        %2618 = vmatprep.mubr.f32.mxu0 0.0
        %2619 = vmatmul.mubr.f32.gmra.mrb[0].mxu0 %v886
        %v2620 = vpop.f32.mrb[0].mxu0
        %v2621 = vadd.f32 0.0, %v2620
        %v2622 = vpop.f32.mrb[0].mxu0
        %2623 = vmatprep.mubr.f32.mxu0 0.0
        %2624 = vmatmul.mubr.f32.gmra.mrb[0].mxu0 %v888
        %v2625 = vpop.f32.mrb[0].mxu0
        %v2626 = vadd.f32 0.0, %v2625
        %v2627 = vpop.f32.mrb[0].mxu0
        %2628 = vmatprep.mubr.f32.mxu0 0.0
        %2629 = vmatmul.mubr.f32.gmra.mrb[0].mxu0 %v891
        %v2630 = vpop.f32.mrb[0].mxu0
        %v2631 = vadd.f32 0.0, %v2630
        %v2632 = vpop.f32.mrb[0].mxu0
        %2633 = vmatprep.mubr.f32.mxu0 0.0
        %2634 = vmatmul.mubr.f32.gmra.mrb[0].mxu0 %v893
        %v2635 = vpop.f32.mrb[0].mxu0
        %v2636 = vadd.f32 0.0, %v2635
        %v2637 = vpop.f32.mrb[0].mxu0
        %2638 = vmatprep.mubr.f32.mxu0 0.0
        %2639 = vmatmul.mubr.f32.gmra.mrb[0].mxu0 %v896
        %v2640 = vpop.f32.mrb[0].mxu0
        %v2641 = vadd.f32 0.0, %v2640
        %v2642 = vpop.f32.mrb[0].mxu0
        %2643 = vmatprep.mubr.f32.mxu0 0.0
        %2644 = vmatmul.mubr.f32.gmra.mrb[0].mxu0 %v898
        %v2645 = vpop.f32.mrb[0].mxu0
        %v2646 = vadd.f32 0.0, %v2645
        %v2647 = vpop.f32.mrb[0].mxu0
        %2648 = vmatprep.mubr.f32.mxu0 0.0
        %2649 = vmatmul.mubr.f32.gmra.mrb[0].mxu0 %v901
        %v2650 = vpop.f32.mrb[0].mxu0
        %v2651 = vadd.f32 0.0, %v2650
        %v2652 = vpop.f32.mrb[0].mxu0
        %2653 = vmatprep.mubr.f32.mxu0 0.0
        %2654 = vmatmul.mubr.f32.gmra.mrb[0].mxu0 %v903
        %v2655 = vpop.f32.mrb[0].mxu0
        %v2656 = vadd.f32 0.0, %v2655
        %v2657 = vpop.f32.mrb[0].mxu0
        %2658 = vdwg.mxu0
        %v2659 = vld [vmem:[#allocation2] sm:$0xff]
        %v2660 = vld [vmem:[#allocation2 + $0x8] sm:$0xff]
        %v2661 = vld [vmem:[#allocation2 + $0x10] sm:$0xff]
        %v2662 = vld [vmem:[#allocation2 + $0x18] sm:$0xff]
        %v2663 = vld [vmem:[#allocation2 + $0x20] sm:$0xff]
        %v2664 = vld [vmem:[#allocation2 + $0x28] sm:$0xff]
        %v2665 = vld [vmem:[#allocation2 + $0x30] sm:$0xff]
        %v2666 = vld [vmem:[#allocation2 + $0x38] sm:$0xff]
        %v2667 = vld [vmem:[#allocation2 + $0x40] sm:$0xff]
        %v2668 = vld [vmem:[#allocation2 + $0x48] sm:$0xff]
        %v2669 = vld [vmem:[#allocation2 + $0x50] sm:$0xff]
        %v2670 = vld [vmem:[#allocation2 + $0x58] sm:$0xff]
        %v2671 = vadd.f32 %v2659, %v2601
        %v2672 = vadd.f32 %v2660, %v2606
        %v2673 = vadd.f32 %v2661, %v2611
        %v2674 = vadd.f32 %v2662, %v2616
        %v2675 = vadd.f32 %v2663, %v2621
        %v2676 = vadd.f32 %v2664, %v2626
        %v2677 = vadd.f32 %v2665, %v2631
        %v2678 = vadd.f32 %v2666, %v2636
        %v2679 = vadd.f32 %v2667, %v2641
        %v2680 = vadd.f32 %v2668, %v2646
        %v2681 = vadd.f32 %v2669, %v2651
        %v2682 = vadd.f32 %v2670, %v2656
        %2683 = vst [vmem:[#allocation2] sm:$0xff] %v2671
        %2684 = vst [vmem:[#allocation2 + $0x8] sm:$0xff] %v2672
        %2685 = vst [vmem:[#allocation2 + $0x10] sm:$0xff] %v2673
        %2686 = vst [vmem:[#allocation2 + $0x18] sm:$0xff] %v2674
        %2687 = vst [vmem:[#allocation2 + $0x20] sm:$0xff] %v2675
        %2688 = vst [vmem:[#allocation2 + $0x28] sm:$0xff] %v2676
        %2689 = vst [vmem:[#allocation2 + $0x30] sm:$0xff] %v2677
        %2690 = vst [vmem:[#allocation2 + $0x38] sm:$0xff] %v2678
        %2691 = vst [vmem:[#allocation2 + $0x40] sm:$0xff] %v2679
        %2692 = vst [vmem:[#allocation2 + $0x48] sm:$0xff] %v2680
        %2693 = vst [vmem:[#allocation2 + $0x50] sm:$0xff] %v2681
        %2694 = vst [vmem:[#allocation2 + $0x58] sm:$0xff] %v2682
        %v2695 = vrot.slane %v375, 2
        %v2696 = vrot.slane %v376, 2
        %v2697 = vsel %vm863, %v2695, %v2696
        %v2698 = vrot.slane %v377, 2
        %v2699 = vsel %vm863, %v2696, %v2698
        %2702 = vmatprep.subr.mxu0 0.0
        %2703 = vmatpush1.msra.mxu0 %v2518
        %2704 = vmatprep.subr.mxu0 0.0
        %2705 = vmatpush1.msra.mxu0 %v2519
        %2706 = vmatprep.subr.mxu0 0.0
        %2707 = vmatpush1.msra.mxu0 %v2520
        %2708 = vmatprep.subr.mxu0 0.0
        %2709 = vmatpush1.msra.mxu0 %v2521
        %2710 = vmatprep.subr.mxu0 0.0
        %2711 = vmatpush1.msra.mxu0 %v2522
        %2712 = vmatprep.subr.mxu0 0.0
        %2713 = vmatpush1.msra.mxu0 %v2523
        %2714 = vmatprep.subr.mxu0 0.0
        %2715 = vmatpush1.msra.mxu0 %v2524
        %2716 = vmatprep.subr.mxu0 0.0
        %2717 = vmatpush1.msra.mxu0 %v2525
        %2718 = vmatprep.subr.mxu0 0.0
        %2719 = vmatpush1.msra.mxu0 %v2526
        %2720 = vmatprep.subr.mxu0 0.0
        %2721 = vmatpush1.msra.mxu0 %v2527
        %2722 = vmatprep.subr.mxu0 0.0
        %2723 = vmatpush1.msra.mxu0 %v2528
        %2724 = vmatprep.subr.mxu0 0.0
        %2725 = vmatpush1.msra.mxu0 %v2529
        %2726 = vmatprep.subr.mxu0 0.0
        %2727 = vmatpush1.msra.mxu0 %v2530
        %2728 = vmatprep.subr.mxu0 0.0
        %2729 = vmatpush1.msra.mxu0 %v2531
        %2730 = vmatprep.subr.mxu0 0.0
        %2731 = vmatpush1.msra.mxu0 %v2532
        %2732 = vmatprep.subr.mxu0 0.0
        %2733 = vmatpush1.msra.mxu0 %v2533
        %2734 = vmatprep.subr.mxu0 0.0
        %2735 = vmatpush1.msra.mxu0 0.0
        %2736 = vmatprep.subr.mxu0 0.0
        %2737 = vmatpush1.msra.mxu0 0.0
        %2738 = vmatprep.subr.mxu0 0.0
        %2739 = vmatpush1.msra.mxu0 0.0
        %2740 = vmatprep.subr.mxu0 0.0
        %2741 = vmatpush1.msra.mxu0 0.0
        %2742 = vmatprep.subr.mxu0 0.0
        %2743 = vmatpush1.msra.mxu0 0.0
        %2744 = vmatprep.subr.mxu0 0.0
        %2745 = vmatpush1.msra.mxu0 0.0
        %2746 = vmatprep.subr.mxu0 0.0
        %2747 = vmatpush1.msra.mxu0 0.0
        %2748 = vmatprep.subr.mxu0 0.0
        %2749 = vmatpush1.msra.mxu0 0.0
        %2750 = vmatprep.subr.mxu0 0.0
        %2751 = vmatpush1.msra.mxu0 0.0
        %2752 = vmatprep.subr.mxu0 0.0
        %2753 = vmatpush1.msra.mxu0 0.0
        %2754 = vmatprep.subr.mxu0 0.0
        %2755 = vmatpush1.msra.mxu0 0.0
        %2756 = vmatprep.subr.mxu0 0.0
        %2757 = vmatpush1.msra.mxu0 0.0
        %2758 = vmatprep.subr.mxu0 0.0
        %2759 = vmatpush1.msra.mxu0 0.0
        %2760 = vmatprep.subr.mxu0 0.0
        %2761 = vmatpush1.msra.mxu0 0.0
        %2762 = vmatprep.subr.mxu0 0.0
        %2763 = vmatpush1.msra.mxu0 0.0
        %2764 = vmatprep.subr.mxu0 0.0
        %2765 = vmatpush1.msra.mxu0 0.0
        %2766 = vmatprep.mubr.f32.mxu0 0.0
        %2767 = vmatmul.mubr.f32.gmra.mrb[0].mxu0 %v1870
        %v2768 = vpop.f32.mrb[0].mxu0
        %v2769 = vadd.f32 0.0, %v2768
        %v2770 = vpop.f32.mrb[0].mxu0
        %2771 = vmatprep.mubr.f32.mxu0 0.0
        %2772 = vmatmul.mubr.f32.gmra.mrb[0].mxu0 %v1872
        %v2773 = vpop.f32.mrb[0].mxu0
        %v2774 = vadd.f32 0.0, %v2773
        %v2775 = vpop.f32.mrb[0].mxu0
        %2776 = vmatprep.mubr.f32.mxu0 0.0
        %2777 = vmatmul.mubr.f32.gmra.mrb[0].mxu0 %v2697
        %v2778 = vpop.f32.mrb[0].mxu0
        %v2779 = vadd.f32 0.0, %v2778
        %v2780 = vpop.f32.mrb[0].mxu0
        %2781 = vmatprep.mubr.f32.mxu0 0.0
        %2782 = vmatmul.mubr.f32.gmra.mrb[0].mxu0 %v2699
        %v2783 = vpop.f32.mrb[0].mxu0
        %v2784 = vadd.f32 0.0, %v2783
        %v2785 = vpop.f32.mrb[0].mxu0
        %2786 = vdwg.mxu0
        %v2787 = vld [vmem:[%s2219] sm:$0xff]
        %v2788 = vld [vmem:[%s2219 + $0x8] sm:$0xff]
        %v2789 = vld [vmem:[%s2219 + $0x10] sm:$0xff]
        %v2790 = vld [vmem:[%s2219 + $0x18] sm:$0xff]
        %v2791 = vadd.f32 %v2787, %v2769
        %v2792 = vadd.f32 %v2788, %v2774
        %v2793 = vadd.f32 %v2789, %v2779
        %v2794 = vadd.f32 %v2790, %v2784
        %2795 = vst [vmem:[%s2219] sm:$0xff] %v2791
        %2796 = vst [vmem:[%s2219 + $0x8] sm:$0xff] %v2792
        %2797 = vst [vmem:[%s2219 + $0x10] sm:$0xff] %v2793
        %2798 = vst [vmem:[%s2219 + $0x18] sm:$0xff] %v2794
        %v2799 = vld [vmem:[#allocation2] sm:$0xff]
        %v2800 = vld [vmem:[#allocation2 + $0x8] sm:$0xff]
        %v2801 = vld [vmem:[#allocation2 + $0x10] sm:$0xff]
        %v2802 = vld [vmem:[#allocation2 + $0x18] sm:$0xff]
        %v2803 = vld [vmem:[#allocation2 + $0x20] sm:$0xff]
        %v2804 = vld [vmem:[#allocation2 + $0x28] sm:$0xff]
        %v2805 = vld [vmem:[#allocation2 + $0x30] sm:$0xff]
        %v2806 = vld [vmem:[#allocation2 + $0x38] sm:$0xff]
        %v2807 = vld [vmem:[#allocation2 + $0x40] sm:$0xff]
        %v2808 = vld [vmem:[#allocation2 + $0x48] sm:$0xff]
        %v2809 = vld [vmem:[#allocation2 + $0x50] sm:$0xff]
        %v2810 = vld [vmem:[#allocation2 + $0x58] sm:$0xff]
        %v2811 = vld [vmem:[#allocation2 + $0x60] sm:$0xff]
        %v2812 = vld [vmem:[#allocation2 + $0x68] sm:$0xff]
        %v2813 = vld [vmem:[#allocation2 + $0x70] sm:$0xff]
        %v2814 = vld [vmem:[#allocation2 + $0x78] sm:$0xff]
        %v2815 = vld [vmem:[%s346] sm:$0x1]
        %v2817 = vlaneseq
        %v2818 = vshrl.u32 %v2817, 7
        %v2819 = vsub.s32 0, %v2818
        %v2820 = vrot.slane %v2815, %v2819
        %v2822 = vadd.f32 %v2799, %v2820
        %v2823 = vadd.f32 %v2800, %v2820
        %v2824 = vadd.f32 %v2801, %v2820
        %v2825 = vadd.f32 %v2802, %v2820
        %v2826 = vadd.f32 %v2803, %v2820
        %v2827 = vadd.f32 %v2804, %v2820
        %v2828 = vadd.f32 %v2805, %v2820
        %v2829 = vadd.f32 %v2806, %v2820
        %v2830 = vadd.f32 %v2807, %v2820
        %v2831 = vadd.f32 %v2808, %v2820
        %v2832 = vadd.f32 %v2809, %v2820
        %v2833 = vadd.f32 %v2810, %v2820
        %v2834 = vadd.f32 %v2811, %v2820
        %v2835 = vadd.f32 %v2812, %v2820
        %v2836 = vadd.f32 %v2813, %v2820
        %v2837 = vadd.f32 %v2814, %v2820
        %v2838 = vmax.f32 %v2822, 0.0
        %v2839 = vmax.f32 %v2823, 0.0
        %v2840 = vmax.f32 %v2824, 0.0
        %v2841 = vmax.f32 %v2825, 0.0
        %v2842 = vmax.f32 %v2826, 0.0
        %v2843 = vmax.f32 %v2827, 0.0
        %v2844 = vmax.f32 %v2828, 0.0
        %v2845 = vmax.f32 %v2829, 0.0
        %v2846 = vmax.f32 %v2830, 0.0
        %v2847 = vmax.f32 %v2831, 0.0
        %v2848 = vmax.f32 %v2832, 0.0
        %v2849 = vmax.f32 %v2833, 0.0
        %v2850 = vmax.f32 %v2834, 0.0
        %v2851 = vmax.f32 %v2835, 0.0
        %v2852 = vmax.f32 %v2836, 0.0
        %v2853 = vmax.f32 %v2837, 0.0
        %2854 = vst [vmem:[%s303] sm:$0xff] %v2838
        %2855 = vst [vmem:[%s303 + $0x8] sm:$0xff] %v2839
        %2856 = vst [vmem:[%s303 + $0x10] sm:$0xff] %v2840
        %2857 = vst [vmem:[%s303 + $0x18] sm:$0xff] %v2841
        %2858 = vst [vmem:[%s303 + $0x20] sm:$0xff] %v2842
        %2859 = vst [vmem:[%s303 + $0x28] sm:$0xff] %v2843
        %2860 = vst [vmem:[%s303 + $0x30] sm:$0xff] %v2844
        %2861 = vst [vmem:[%s303 + $0x38] sm:$0xff] %v2845
        %2862 = vst [vmem:[%s303 + $0x40] sm:$0xff] %v2846
        %2863 = vst [vmem:[%s303 + $0x48] sm:$0xff] %v2847
        %2864 = vst [vmem:[%s303 + $0x50] sm:$0xff] %v2848
        %2865 = vst [vmem:[%s303 + $0x58] sm:$0xff] %v2849
        %2866 = vst [vmem:[%s303 + $0x60] sm:$0xff] %v2850
        %2867 = vst [vmem:[%s303 + $0x68] sm:$0xff] %v2851
        %2868 = vst [vmem:[%s303 + $0x70] sm:$0xff] %v2852
        %2869 = vst [vmem:[%s303 + $0x78] sm:$0xff] %v2853
        %s2870 = sand.u32 %s161, 1
        %s2871 = scalar_lea.sflag [#allocation4], %s2870
        %s2872 = sand.u32 %s161, 1
        %s2873 = smul.addr %s2872, 128
        %s2874 = scalar_lea.vmem [#allocation3], %s2873
        // Predicated region
        $region37: #{tpu_custom_call.1} parent=35 // pred_check
          %p2875 = pneg %p171
        $region38: #{tpu_custom_call.1} parent=35 // pred_check_branch
          %2877 = sbr.rel (%p2875) target = $region40
        $region39: #{tpu_custom_call.1} parent=35 // pred_region
          %s2878 = smul.u32 8, %s24
          %s2880 = ssub.s32 2048, 2048
          %2881 = vsyncadd %s2871, %s2880
          %s2882 = smul.addr %s2878, 2
          %s2883 = sadd.s32 %s25, %s2882
          %s2884 = smul.addr %s23, 32
          %s2885 = sadd.s32 %s2883, %s2884
          %s2886 = smul.addr %s2885, 128
          %s2887 = scalar_lea.hbm %s4, %s2886
          %s2888 = sshll.u32 %s2874, 4
          %s2889 = int_to_ptr.vmem [resolvable:$true] %s2888
          %2894 = dma.vmem_to_hbm [thread:$0]  %s2889, 2048, %s2887, %s2871, 128, 128, 8
        $region40: #{tpu_custom_call.1} parent=35 // pred_fallthru
          _
      $region36: #{tpu_custom_call.1} parent=5 // pred_fallthru
        _
      %p2895 = scmp.le.s32.totalorder 2, %s13
      // Predicated region
      $region41: #{tpu_custom_call.1} parent=5 // pred_check
        %p2896 = pneg %p2895
      $region42: #{tpu_custom_call.1} parent=5 // pred_check_branch
        %2898 = sbr.rel (%p2896) target = $region44
      $region43: #{tpu_custom_call.1} parent=5 // pred_region
        %s2899 = ssub.s32 %s13, 2
        // Predicated region
        $region45: #{tpu_custom_call.1} parent=43 // pred_check
          %p2900 = pneg %p177
        $region46: #{tpu_custom_call.1} parent=43 // pred_check_branch
          %2902 = sbr.rel (%p2900) target = $region48
        $region47: #{tpu_custom_call.1} parent=43 // pred_region
          %s2903 = sand.u32 %s162, 1
          %s2904 = scalar_lea.sflag [#allocation4], %s2903
          %s2905 = sand.u32 %s162, 1
          %s2906 = smul.addr %s2905, 128
          %s2907 = scalar_lea.vmem [#allocation3], %s2906
          %2908 = dma.done %s2904, 2048
        $region48: #{tpu_custom_call.1} parent=43 // pred_fallthru
          _
      $region44: #{tpu_custom_call.1} parent=5 // pred_fallthru
        _
    $region6: #{tpu_custom_call.1} parent=1 // loop_footer
      %s17 = sadd.s32 1, %s13
    $region7: #{tpu_custom_call.1} parent=1 // loop_footer_branch
      %12 = sbr.rel target = $region3
    $region8: #{tpu_custom_call.1} parent=1 // loop_exit
      _
    %2909 = vsyncpa [#allocation4], 1
    %s2910 = scalar_lea.sflag [#allocation4], 1
    %2911 = vsyncpa %s2910, 1

</llo_original>
